<compile_context>
chip_gen: v6e
topology: v6e:2x2x1
jax: 0.10.0
libtpu: 0.0.40
codegen_flags: <defaults>
</compile_context>

<pallas_src>
import jax
import jax.numpy as jnp
from jax.experimental import pallas as pl
from jax.experimental.pallas import tpu as pltpu

HIDDEN = 1000
HIDDEN_PAD = 1024     # 1000 padded to a multiple of 128 lanes
N_CLASSES = 5
OUT_PAD = 128         # 5 padded to one full vreg lane width
BN_EPS = 1e-5


def _round_up(x, m):
    return ((x + m - 1) // m) * m


def _mlp_kernel(x_ref, w1_ref, b1_ref, w2_ref, b2_ref, w3_ref, b3_ref, o_ref):
    # Layer 1: Linear with BN scale/shift + bias folded into (w1, b1) -> ReLU.
    # (Dropout is identity in eval mode.)  ReLU is fused with the bf16 pack so
    # the f32 (tb, 1024) intermediate dies immediately.
    h1 = jnp.dot(x_ref[...], w1_ref[...],
                 preferred_element_type=jnp.float32) + b1_ref[...]
    h1 = jnp.maximum(h1, 0.0).astype(jnp.bfloat16)

    # Layer 2: same structure.
    h2 = jnp.dot(h1, w2_ref[...],
                 preferred_element_type=jnp.float32) + b2_ref[...]
    h2 = jnp.maximum(h2, 0.0).astype(jnp.bfloat16)

    # Output layer: Linear(1024 -> 128 padded); real classes are lanes [:5].
    o_ref[...] = jnp.dot(h2, w3_ref[...],
                         preferred_element_type=jnp.float32) + b3_ref[...]


def _pick_batch_tile(B, block_b):
    """Batch tile: multiple of 8 for tiny batches, multiple of 128 otherwise,
    and capped so that B > tb always yields >= 2 grid steps (v7x megacore)."""
    if B <= 128:
        return _round_up(max(B, 1), 8)
    tb = min(block_b, _round_up(B, 128))
    half = _round_up(-(-B // 2), 128)     # ceil(B/2) rounded to 128
    tb = max(128, min(tb, half))
    return tb


def _vmem_budget_bytes(tb, in_pad):
    """Rough upper bound on VMEM needed by this kernel at tile size tb."""
    x_tile = tb * in_pad * 2 * 2                     # bf16 input, 2 buffers
    out_tile = tb * OUT_PAD * 4 * 2                  # f32 output, 2 buffers
    weights = (in_pad * HIDDEN_PAD * 2               # W1 bf16 (single buffer)
               + HIDDEN_PAD * HIDDEN_PAD * 2         # W2 bf16
               + HIDDEN_PAD * OUT_PAD * 2            # W3 bf16
               + 3 * HIDDEN_PAD * 4)                 # biases f32
    interm = 2 * tb * HIDDEN_PAD * 4 + 2 * tb * HIDDEN_PAD * 2  # h1/h2 f32+bf16
    need = x_tile + out_tile + weights + interm
    padded = need * 5 // 4 + (1 << 20)               # 25% + 1 MiB headroom
    # Clamp to <= 48 MiB (safe on v7x's 64 MiB physical VMEM), but never below
    # the actual requirement, and give at least 24 MiB.
    return max(min(48 << 20, max(padded, 24 << 20)), padded)


def age_classify_forward(x, packed_params, *, block_b=512):
    """x: (B, input_size) float32 -> (B, 5) float32 (eval-mode forward)."""
    w1, b1, w2, b2, w3, b3 = packed_params
    B, in_size = x.shape
    in_pad = w1.shape[0]

    tb = _pick_batch_tile(B, block_b)
    b_pad = _round_up(B, tb)

    # Pad + cast activations once in the wrapper (zero rows/cols are inert);
    # jnp.pad on the bf16 array avoids an extra full-size HBM copy.
    xp = jnp.pad(x.astype(jnp.bfloat16),
                 ((0, b_pad - B), (0, in_pad - in_size)))

    def const_spec(arr):
        # Weight/bias blocks: constant block index -> fetched once, stay
        # VMEM-resident across the batch grid.  Single-buffered: they never
        # change, so double-buffering would only waste VMEM.
        return pl.BlockSpec(arr.shape, lambda i: (0, 0),
                            pipeline_mode=pl.Buffered(1))

    out = pl.pallas_call(
        _mlp_kernel,
        out_shape=jax.ShapeDtypeStruct((b_pad, OUT_PAD), jnp.float32),
        grid=(b_pad // tb,),
        in_specs=[
            pl.BlockSpec((tb, in_pad), lambda i: (i, 0)),
            const_spec(w1), const_spec(b1),
            const_spec(w2), const_spec(b2),
            const_spec(w3), const_spec(b3),
        ],
        out_specs=pl.BlockSpec((tb, OUT_PAD), lambda i: (i, 0)),
        compiler_params=pltpu.CompilerParams(
            dimension_semantics=("parallel",),
            vmem_limit_bytes=int(_vmem_budget_bytes(tb, in_pad)),
        ),
    )(xp, w1, b1, w2, b2, w3, b3)

    return out[:B, :N_CLASSES]


# ----------------------------------------------------------------------------
# Parameter construction (PyTorch layouts) + one-time fold/pack (done at init,
# not per call, so per-call cost is only the weight DMA).
# ----------------------------------------------------------------------------

def init_raw_params(key, input_size):
    """Synthetic parameters in PyTorch layout: W (out, in), b (out,), BN stats."""
    ks = jax.random.split(key, 6)

    def linear_init(kw, fan_in, fan_out):
        bound = 1.0 / jnp.sqrt(jnp.float32(fan_in))
        w = jax.random.uniform(kw, (fan_out, fan_in), jnp.float32, -bound, bound)
        b = jax.random.uniform(jax.random.fold_in(kw, 1), (fan_out,),
                               jnp.float32, -bound, bound)
        return w, b

    def bn_init(kb, n):
        gamma = 1.0 + 0.1 * jax.random.normal(kb, (n,), jnp.float32)
        beta = 0.1 * jax.random.normal(jax.random.fold_in(kb, 1), (n,), jnp.float32)
        mean = 0.05 * jax.random.normal(jax.random.fold_in(kb, 2), (n,), jnp.float32)
        var = 1.0 + 0.1 * jax.random.uniform(jax.random.fold_in(kb, 3), (n,), jnp.float32)
        return gamma, beta, mean, var

    w1, b1 = linear_init(ks[0], input_size, HIDDEN)
    w2, b2 = linear_init(ks[1], HIDDEN, HIDDEN)
    w3, b3 = linear_init(ks[2], HIDDEN, N_CLASSES)
    g1, be1, m1, v1 = bn_init(ks[3], HIDDEN)
    g2, be2, m2, v2 = bn_init(ks[4], HIDDEN)

    return (w1, b1, g1, be1, m1, v1,
            w2, b2, g2, be2, m2, v2,
            w3, b3)


def fold_and_pack(raw, input_size):
    """Fold BN into the linears, transpose to (in, out), pad, cast to bf16."""
    (w1, b1, g1, be1, m1, v1,
     w2, b2, g2, be2, m2, v2,
     w3, b3) = raw

    def fold(w, b, gamma, beta, mean, var):
        s = gamma * jax.lax.rsqrt(var + BN_EPS)
        t = beta - mean * s
        wf = w.T * s[None, :]          # (in, out), BN scale folded column-wise
        bf = b * s + t                 # (out,) kept in f32 on the bias path
        return wf, bf

    w1f, b1f = fold(w1, b1, g1, be1, m1, v1)
    w2f, b2f = fold(w2, b2, g2, be2, m2, v2)
    w3f, b3f = w3.T, b3

    in_pad = _round_up(input_size, 128)

    W1 = jnp.zeros((in_pad, HIDDEN_PAD), jnp.bfloat16)
    W1 = W1.at[:input_size, :HIDDEN].set(w1f.astype(jnp.bfloat16))
    B1 = jnp.zeros((1, HIDDEN_PAD), jnp.float32).at[0, :HIDDEN].set(b1f)

    W2 = jnp.zeros((HIDDEN_PAD, HIDDEN_PAD), jnp.bfloat16)
    W2 = W2.at[:HIDDEN, :HIDDEN].set(w2f.astype(jnp.bfloat16))
    B2 = jnp.zeros((1, HIDDEN_PAD), jnp.float32).at[0, :HIDDEN].set(b2f)

    W3 = jnp.zeros((HIDDEN_PAD, OUT_PAD), jnp.bfloat16)
    W3 = W3.at[:HIDDEN, :N_CLASSES].set(w3f.astype(jnp.bfloat16))
    B3 = jnp.zeros((1, OUT_PAD), jnp.float32).at[0, :N_CLASSES].set(b3f)

    return (W1, B1, W2, B2, W3, B3)


def reference_forward(x, raw):
    """Pure-JAX f32 reference of the eval-mode PyTorch forward."""
    (w1, b1, g1, be1, m1, v1,
     w2, b2, g2, be2, m2, v2,
     w3, b3) = raw

    def bn(z, gamma, beta, mean, var):
        return (z - mean) * gamma * jax.lax.rsqrt(var + BN_EPS) + beta

    h1 = jnp.maximum(bn(x @ w1.T + b1, g1, be1, m1, v1), 0.0)
    h2 = jnp.maximum(bn(h1 @ w2.T + b2, g2, be2, m2, v2), 0.0)
    return h2 @ w3.T + b3


if __name__ == "__main__":
    key = jax.random.PRNGKey(0)
    k_x, k_x2, k_p = jax.random.split(key, 3)

    input_size = 32
    raw = init_raw_params(k_p, input_size)
    packed = fold_and_pack(raw, input_size)

    # Small-batch case (grid of 1 tile).
    batch = 8
    x = jax.random.normal(k_x, (batch, input_size), jnp.float32)
    out = jax.block_until_ready(age_classify_forward(x, packed))
    ref = reference_forward(x, raw)
    assert out.shape == (batch, N_CLASSES)
    # bf16 weights/activations vs f32 reference -> loosened tolerance.
    assert jnp.allclose(out, ref, atol=3e-2, rtol=3e-2), "mismatch vs reference (B=8)"

    # Multi-tile case: exercises the 128-multiple tiling + >=2 grid steps path.
    batch2 = 200
    x2 = jax.random.normal(k_x2, (batch2, input_size), jnp.float32)
    out2 = jax.block_until_ready(age_classify_forward(x2, packed))
    ref2 = reference_forward(x2, raw)
    assert out2.shape == (batch2, N_CLASSES)
    assert jnp.allclose(out2, ref2, atol=3e-2, rtol=3e-2), "mismatch vs reference (B=200)"

    print("KERNEL_OK")
</pallas_src>

<mosaic_0001>
module attributes {stable_mosaic.version = 11 : i64} {
  func.func @_mlp_kernel(%arg0: i32, %arg1: memref<8x128xbf16, #tpu.memory_space<vmem>>, %arg2: memref<128x1024xbf16, #tpu.memory_space<vmem>>, %arg3: memref<1x1024xf32, #tpu.memory_space<vmem>>, %arg4: memref<1024x1024xbf16, #tpu.memory_space<vmem>>, %arg5: memref<1x1024xf32, #tpu.memory_space<vmem>>, %arg6: memref<1024x128xbf16, #tpu.memory_space<vmem>>, %arg7: memref<1x128xf32, #tpu.memory_space<vmem>>, %arg8: memref<8x128xf32, #tpu.memory_space<vmem>>) attributes {dimension_semantics = [#tpu.dimension_semantics<parallel>], iteration_bounds = array<i64: 1>, scalar_prefetch = 0 : i64, scratch_operands = 0 : i64, tpu.core_type = #tpu.core_type<tc>, window_params = [{transform_indices = @transform_0, window_bounds = array<i64: 8, 128>}, {pipeline_mode = #tpu.pipeline_mode<synchronous>, transform_indices = @transform_1, window_bounds = array<i64: 128, 1024>}, {pipeline_mode = #tpu.pipeline_mode<synchronous>, transform_indices = @transform_2, window_bounds = array<i64: 1, 1024>}, {pipeline_mode = #tpu.pipeline_mode<synchronous>, transform_indices = @transform_3, window_bounds = array<i64: 1024, 1024>}, {pipeline_mode = #tpu.pipeline_mode<synchronous>, transform_indices = @transform_4, window_bounds = array<i64: 1, 1024>}, {pipeline_mode = #tpu.pipeline_mode<synchronous>, transform_indices = @transform_5, window_bounds = array<i64: 1024, 128>}, {pipeline_mode = #tpu.pipeline_mode<synchronous>, transform_indices = @transform_6, window_bounds = array<i64: 1, 128>}, {transform_indices = @transform_7, window_bounds = array<i64: 8, 128>}]} {
    %c0 = arith.constant 0 : index
    %c0_0 = arith.constant 0 : index
    %0 = vector.load %arg1[%c0, %c0_0] : memref<8x128xbf16, #tpu.memory_space<vmem>>, vector<8x128xbf16>
    %c0_1 = arith.constant 0 : index
    %c0_2 = arith.constant 0 : index
    %1 = vector.load %arg2[%c0_1, %c0_2] : memref<128x1024xbf16, #tpu.memory_space<vmem>>, vector<128x1024xbf16>
    %cst = arith.constant dense<0.000000e+00> : vector<8x1024xf32>
    %2 = tpu.matmul %0, %1, %cst {dimension_numbers = #tpu.dot_dimension_numbers<[1], [0], [0], [1], [0, 0, 1, 1], [], []>} : vector<8x128xbf16>, vector<128x1024xbf16>, vector<8x1024xf32> -> vector<8x1024xf32>
    %c0_3 = arith.constant 0 : index
    %c0_4 = arith.constant 0 : index
    %3 = vector.load %arg3[%c0_3, %c0_4] : memref<1x1024xf32, #tpu.memory_space<vmem>>, vector<1x1024xf32>
    %4 = vector.broadcast %3 : vector<1x1024xf32> to vector<8x1024xf32>
    %5 = arith.addf %2, %4 : vector<8x1024xf32>
    %cst_5 = arith.constant 0.000000e+00 : f32
    %6 = vector.broadcast %cst_5 : f32 to vector<8x1024xf32>
    %7 = arith.maximumf %5, %6 : vector<8x1024xf32>
    %8 = arith.truncf %7 : vector<8x1024xf32> to vector<8x1024xbf16>
    %c0_6 = arith.constant 0 : index
    %c0_7 = arith.constant 0 : index
    %9 = vector.load %arg4[%c0_6, %c0_7] : memref<1024x1024xbf16, #tpu.memory_space<vmem>>, vector<1024x1024xbf16>
    %cst_8 = arith.constant dense<0.000000e+00> : vector<8x1024xf32>
    %10 = tpu.matmul %8, %9, %cst_8 {dimension_numbers = #tpu.dot_dimension_numbers<[1], [0], [0], [1], [0, 0, 1, 1], [], []>} : vector<8x1024xbf16>, vector<1024x1024xbf16>, vector<8x1024xf32> -> vector<8x1024xf32>
    %c0_9 = arith.constant 0 : index
    %c0_10 = arith.constant 0 : index
    %11 = vector.load %arg5[%c0_9, %c0_10] : memref<1x1024xf32, #tpu.memory_space<vmem>>, vector<1x1024xf32>
    %12 = vector.broadcast %11 : vector<1x1024xf32> to vector<8x1024xf32>
    %13 = arith.addf %10, %12 : vector<8x1024xf32>
    %cst_11 = arith.constant 0.000000e+00 : f32
    %14 = vector.broadcast %cst_11 : f32 to vector<8x1024xf32>
    %15 = arith.maximumf %13, %14 : vector<8x1024xf32>
    %16 = arith.truncf %15 : vector<8x1024xf32> to vector<8x1024xbf16>
    %c0_12 = arith.constant 0 : index
    %c0_13 = arith.constant 0 : index
    %17 = vector.load %arg6[%c0_12, %c0_13] : memref<1024x128xbf16, #tpu.memory_space<vmem>>, vector<1024x128xbf16>
    %cst_14 = arith.constant dense<0.000000e+00> : vector<8x128xf32>
    %18 = tpu.matmul %16, %17, %cst_14 {dimension_numbers = #tpu.dot_dimension_numbers<[1], [0], [0], [1], [0, 0, 1, 1], [], []>} : vector<8x1024xbf16>, vector<1024x128xbf16>, vector<8x128xf32> -> vector<8x128xf32>
    %c0_15 = arith.constant 0 : index
    %c0_16 = arith.constant 0 : index
    %19 = vector.load %arg7[%c0_15, %c0_16] : memref<1x128xf32, #tpu.memory_space<vmem>>, vector<1x128xf32>
    %20 = vector.broadcast %19 : vector<1x128xf32> to vector<8x128xf32>
    %21 = arith.addf %18, %20 : vector<8x128xf32>
    %c0_17 = arith.constant 0 : index
    %c0_18 = arith.constant 0 : index
    %22 = vector.load %arg8[%c0_17, %c0_18] : memref<8x128xf32, #tpu.memory_space<vmem>>, vector<8x128xf32>
    tpu.vector_store %arg8[%c0_17, %c0_18], %21 {strides = array<i32>} : memref<8x128xf32, #tpu.memory_space<vmem>>, vector<8x128xf32>,
    return
  }
  func.func @transform_0(%arg0: i32) -> (i32, i32) {
    %c0_i32 = arith.constant 0 : i32
    %c0_i32_0 = arith.constant 0 : i32
    return %arg0, %c0_i32 : i32, i32
  }
  func.func @transform_1(%arg0: i32) -> (i32, i32) {
    %c0_i32 = arith.constant 0 : i32
    %c0_i32_0 = arith.constant 0 : i32
    %c0_i32_1 = arith.constant 0 : i32
    return %c0_i32, %c0_i32_0 : i32, i32
  }
  func.func @transform_2(%arg0: i32) -> (i32, i32) {
    %c0_i32 = arith.constant 0 : i32
    %c0_i32_0 = arith.constant 0 : i32
    %c0_i32_1 = arith.constant 0 : i32
    return %c0_i32, %c0_i32_0 : i32, i32
  }
  func.func @transform_3(%arg0: i32) -> (i32, i32) {
    %c0_i32 = arith.constant 0 : i32
    %c0_i32_0 = arith.constant 0 : i32
    %c0_i32_1 = arith.constant 0 : i32
    return %c0_i32, %c0_i32_0 : i32, i32
  }
  func.func @transform_4(%arg0: i32) -> (i32, i32) {
    %c0_i32 = arith.constant 0 : i32
    %c0_i32_0 = arith.constant 0 : i32
    %c0_i32_1 = arith.constant 0 : i32
    return %c0_i32, %c0_i32_0 : i32, i32
  }
  func.func @transform_5(%arg0: i32) -> (i32, i32) {
    %c0_i32 = arith.constant 0 : i32
    %c0_i32_0 = arith.constant 0 : i32
    %c0_i32_1 = arith.constant 0 : i32
    return %c0_i32, %c0_i32_0 : i32, i32
  }
  func.func @transform_6(%arg0: i32) -> (i32, i32) {
    %c0_i32 = arith.constant 0 : i32
    %c0_i32_0 = arith.constant 0 : i32
    %c0_i32_1 = arith.constant 0 : i32
    return %c0_i32, %c0_i32_0 : i32, i32
  }
  func.func @transform_7(%arg0: i32) -> (i32, i32) {
    %c0_i32 = arith.constant 0 : i32
    %c0_i32_0 = arith.constant 0 : i32
    return %arg0, %c0_i32 : i32, i32
  }
}

</mosaic_0001>

<llo_original>
// kernel: tpu_custom_call.1
$region0: #{tpu_custom_call.1}
  #allocation0 [shape = 'u32[]', space=smem, size = 0x4, offset = 0x4, fixed_abs, tag = 'smem constant byte address 0x4 - core index']
  #allocation1 [shape = 'u32[144,128]{1,0:T(1,128)}', space=vmem, size = 0x12000, scoped, tag = 'internal scratch']
  %s0 = inlined_call_operand.hbm [shape: bf16[8,128], index: 0, kind: input, shape index: {}]
  %s1 = inlined_call_operand.hbm [shape: bf16[128,1024], index: 1, kind: input, shape index: {}]
  %s2 = inlined_call_operand.hbm [shape: f32[1,1024], index: 2, kind: input, shape index: {}]
  %s3 = inlined_call_operand.hbm [shape: bf16[1024,1024], index: 3, kind: input, shape index: {}]
  %s4 = inlined_call_operand.hbm [shape: f32[1,1024], index: 4, kind: input, shape index: {}]
  %s5 = inlined_call_operand.hbm [shape: bf16[1024,128], index: 5, kind: input, shape index: {}]
  %s6 = inlined_call_operand.hbm [shape: f32[1,128], index: 6, kind: input, shape index: {}]
  %s7 = inlined_call_operand.hbm [shape: f32[8,128], index: 7, kind: output, shape index: {}]
  %s8 = sld [smem:[#allocation0]]
  $region66: #{tpu_custom_call.1} parent=0
    _
  %s10 = ssub.s32 1, %s8
  %s11 = scalar_select 0, %s10, %s8
  $region1: #{tpu_custom_call.1} parent=0
    #allocation2 [shape = 'u8[2048]{0}', space=vmem, size = 0x800, scoped, tag = 'input window, operand 0, single buffered']
    #allocation3 [shape = 's32[1]{0}', space=sflag, size = 0x4, scoped, tag = 'scoped memory for tpu_custom_call.1']
    #allocation4 [shape = 's32[1]{0}', space=sflag, size = 0x4, scoped, tag = 'scoped memory for tpu_custom_call.1']
    #allocation5 [shape = 'u8[262144]{0}', space=vmem, size = 0x40000, scoped, tag = 'input window, operand 1, single buffered']
    #allocation6 [shape = 's32[1]{0}', space=sflag, size = 0x4, scoped, tag = 'scoped memory for tpu_custom_call.1']
    #allocation7 [shape = 'u8[4096]{0}', space=vmem, size = 0x1000, scoped, tag = 'input window, operand 2, single buffered']
    #allocation8 [shape = 'u8[2097152]{0}', space=vmem, size = 0x200000, scoped, tag = 'input window, operand 3, single buffered']
    #allocation9 [shape = 's32[1]{0}', space=sflag, size = 0x4, scoped, tag = 'scoped memory for tpu_custom_call.1']
    #allocation10 [shape = 'u8[4096]{0}', space=vmem, size = 0x1000, scoped, tag = 'input window, operand 4, single buffered']
    #allocation11 [shape = 'u8[262144]{0}', space=vmem, size = 0x40000, scoped, tag = 'input window, operand 5, single buffered']
    #allocation12 [shape = 's32[1]{0}', space=sflag, size = 0x4, scoped, tag = 'scoped memory for tpu_custom_call.1']
    #allocation13 [shape = 'u8[512]{0}', space=vmem, size = 0x400, scoped, tag = 'input window, operand 6, single buffered']
    #allocation14 [shape = 'u8[4096]{0}', space=vmem, size = 0x1000, scoped, tag = 'output window, operand 0, single buffered']
    %12 = vsyncpa [#allocation3], 0
    %13 = vsyncpa [#allocation6], 0
    %14 = vsyncpa [#allocation9], 0
    %15 = vsyncpa [#allocation12], 0
    %16 = vsyncpa [#allocation4], 0
    // Predicated region
    $region2: #{tpu_custom_call.1} parent=1 // pred_check
      _
    $region3: #{tpu_custom_call.1} parent=1 // pred_check_branch
      %18 = sbr.rel (0) target = $region5
    $region4: #{tpu_custom_call.1} parent=1 // pred_region
      %s20 = ssub.s32 64, 64
      %21 = vsyncadd [#allocation3], %s20
      %s23 = sshll.u32 [#allocation2], 4
      %s24 = int_to_ptr.vmem [resolvable:$true] %s23
      %26 = dma.hbm_to_vmem [thread:$0]  %s0, 64, %s24, [#allocation3]
    $region5: #{tpu_custom_call.1} parent=1 // pred_fallthru
      _
    // Predicated region
    $region6: #{tpu_custom_call.1} parent=1 // pred_check
      _
    $region7: #{tpu_custom_call.1} parent=1 // pred_check_branch
      %28 = sbr.rel (0) target = $region9
    $region8: #{tpu_custom_call.1} parent=1 // pred_region
      %s30 = ssub.s32 8192, 8192
      %31 = vsyncadd [#allocation6], %s30
      %s32 = sshll.u32 [#allocation5], 4
      %s33 = int_to_ptr.vmem [resolvable:$true] %s32
      %38 = dma.hbm_to_vmem [thread:$0]  %s1, 8192, %s33, [#allocation6], 512, 512, 32
    $region9: #{tpu_custom_call.1} parent=1 // pred_fallthru
      _
    // Predicated region
    $region10: #{tpu_custom_call.1} parent=1 // pred_check
      _
    $region11: #{tpu_custom_call.1} parent=1 // pred_check_branch
      %40 = sbr.rel (0) target = $region13
    $region12: #{tpu_custom_call.1} parent=1 // pred_region
      %s42 = ssub.s32 128, 128
      %43 = vsyncadd [#allocation6], %s42
      %s45 = sshll.u32 [#allocation7], 4
      %s46 = int_to_ptr.vmem [resolvable:$true] %s45
      %48 = dma.hbm_to_vmem [thread:$0]  %s2, 128, %s46, [#allocation6]
    $region13: #{tpu_custom_call.1} parent=1 // pred_fallthru
      _
    // Predicated region
    $region14: #{tpu_custom_call.1} parent=1 // pred_check
      _
    $region15: #{tpu_custom_call.1} parent=1 // pred_check_branch
      %50 = sbr.rel (0) target = $region17
    $region16: #{tpu_custom_call.1} parent=1 // pred_region
      %s52 = ssub.s32 65536, 65536
      %53 = vsyncadd [#allocation9], %s52
      %s54 = sshll.u32 [#allocation8], 4
      %s55 = int_to_ptr.vmem [resolvable:$true] %s54
      %60 = dma.hbm_to_vmem [thread:$0]  %s3, 65536, %s55, [#allocation9], 512, 512, 32
    $region17: #{tpu_custom_call.1} parent=1 // pred_fallthru
      _
    // Predicated region
    $region18: #{tpu_custom_call.1} parent=1 // pred_check
      _
    $region19: #{tpu_custom_call.1} parent=1 // pred_check_branch
      %62 = sbr.rel (0) target = $region21
    $region20: #{tpu_custom_call.1} parent=1 // pred_region
      %s64 = ssub.s32 128, 128
      %65 = vsyncadd [#allocation9], %s64
      %s67 = sshll.u32 [#allocation10], 4
      %s68 = int_to_ptr.vmem [resolvable:$true] %s67
      %70 = dma.hbm_to_vmem [thread:$0]  %s4, 128, %s68, [#allocation9]
    $region21: #{tpu_custom_call.1} parent=1 // pred_fallthru
      _
    // Predicated region
    $region22: #{tpu_custom_call.1} parent=1 // pred_check
      _
    $region23: #{tpu_custom_call.1} parent=1 // pred_check_branch
      %72 = sbr.rel (0) target = $region25
    $region24: #{tpu_custom_call.1} parent=1 // pred_region
      %s74 = ssub.s32 8192, 8192
      %75 = vsyncadd [#allocation12], %s74
      %s76 = sshll.u32 [#allocation11], 4
      %s77 = int_to_ptr.vmem [resolvable:$true] %s76
      %82 = dma.hbm_to_vmem [thread:$0]  %s5, 8192, %s77, [#allocation12], 64, 64, 4
    $region25: #{tpu_custom_call.1} parent=1 // pred_fallthru
      _
    // Predicated region
    $region26: #{tpu_custom_call.1} parent=1 // pred_check
      _
    $region27: #{tpu_custom_call.1} parent=1 // pred_check_branch
      %84 = sbr.rel (0) target = $region29
    $region28: #{tpu_custom_call.1} parent=1 // pred_region
      %s86 = ssub.s32 16, 16
      %87 = vsyncadd [#allocation12], %s86
      %s89 = sshll.u32 [#allocation13], 4
      %s90 = int_to_ptr.vmem [resolvable:$true] %s89
      %92 = dma.hbm_to_vmem [thread:$0]  %s6, 16, %s90, [#allocation12]
    $region29: #{tpu_custom_call.1} parent=1 // pred_fallthru
      _
    // Predicated region
    $region30: #{tpu_custom_call.1} parent=1 // pred_check
      _
    $region31: #{tpu_custom_call.1} parent=1 // pred_check_branch
      %94 = sbr.rel (0) target = $region33
    $region32: #{tpu_custom_call.1} parent=1 // pred_region
      %95 = dma.done [#allocation3], 64
    $region33: #{tpu_custom_call.1} parent=1 // pred_fallthru
      _
    // Predicated region
    $region34: #{tpu_custom_call.1} parent=1 // pred_check
      _
    $region35: #{tpu_custom_call.1} parent=1 // pred_check_branch
      %97 = sbr.rel (0) target = $region37
    $region36: #{tpu_custom_call.1} parent=1 // pred_region
      %98 = dma.done [#allocation6], 8192
    $region37: #{tpu_custom_call.1} parent=1 // pred_fallthru
      _
    // Predicated region
    $region38: #{tpu_custom_call.1} parent=1 // pred_check
      _
    $region39: #{tpu_custom_call.1} parent=1 // pred_check_branch
      %100 = sbr.rel (0) target = $region41
    $region40: #{tpu_custom_call.1} parent=1 // pred_region
      %101 = dma.done [#allocation6], 128
    $region41: #{tpu_custom_call.1} parent=1 // pred_fallthru
      _
    // Predicated region
    $region42: #{tpu_custom_call.1} parent=1 // pred_check
      _
    $region43: #{tpu_custom_call.1} parent=1 // pred_check_branch
      %103 = sbr.rel (0) target = $region45
    $region44: #{tpu_custom_call.1} parent=1 // pred_region
      %104 = dma.done [#allocation9], 65536
    $region45: #{tpu_custom_call.1} parent=1 // pred_fallthru
      _
    // Predicated region
    $region46: #{tpu_custom_call.1} parent=1 // pred_check
      _
    $region47: #{tpu_custom_call.1} parent=1 // pred_check_branch
      %106 = sbr.rel (0) target = $region49
    $region48: #{tpu_custom_call.1} parent=1 // pred_region
      %107 = dma.done [#allocation9], 128
    $region49: #{tpu_custom_call.1} parent=1 // pred_fallthru
      _
    // Predicated region
    $region50: #{tpu_custom_call.1} parent=1 // pred_check
      _
    $region51: #{tpu_custom_call.1} parent=1 // pred_check_branch
      %109 = sbr.rel (0) target = $region53
    $region52: #{tpu_custom_call.1} parent=1 // pred_region
      %110 = dma.done [#allocation12], 8192
    $region53: #{tpu_custom_call.1} parent=1 // pred_fallthru
      _
    // Predicated region
    $region54: #{tpu_custom_call.1} parent=1 // pred_check
      _
    $region55: #{tpu_custom_call.1} parent=1 // pred_check_branch
      %112 = sbr.rel (0) target = $region57
    $region56: #{tpu_custom_call.1} parent=1 // pred_region
      %113 = dma.done [#allocation12], 16
    $region57: #{tpu_custom_call.1} parent=1 // pred_fallthru
      _
    %v115 = vld [vmem:[#allocation2] sm:$0xf]
    %v116 = vld [vmem:[#allocation5] sm:$0xff]
    %v117 = vld [vmem:[#allocation5 + $0x8] sm:$0xff]
    %v118 = vld [vmem:[#allocation5 + $0x10] sm:$0xff]
    %v119 = vld [vmem:[#allocation5 + $0x18] sm:$0xff]
    %v120 = vld [vmem:[#allocation5 + $0x20] sm:$0xff]
    %v121 = vld [vmem:[#allocation5 + $0x28] sm:$0xff]
    %v122 = vld [vmem:[#allocation5 + $0x30] sm:$0xff]
    %v123 = vld [vmem:[#allocation5 + $0x38] sm:$0xff]
    %v124 = vld [vmem:[#allocation5 + $0x40] sm:$0xff]
    %v125 = vld [vmem:[#allocation5 + $0x48] sm:$0xff]
    %v126 = vld [vmem:[#allocation5 + $0x50] sm:$0xff]
    %v127 = vld [vmem:[#allocation5 + $0x58] sm:$0xff]
    %v128 = vld [vmem:[#allocation5 + $0x60] sm:$0xff]
    %v129 = vld [vmem:[#allocation5 + $0x68] sm:$0xff]
    %v130 = vld [vmem:[#allocation5 + $0x70] sm:$0xff]
    %v131 = vld [vmem:[#allocation5 + $0x78] sm:$0xff]
    %v132 = vld [vmem:[#allocation5 + $0x80] sm:$0xff]
    %v133 = vld [vmem:[#allocation5 + $0x88] sm:$0xff]
    %v134 = vld [vmem:[#allocation5 + $0x90] sm:$0xff]
    %v135 = vld [vmem:[#allocation5 + $0x98] sm:$0xff]
    %v136 = vld [vmem:[#allocation5 + $0xa0] sm:$0xff]
    %v137 = vld [vmem:[#allocation5 + $0xa8] sm:$0xff]
    %v138 = vld [vmem:[#allocation5 + $0xb0] sm:$0xff]
    %v139 = vld [vmem:[#allocation5 + $0xb8] sm:$0xff]
    %v140 = vld [vmem:[#allocation5 + $0xc0] sm:$0xff]
    %v141 = vld [vmem:[#allocation5 + $0xc8] sm:$0xff]
    %v142 = vld [vmem:[#allocation5 + $0xd0] sm:$0xff]
    %v143 = vld [vmem:[#allocation5 + $0xd8] sm:$0xff]
    %v144 = vld [vmem:[#allocation5 + $0xe0] sm:$0xff]
    %v145 = vld [vmem:[#allocation5 + $0xe8] sm:$0xff]
    %v146 = vld [vmem:[#allocation5 + $0xf0] sm:$0xff]
    %v147 = vld [vmem:[#allocation5 + $0xf8] sm:$0xff]
    %v148 = vld [vmem:[#allocation5 + $0x100] sm:$0xff]
    %v149 = vld [vmem:[#allocation5 + $0x108] sm:$0xff]
    %v150 = vld [vmem:[#allocation5 + $0x110] sm:$0xff]
    %v151 = vld [vmem:[#allocation5 + $0x118] sm:$0xff]
    %v152 = vld [vmem:[#allocation5 + $0x120] sm:$0xff]
    %v153 = vld [vmem:[#allocation5 + $0x128] sm:$0xff]
    %v154 = vld [vmem:[#allocation5 + $0x130] sm:$0xff]
    %v155 = vld [vmem:[#allocation5 + $0x138] sm:$0xff]
    %v156 = vld [vmem:[#allocation5 + $0x140] sm:$0xff]
    %v157 = vld [vmem:[#allocation5 + $0x148] sm:$0xff]
    %v158 = vld [vmem:[#allocation5 + $0x150] sm:$0xff]
    %v159 = vld [vmem:[#allocation5 + $0x158] sm:$0xff]
    %v160 = vld [vmem:[#allocation5 + $0x160] sm:$0xff]
    %v161 = vld [vmem:[#allocation5 + $0x168] sm:$0xff]
    %v162 = vld [vmem:[#allocation5 + $0x170] sm:$0xff]
    %v163 = vld [vmem:[#allocation5 + $0x178] sm:$0xff]
    %v164 = vld [vmem:[#allocation5 + $0x180] sm:$0xff]
    %v165 = vld [vmem:[#allocation5 + $0x188] sm:$0xff]
    %v166 = vld [vmem:[#allocation5 + $0x190] sm:$0xff]
    %v167 = vld [vmem:[#allocation5 + $0x198] sm:$0xff]
    %v168 = vld [vmem:[#allocation5 + $0x1a0] sm:$0xff]
    %v169 = vld [vmem:[#allocation5 + $0x1a8] sm:$0xff]
    %v170 = vld [vmem:[#allocation5 + $0x1b0] sm:$0xff]
    %v171 = vld [vmem:[#allocation5 + $0x1b8] sm:$0xff]
    %v172 = vld [vmem:[#allocation5 + $0x1c0] sm:$0xff]
    %v173 = vld [vmem:[#allocation5 + $0x1c8] sm:$0xff]
    %v174 = vld [vmem:[#allocation5 + $0x1d0] sm:$0xff]
    %v175 = vld [vmem:[#allocation5 + $0x1d8] sm:$0xff]
    %v176 = vld [vmem:[#allocation5 + $0x1e0] sm:$0xff]
    %v177 = vld [vmem:[#allocation5 + $0x1e8] sm:$0xff]
    %v178 = vld [vmem:[#allocation5 + $0x1f0] sm:$0xff]
    %v179 = vld [vmem:[#allocation5 + $0x1f8] sm:$0xff]
    %v180 = vld [vmem:[#allocation7] sm:$0xff]
    %v182 = vlaneseq
    %v183 = vshrl.u32 %v182, 7
    %v184 = vsub.s32 0, %v183
    %v185 = vrot.slane %v180, %v184
    %v186 = vlaneseq
    %v187 = vshrl.u32 %v186, 7
    %v188 = vsub.s32 1, %v187
    %v189 = vrot.slane %v180, %v188
    %v190 = vlaneseq
    %v191 = vshrl.u32 %v190, 7
    %v192 = vsub.s32 2, %v191
    %v193 = vrot.slane %v180, %v192
    %v194 = vlaneseq
    %v195 = vshrl.u32 %v194, 7
    %v196 = vsub.s32 3, %v195
    %v197 = vrot.slane %v180, %v196
    %v198 = vlaneseq
    %v199 = vshrl.u32 %v198, 7
    %v200 = vsub.s32 4, %v199
    %v201 = vrot.slane %v180, %v200
    %v202 = vlaneseq
    %v203 = vshrl.u32 %v202, 7
    %v204 = vsub.s32 5, %v203
    %v205 = vrot.slane %v180, %v204
    %v206 = vlaneseq
    %v207 = vshrl.u32 %v206, 7
    %v208 = vsub.s32 6, %v207
    %v209 = vrot.slane %v180, %v208
    %v210 = vlaneseq
    %v211 = vshrl.u32 %v210, 7
    %v212 = vsub.s32 7, %v211
    %v213 = vrot.slane %v180, %v212
    %v286 = vunpack.c.l.b16 %v116
    %v287 = vunpack.c.h.b16 %v116
    %v288 = vunpack.c.l.b16 %v117
    %v289 = vunpack.c.h.b16 %v117
    %v290 = vunpack.c.l.b16 %v118
    %v291 = vunpack.c.h.b16 %v118
    %v292 = vunpack.c.l.b16 %v119
    %v293 = vunpack.c.h.b16 %v119
    %v294 = vunpack.c.l.b16 %v120
    %v295 = vunpack.c.h.b16 %v120
    %v296 = vunpack.c.l.b16 %v121
    %v297 = vunpack.c.h.b16 %v121
    %v298 = vunpack.c.l.b16 %v122
    %v299 = vunpack.c.h.b16 %v122
    %v300 = vunpack.c.l.b16 %v123
    %v301 = vunpack.c.h.b16 %v123
    %v302 = vunpack.c.l.b16 %v124
    %v303 = vunpack.c.h.b16 %v124
    %v304 = vunpack.c.l.b16 %v125
    %v305 = vunpack.c.h.b16 %v125
    %v306 = vunpack.c.l.b16 %v126
    %v307 = vunpack.c.h.b16 %v126
    %v308 = vunpack.c.l.b16 %v127
    %v309 = vunpack.c.h.b16 %v127
    %v310 = vunpack.c.l.b16 %v128
    %v311 = vunpack.c.h.b16 %v128
    %v312 = vunpack.c.l.b16 %v129
    %v313 = vunpack.c.h.b16 %v129
    %v314 = vunpack.c.l.b16 %v130
    %v315 = vunpack.c.h.b16 %v130
    %v316 = vunpack.c.l.b16 %v131
    %v317 = vunpack.c.h.b16 %v131
    %v318 = vunpack.c.l.b16 %v132
    %v319 = vunpack.c.h.b16 %v132
    %v320 = vunpack.c.l.b16 %v133
    %v321 = vunpack.c.h.b16 %v133
    %v322 = vunpack.c.l.b16 %v134
    %v323 = vunpack.c.h.b16 %v134
    %v324 = vunpack.c.l.b16 %v135
    %v325 = vunpack.c.h.b16 %v135
    %v326 = vunpack.c.l.b16 %v136
    %v327 = vunpack.c.h.b16 %v136
    %v328 = vunpack.c.l.b16 %v137
    %v329 = vunpack.c.h.b16 %v137
    %v330 = vunpack.c.l.b16 %v138
    %v331 = vunpack.c.h.b16 %v138
    %v332 = vunpack.c.l.b16 %v139
    %v333 = vunpack.c.h.b16 %v139
    %v334 = vunpack.c.l.b16 %v140
    %v335 = vunpack.c.h.b16 %v140
    %v336 = vunpack.c.l.b16 %v141
    %v337 = vunpack.c.h.b16 %v141
    %v338 = vunpack.c.l.b16 %v142
    %v339 = vunpack.c.h.b16 %v142
    %v340 = vunpack.c.l.b16 %v143
    %v341 = vunpack.c.h.b16 %v143
    %v342 = vunpack.c.l.b16 %v144
    %v343 = vunpack.c.h.b16 %v144
    %v344 = vunpack.c.l.b16 %v145
    %v345 = vunpack.c.h.b16 %v145
    %v346 = vunpack.c.l.b16 %v146
    %v347 = vunpack.c.h.b16 %v146
    %v348 = vunpack.c.l.b16 %v147
    %v349 = vunpack.c.h.b16 %v147
    %v350 = vunpack.c.l.b16 %v148
    %v351 = vunpack.c.h.b16 %v148
    %v352 = vunpack.c.l.b16 %v149
    %v353 = vunpack.c.h.b16 %v149
    %v354 = vunpack.c.l.b16 %v150
    %v355 = vunpack.c.h.b16 %v150
    %v356 = vunpack.c.l.b16 %v151
    %v357 = vunpack.c.h.b16 %v151
    %v358 = vunpack.c.l.b16 %v152
    %v359 = vunpack.c.h.b16 %v152
    %v360 = vunpack.c.l.b16 %v153
    %v361 = vunpack.c.h.b16 %v153
    %v362 = vunpack.c.l.b16 %v154
    %v363 = vunpack.c.h.b16 %v154
    %v364 = vunpack.c.l.b16 %v155
    %v365 = vunpack.c.h.b16 %v155
    %v366 = vunpack.c.l.b16 %v156
    %v367 = vunpack.c.h.b16 %v156
    %v368 = vunpack.c.l.b16 %v157
    %v369 = vunpack.c.h.b16 %v157
    %v370 = vunpack.c.l.b16 %v158
    %v371 = vunpack.c.h.b16 %v158
    %v372 = vunpack.c.l.b16 %v159
    %v373 = vunpack.c.h.b16 %v159
    %v374 = vunpack.c.l.b16 %v160
    %v375 = vunpack.c.h.b16 %v160
    %v376 = vunpack.c.l.b16 %v161
    %v377 = vunpack.c.h.b16 %v161
    %v378 = vunpack.c.l.b16 %v162
    %v379 = vunpack.c.h.b16 %v162
    %v380 = vunpack.c.l.b16 %v163
    %v381 = vunpack.c.h.b16 %v163
    %v382 = vunpack.c.l.b16 %v164
    %v383 = vunpack.c.h.b16 %v164
    %v384 = vunpack.c.l.b16 %v165
    %v385 = vunpack.c.h.b16 %v165
    %v386 = vunpack.c.l.b16 %v166
    %v387 = vunpack.c.h.b16 %v166
    %v388 = vunpack.c.l.b16 %v167
    %v389 = vunpack.c.h.b16 %v167
    %v390 = vunpack.c.l.b16 %v168
    %v391 = vunpack.c.h.b16 %v168
    %v392 = vunpack.c.l.b16 %v169
    %v393 = vunpack.c.h.b16 %v169
    %v394 = vunpack.c.l.b16 %v170
    %v395 = vunpack.c.h.b16 %v170
    %v396 = vunpack.c.l.b16 %v171
    %v397 = vunpack.c.h.b16 %v171
    %v398 = vunpack.c.l.b16 %v172
    %v399 = vunpack.c.h.b16 %v172
    %v400 = vunpack.c.l.b16 %v173
    %v401 = vunpack.c.h.b16 %v173
    %v402 = vunpack.c.l.b16 %v174
    %v403 = vunpack.c.h.b16 %v174
    %v404 = vunpack.c.l.b16 %v175
    %v405 = vunpack.c.h.b16 %v175
    %v406 = vunpack.c.l.b16 %v176
    %v407 = vunpack.c.h.b16 %v176
    %v408 = vunpack.c.l.b16 %v177
    %v409 = vunpack.c.h.b16 %v177
    %v410 = vunpack.c.l.b16 %v178
    %v411 = vunpack.c.h.b16 %v178
    %v412 = vunpack.c.l.b16 %v179
    %v413 = vunpack.c.h.b16 %v179
    %v414 = vpack.c.b16 %v294, %v286
    %v415 = vpack.c.b16 %v295, %v287
    %v416 = vpack.c.b16 %v296, %v288
    %v417 = vpack.c.b16 %v297, %v289
    %v418 = vpack.c.b16 %v298, %v290
    %v419 = vpack.c.b16 %v299, %v291
    %v420 = vpack.c.b16 %v300, %v292
    %v421 = vpack.c.b16 %v301, %v293
    %v422 = vpack.c.b16 %v310, %v302
    %v423 = vpack.c.b16 %v311, %v303
    %v424 = vpack.c.b16 %v312, %v304
    %v425 = vpack.c.b16 %v313, %v305
    %v426 = vpack.c.b16 %v314, %v306
    %v427 = vpack.c.b16 %v315, %v307
    %v428 = vpack.c.b16 %v316, %v308
    %v429 = vpack.c.b16 %v317, %v309
    %v430 = vpack.c.b16 %v326, %v318
    %v431 = vpack.c.b16 %v327, %v319
    %v432 = vpack.c.b16 %v328, %v320
    %v433 = vpack.c.b16 %v329, %v321
    %v434 = vpack.c.b16 %v330, %v322
    %v435 = vpack.c.b16 %v331, %v323
    %v436 = vpack.c.b16 %v332, %v324
    %v437 = vpack.c.b16 %v333, %v325
    %v438 = vpack.c.b16 %v342, %v334
    %v439 = vpack.c.b16 %v343, %v335
    %v440 = vpack.c.b16 %v344, %v336
    %v441 = vpack.c.b16 %v345, %v337
    %v442 = vpack.c.b16 %v346, %v338
    %v443 = vpack.c.b16 %v347, %v339
    %v444 = vpack.c.b16 %v348, %v340
    %v445 = vpack.c.b16 %v349, %v341
    %v446 = vpack.c.b16 %v358, %v350
    %v447 = vpack.c.b16 %v359, %v351
    %v448 = vpack.c.b16 %v360, %v352
    %v449 = vpack.c.b16 %v361, %v353
    %v450 = vpack.c.b16 %v362, %v354
    %v451 = vpack.c.b16 %v363, %v355
    %v452 = vpack.c.b16 %v364, %v356
    %v453 = vpack.c.b16 %v365, %v357
    %v454 = vpack.c.b16 %v374, %v366
    %v455 = vpack.c.b16 %v375, %v367
    %v456 = vpack.c.b16 %v376, %v368
    %v457 = vpack.c.b16 %v377, %v369
    %v458 = vpack.c.b16 %v378, %v370
    %v459 = vpack.c.b16 %v379, %v371
    %v460 = vpack.c.b16 %v380, %v372
    %v461 = vpack.c.b16 %v381, %v373
    %v462 = vpack.c.b16 %v390, %v382
    %v463 = vpack.c.b16 %v391, %v383
    %v464 = vpack.c.b16 %v392, %v384
    %v465 = vpack.c.b16 %v393, %v385
    %v466 = vpack.c.b16 %v394, %v386
    %v467 = vpack.c.b16 %v395, %v387
    %v468 = vpack.c.b16 %v396, %v388
    %v469 = vpack.c.b16 %v397, %v389
    %v470 = vpack.c.b16 %v406, %v398
    %v471 = vpack.c.b16 %v407, %v399
    %v472 = vpack.c.b16 %v408, %v400
    %v473 = vpack.c.b16 %v409, %v401
    %v474 = vpack.c.b16 %v410, %v402
    %v475 = vpack.c.b16 %v411, %v403
    %v476 = vpack.c.b16 %v412, %v404
    %v477 = vpack.c.b16 %v413, %v405
    %542 = vmatprep.subr.bf16.mxu0 %v471
    %543 = vmatpush1.bf16.msra.mxu0 %v470
    %544 = vmatprep.subr.bf16.mxu0 %v463
    %545 = vmatpush1.bf16.msra.mxu0 %v462
    %546 = vmatprep.subr.bf16.mxu0 %v455
    %547 = vmatpush1.bf16.msra.mxu0 %v454
    %548 = vmatprep.subr.bf16.mxu0 %v447
    %549 = vmatpush1.bf16.msra.mxu0 %v446
    %550 = vmatprep.subr.bf16.mxu0 %v439
    %551 = vmatpush1.bf16.msra.mxu0 %v438
    %552 = vmatprep.subr.bf16.mxu0 %v431
    %553 = vmatpush1.bf16.msra.mxu0 %v430
    %554 = vmatprep.subr.bf16.mxu0 %v423
    %555 = vmatpush1.bf16.msra.mxu0 %v422
    %556 = vmatprep.subr.bf16.mxu0 %v415
    %557 = vmatpush1.bf16.msra.mxu0 %v414
    %558 = vmatprep.subr.bf16.mxu0 0
    %559 = vmatpush2.bf16.msra.mxu0 0
    %560 = vmatprep.subr.bf16.mxu0 0
    %561 = vmatpush2.bf16.msra.mxu0 0
    %562 = vmatprep.subr.bf16.mxu0 0
    %563 = vmatpush2.bf16.msra.mxu0 0
    %564 = vmatprep.subr.bf16.mxu0 0
    %565 = vmatpush2.bf16.msra.mxu0 0
    %566 = vmatprep.subr.bf16.mxu0 0
    %567 = vmatpush2.bf16.msra.mxu0 0
    %568 = vmatprep.subr.bf16.mxu0 0
    %569 = vmatpush2.bf16.msra.mxu0 0
    %570 = vmatprep.subr.bf16.mxu0 0
    %571 = vmatpush2.bf16.msra.mxu0 0
    %572 = vmatprep.subr.bf16.mxu0 0
    %573 = vmatpush2.bf16.msra.mxu0 0
    %574 = vmatprep.mubr.bf16.mxu0 0
    %575 = vmatmul.mubr.bf16.gmra.mxu0 %v115
    %v576 = vpop.f32.mrf.mxu0
    %v577 = vadd.f32 %v185, %v576
    %v578 = vpop.f32.mrf.mxu0
    %v579 = vadd.f32 %v189, %v578
    %v580 = vpop.f32.mrf.mxu0
    %v581 = vpop.f32.mrf.mxu0
    %582 = vdwg.mxu0
    %583 = vmatprep.subr.bf16.mxu0 %v473
    %584 = vmatpush1.bf16.msra.mxu0 %v472
    %585 = vmatprep.subr.bf16.mxu0 %v465
    %586 = vmatpush1.bf16.msra.mxu0 %v464
    %587 = vmatprep.subr.bf16.mxu0 %v457
    %588 = vmatpush1.bf16.msra.mxu0 %v456
    %589 = vmatprep.subr.bf16.mxu0 %v449
    %590 = vmatpush1.bf16.msra.mxu0 %v448
    %591 = vmatprep.subr.bf16.mxu0 %v441
    %592 = vmatpush1.bf16.msra.mxu0 %v440
    %593 = vmatprep.subr.bf16.mxu0 %v433
    %594 = vmatpush1.bf16.msra.mxu0 %v432
    %595 = vmatprep.subr.bf16.mxu0 %v425
    %596 = vmatpush1.bf16.msra.mxu0 %v424
    %597 = vmatprep.subr.bf16.mxu0 %v417
    %598 = vmatpush1.bf16.msra.mxu0 %v416
    %599 = vmatprep.subr.bf16.mxu0 0
    %600 = vmatpush2.bf16.msra.mxu0 0
    %601 = vmatprep.subr.bf16.mxu0 0
    %602 = vmatpush2.bf16.msra.mxu0 0
    %603 = vmatprep.subr.bf16.mxu0 0
    %604 = vmatpush2.bf16.msra.mxu0 0
    %605 = vmatprep.subr.bf16.mxu0 0
    %606 = vmatpush2.bf16.msra.mxu0 0
    %607 = vmatprep.subr.bf16.mxu0 0
    %608 = vmatpush2.bf16.msra.mxu0 0
    %609 = vmatprep.subr.bf16.mxu0 0
    %610 = vmatpush2.bf16.msra.mxu0 0
    %611 = vmatprep.subr.bf16.mxu0 0
    %612 = vmatpush2.bf16.msra.mxu0 0
    %613 = vmatprep.subr.bf16.mxu0 0
    %614 = vmatpush2.bf16.msra.mxu0 0
    %615 = vmatprep.mubr.bf16.mxu0 0
    %616 = vmatmul.mubr.bf16.gmra.mxu0 %v115
    %v617 = vpop.f32.mrf.mxu0
    %v618 = vadd.f32 %v193, %v617
    %v619 = vpop.f32.mrf.mxu0
    %v620 = vadd.f32 %v197, %v619
    %v621 = vpop.f32.mrf.mxu0
    %v622 = vpop.f32.mrf.mxu0
    %623 = vdwg.mxu0
    %624 = vmatprep.subr.bf16.mxu0 %v475
    %625 = vmatpush1.bf16.msra.mxu0 %v474
    %626 = vmatprep.subr.bf16.mxu0 %v467
    %627 = vmatpush1.bf16.msra.mxu0 %v466
    %628 = vmatprep.subr.bf16.mxu0 %v459
    %629 = vmatpush1.bf16.msra.mxu0 %v458
    %630 = vmatprep.subr.bf16.mxu0 %v451
    %631 = vmatpush1.bf16.msra.mxu0 %v450
    %632 = vmatprep.subr.bf16.mxu0 %v443
    %633 = vmatpush1.bf16.msra.mxu0 %v442
    %634 = vmatprep.subr.bf16.mxu0 %v435
    %635 = vmatpush1.bf16.msra.mxu0 %v434
    %636 = vmatprep.subr.bf16.mxu0 %v427
    %637 = vmatpush1.bf16.msra.mxu0 %v426
    %638 = vmatprep.subr.bf16.mxu0 %v419
    %639 = vmatpush1.bf16.msra.mxu0 %v418
    %640 = vmatprep.subr.bf16.mxu0 0
    %641 = vmatpush2.bf16.msra.mxu0 0
    %642 = vmatprep.subr.bf16.mxu0 0
    %643 = vmatpush2.bf16.msra.mxu0 0
    %644 = vmatprep.subr.bf16.mxu0 0
    %645 = vmatpush2.bf16.msra.mxu0 0
    %646 = vmatprep.subr.bf16.mxu0 0
    %647 = vmatpush2.bf16.msra.mxu0 0
    %648 = vmatprep.subr.bf16.mxu0 0
    %649 = vmatpush2.bf16.msra.mxu0 0
    %650 = vmatprep.subr.bf16.mxu0 0
    %651 = vmatpush2.bf16.msra.mxu0 0
    %652 = vmatprep.subr.bf16.mxu0 0
    %653 = vmatpush2.bf16.msra.mxu0 0
    %654 = vmatprep.subr.bf16.mxu0 0
    %655 = vmatpush2.bf16.msra.mxu0 0
    %656 = vmatprep.mubr.bf16.mxu0 0
    %657 = vmatmul.mubr.bf16.gmra.mxu0 %v115
    %v658 = vpop.f32.mrf.mxu0
    %v659 = vadd.f32 %v201, %v658
    %v660 = vpop.f32.mrf.mxu0
    %v661 = vadd.f32 %v205, %v660
    %v662 = vpop.f32.mrf.mxu0
    %v663 = vpop.f32.mrf.mxu0
    %664 = vdwg.mxu0
    %665 = vmatprep.subr.bf16.mxu0 %v477
    %666 = vmatpush1.bf16.msra.mxu0 %v476
    %667 = vmatprep.subr.bf16.mxu0 %v469
    %668 = vmatpush1.bf16.msra.mxu0 %v468
    %669 = vmatprep.subr.bf16.mxu0 %v461
    %670 = vmatpush1.bf16.msra.mxu0 %v460
    %671 = vmatprep.subr.bf16.mxu0 %v453
    %672 = vmatpush1.bf16.msra.mxu0 %v452
    %673 = vmatprep.subr.bf16.mxu0 %v445
    %674 = vmatpush1.bf16.msra.mxu0 %v444
    %675 = vmatprep.subr.bf16.mxu0 %v437
    %676 = vmatpush1.bf16.msra.mxu0 %v436
    %677 = vmatprep.subr.bf16.mxu0 %v429
    %678 = vmatpush1.bf16.msra.mxu0 %v428
    %679 = vmatprep.subr.bf16.mxu0 %v421
    %680 = vmatpush1.bf16.msra.mxu0 %v420
    %681 = vmatprep.subr.bf16.mxu0 0
    %682 = vmatpush2.bf16.msra.mxu0 0
    %683 = vmatprep.subr.bf16.mxu0 0
    %684 = vmatpush2.bf16.msra.mxu0 0
    %685 = vmatprep.subr.bf16.mxu0 0
    %686 = vmatpush2.bf16.msra.mxu0 0
    %687 = vmatprep.subr.bf16.mxu0 0
    %688 = vmatpush2.bf16.msra.mxu0 0
    %689 = vmatprep.subr.bf16.mxu0 0
    %690 = vmatpush2.bf16.msra.mxu0 0
    %691 = vmatprep.subr.bf16.mxu0 0
    %692 = vmatpush2.bf16.msra.mxu0 0
    %693 = vmatprep.subr.bf16.mxu0 0
    %694 = vmatpush2.bf16.msra.mxu0 0
    %695 = vmatprep.subr.bf16.mxu0 0
    %696 = vmatpush2.bf16.msra.mxu0 0
    %697 = vmatprep.mubr.bf16.mxu0 0
    %698 = vmatmul.mubr.bf16.gmra.mxu0 %v115
    %v699 = vpop.f32.mrf.mxu0
    %v700 = vadd.f32 %v209, %v699
    %v701 = vpop.f32.mrf.mxu0
    %v702 = vadd.f32 %v213, %v701
    %v703 = vpop.f32.mrf.mxu0
    %v704 = vpop.f32.mrf.mxu0
    %705 = vdwg.mxu0
    %v706 = vmax.f32 %v577, 0.0
    %v707 = vmax.f32 %v579, 0.0
    %v708 = vmax.f32 %v618, 0.0
    %v709 = vmax.f32 %v620, 0.0
    %v710 = vmax.f32 %v659, 0.0
    %v711 = vmax.f32 %v661, 0.0
    %v712 = vmax.f32 %v700, 0.0
    %v713 = vmax.f32 %v702, 0.0
    %v714 = vpack.c.bf16 %v706, %v706
    %v715 = vpack.c.bf16 %v707, %v707
    %v716 = vpack.c.bf16 %v708, %v708
    %v717 = vpack.c.bf16 %v709, %v709
    %v718 = vpack.c.bf16 %v710, %v710
    %v719 = vpack.c.bf16 %v711, %v711
    %v720 = vpack.c.bf16 %v712, %v712
    %v721 = vpack.c.bf16 %v713, %v713
    %v722 = vld [vmem:[#allocation8] sm:$0xff]
    %v723 = vld [vmem:[#allocation8 + $0x8] sm:$0xff]
    %v724 = vld [vmem:[#allocation8 + $0x10] sm:$0xff]
    %v725 = vld [vmem:[#allocation8 + $0x18] sm:$0xff]
    %v726 = vld [vmem:[#allocation8 + $0x20] sm:$0xff]
    %v727 = vld [vmem:[#allocation8 + $0x28] sm:$0xff]
    %v728 = vld [vmem:[#allocation8 + $0x30] sm:$0xff]
    %v729 = vld [vmem:[#allocation8 + $0x38] sm:$0xff]
    %v730 = vld [vmem:[#allocation8 + $0x40] sm:$0xff]
    %v731 = vld [vmem:[#allocation8 + $0x48] sm:$0xff]
    %v732 = vld [vmem:[#allocation8 + $0x50] sm:$0xff]
    %v733 = vld [vmem:[#allocation8 + $0x58] sm:$0xff]
    %v734 = vld [vmem:[#allocation8 + $0x60] sm:$0xff]
    %v735 = vld [vmem:[#allocation8 + $0x68] sm:$0xff]
    %v736 = vld [vmem:[#allocation8 + $0x70] sm:$0xff]
    %v737 = vld [vmem:[#allocation8 + $0x78] sm:$0xff]
    %v738 = vld [vmem:[#allocation8 + $0x80] sm:$0xff]
    %v739 = vld [vmem:[#allocation8 + $0x88] sm:$0xff]
    %v740 = vld [vmem:[#allocation8 + $0x90] sm:$0xff]
    %v741 = vld [vmem:[#allocation8 + $0x98] sm:$0xff]
    %v742 = vld [vmem:[#allocation8 + $0xa0] sm:$0xff]
    %v743 = vld [vmem:[#allocation8 + $0xa8] sm:$0xff]
    %v744 = vld [vmem:[#allocation8 + $0xb0] sm:$0xff]
    %v745 = vld [vmem:[#allocation8 + $0xb8] sm:$0xff]
    %v746 = vld [vmem:[#allocation8 + $0xc0] sm:$0xff]
    %v747 = vld [vmem:[#allocation8 + $0xc8] sm:$0xff]
    %v748 = vld [vmem:[#allocation8 + $0xd0] sm:$0xff]
    %v749 = vld [vmem:[#allocation8 + $0xd8] sm:$0xff]
    %v750 = vld [vmem:[#allocation8 + $0xe0] sm:$0xff]
    %v751 = vld [vmem:[#allocation8 + $0xe8] sm:$0xff]
    %v752 = vld [vmem:[#allocation8 + $0xf0] sm:$0xff]
    %v753 = vld [vmem:[#allocation8 + $0xf8] sm:$0xff]
    %v754 = vld [vmem:[#allocation8 + $0x100] sm:$0xff]
    %v755 = vld [vmem:[#allocation8 + $0x108] sm:$0xff]
    %v756 = vld [vmem:[#allocation8 + $0x110] sm:$0xff]
    %v757 = vld [vmem:[#allocation8 + $0x118] sm:$0xff]
    %v758 = vld [vmem:[#allocation8 + $0x120] sm:$0xff]
    %v759 = vld [vmem:[#allocation8 + $0x128] sm:$0xff]
    %v760 = vld [vmem:[#allocation8 + $0x130] sm:$0xff]
    %v761 = vld [vmem:[#allocation8 + $0x138] sm:$0xff]
    %v762 = vld [vmem:[#allocation8 + $0x140] sm:$0xff]
    %v763 = vld [vmem:[#allocation8 + $0x148] sm:$0xff]
    %v764 = vld [vmem:[#allocation8 + $0x150] sm:$0xff]
    %v765 = vld [vmem:[#allocation8 + $0x158] sm:$0xff]
    %v766 = vld [vmem:[#allocation8 + $0x160] sm:$0xff]
    %v767 = vld [vmem:[#allocation8 + $0x168] sm:$0xff]
    %v768 = vld [vmem:[#allocation8 + $0x170] sm:$0xff]
    %v769 = vld [vmem:[#allocation8 + $0x178] sm:$0xff]
    %v770 = vld [vmem:[#allocation8 + $0x180] sm:$0xff]
    %v771 = vld [vmem:[#allocation8 + $0x188] sm:$0xff]
    %v772 = vld [vmem:[#allocation8 + $0x190] sm:$0xff]
    %v773 = vld [vmem:[#allocation8 + $0x198] sm:$0xff]
    %v774 = vld [vmem:[#allocation8 + $0x1a0] sm:$0xff]
    %v775 = vld [vmem:[#allocation8 + $0x1a8] sm:$0xff]
    %v776 = vld [vmem:[#allocation8 + $0x1b0] sm:$0xff]
    %v777 = vld [vmem:[#allocation8 + $0x1b8] sm:$0xff]
    %v778 = vld [vmem:[#allocation8 + $0x1c0] sm:$0xff]
    %v779 = vld [vmem:[#allocation8 + $0x1c8] sm:$0xff]
    %v780 = vld [vmem:[#allocation8 + $0x1d0] sm:$0xff]
    %v781 = vld [vmem:[#allocation8 + $0x1d8] sm:$0xff]
    %v782 = vld [vmem:[#allocation8 + $0x1e0] sm:$0xff]
    %v783 = vld [vmem:[#allocation8 + $0x1e8] sm:$0xff]
    %v784 = vld [vmem:[#allocation8 + $0x1f0] sm:$0xff]
    %v785 = vld [vmem:[#allocation8 + $0x1f8] sm:$0xff]
    %v786 = vld [vmem:[#allocation8 + $0x200] sm:$0xff]
    %v787 = vld [vmem:[#allocation8 + $0x208] sm:$0xff]
    %v788 = vld [vmem:[#allocation8 + $0x210] sm:$0xff]
    %v789 = vld [vmem:[#allocation8 + $0x218] sm:$0xff]
    %v790 = vld [vmem:[#allocation8 + $0x220] sm:$0xff]
    %v791 = vld [vmem:[#allocation8 + $0x228] sm:$0xff]
    %v792 = vld [vmem:[#allocation8 + $0x230] sm:$0xff]
    %v793 = vld [vmem:[#allocation8 + $0x238] sm:$0xff]
    %v794 = vld [vmem:[#allocation8 + $0x240] sm:$0xff]
    %v795 = vld [vmem:[#allocation8 + $0x248] sm:$0xff]
    %v796 = vld [vmem:[#allocation8 + $0x250] sm:$0xff]
    %v797 = vld [vmem:[#allocation8 + $0x258] sm:$0xff]
    %v798 = vld [vmem:[#allocation8 + $0x260] sm:$0xff]
    %v799 = vld [vmem:[#allocation8 + $0x268] sm:$0xff]
    %v800 = vld [vmem:[#allocation8 + $0x270] sm:$0xff]
    %v801 = vld [vmem:[#allocation8 + $0x278] sm:$0xff]
    %v802 = vld [vmem:[#allocation8 + $0x280] sm:$0xff]
    %v803 = vld [vmem:[#allocation8 + $0x288] sm:$0xff]
    %v804 = vld [vmem:[#allocation8 + $0x290] sm:$0xff]
    %v805 = vld [vmem:[#allocation8 + $0x298] sm:$0xff]
    %v806 = vld [vmem:[#allocation8 + $0x2a0] sm:$0xff]
    %v807 = vld [vmem:[#allocation8 + $0x2a8] sm:$0xff]
    %v808 = vld [vmem:[#allocation8 + $0x2b0] sm:$0xff]
    %v809 = vld [vmem:[#allocation8 + $0x2b8] sm:$0xff]
    %v810 = vld [vmem:[#allocation8 + $0x2c0] sm:$0xff]
    %v811 = vld [vmem:[#allocation8 + $0x2c8] sm:$0xff]
    %v812 = vld [vmem:[#allocation8 + $0x2d0] sm:$0xff]
    %v813 = vld [vmem:[#allocation8 + $0x2d8] sm:$0xff]
    %v814 = vld [vmem:[#allocation8 + $0x2e0] sm:$0xff]
    %v815 = vld [vmem:[#allocation8 + $0x2e8] sm:$0xff]
    %v816 = vld [vmem:[#allocation8 + $0x2f0] sm:$0xff]
    %v817 = vld [vmem:[#allocation8 + $0x2f8] sm:$0xff]
    %v818 = vld [vmem:[#allocation8 + $0x300] sm:$0xff]
    %v819 = vld [vmem:[#allocation8 + $0x308] sm:$0xff]
    %v820 = vld [vmem:[#allocation8 + $0x310] sm:$0xff]
    %v821 = vld [vmem:[#allocation8 + $0x318] sm:$0xff]
    %v822 = vld [vmem:[#allocation8 + $0x320] sm:$0xff]
    %v823 = vld [vmem:[#allocation8 + $0x328] sm:$0xff]
    %v824 = vld [vmem:[#allocation8 + $0x330] sm:$0xff]
    %v825 = vld [vmem:[#allocation8 + $0x338] sm:$0xff]
    %v826 = vld [vmem:[#allocation8 + $0x340] sm:$0xff]
    %v827 = vld [vmem:[#allocation8 + $0x348] sm:$0xff]
    %v828 = vld [vmem:[#allocation8 + $0x350] sm:$0xff]
    %v829 = vld [vmem:[#allocation8 + $0x358] sm:$0xff]
    %v830 = vld [vmem:[#allocation8 + $0x360] sm:$0xff]
    %v831 = vld [vmem:[#allocation8 + $0x368] sm:$0xff]
    %v832 = vld [vmem:[#allocation8 + $0x370] sm:$0xff]
    %v833 = vld [vmem:[#allocation8 + $0x378] sm:$0xff]
    %v834 = vld [vmem:[#allocation8 + $0x380] sm:$0xff]
    %v835 = vld [vmem:[#allocation8 + $0x388] sm:$0xff]
    %v836 = vld [vmem:[#allocation8 + $0x390] sm:$0xff]
    %v837 = vld [vmem:[#allocation8 + $0x398] sm:$0xff]
    %v838 = vld [vmem:[#allocation8 + $0x3a0] sm:$0xff]
    %v839 = vld [vmem:[#allocation8 + $0x3a8] sm:$0xff]
    %v840 = vld [vmem:[#allocation8 + $0x3b0] sm:$0xff]
    %v841 = vld [vmem:[#allocation8 + $0x3b8] sm:$0xff]
    %v842 = vld [vmem:[#allocation8 + $0x3c0] sm:$0xff]
    %v843 = vld [vmem:[#allocation8 + $0x3c8] sm:$0xff]
    %v844 = vld [vmem:[#allocation8 + $0x3d0] sm:$0xff]
    %v845 = vld [vmem:[#allocation8 + $0x3d8] sm:$0xff]
    %v846 = vld [vmem:[#allocation8 + $0x3e0] sm:$0xff]
    %v847 = vld [vmem:[#allocation8 + $0x3e8] sm:$0xff]
    %v848 = vld [vmem:[#allocation8 + $0x3f0] sm:$0xff]
    %v849 = vld [vmem:[#allocation8 + $0x3f8] sm:$0xff]
    %v850 = vld [vmem:[#allocation8 + $0x400] sm:$0xff]
    %v851 = vld [vmem:[#allocation8 + $0x408] sm:$0xff]
    %v852 = vld [vmem:[#allocation8 + $0x410] sm:$0xff]
    %v853 = vld [vmem:[#allocation8 + $0x418] sm:$0xff]
    %v854 = vld [vmem:[#allocation8 + $0x420] sm:$0xff]
    %v855 = vld [vmem:[#allocation8 + $0x428] sm:$0xff]
    %v856 = vld [vmem:[#allocation8 + $0x430] sm:$0xff]
    %v857 = vld [vmem:[#allocation8 + $0x438] sm:$0xff]
    %v858 = vld [vmem:[#allocation8 + $0x440] sm:$0xff]
    %v859 = vld [vmem:[#allocation8 + $0x448] sm:$0xff]
    %v860 = vld [vmem:[#allocation8 + $0x450] sm:$0xff]
    %v861 = vld [vmem:[#allocation8 + $0x458] sm:$0xff]
    %v862 = vld [vmem:[#allocation8 + $0x460] sm:$0xff]
    %v863 = vld [vmem:[#allocation8 + $0x468] sm:$0xff]
    %v864 = vld [vmem:[#allocation8 + $0x470] sm:$0xff]
    %v865 = vld [vmem:[#allocation8 + $0x478] sm:$0xff]
    %v866 = vld [vmem:[#allocation8 + $0x480] sm:$0xff]
    %v867 = vld [vmem:[#allocation8 + $0x488] sm:$0xff]
    %v868 = vld [vmem:[#allocation8 + $0x490] sm:$0xff]
    %v869 = vld [vmem:[#allocation8 + $0x498] sm:$0xff]
    %v870 = vld [vmem:[#allocation8 + $0x4a0] sm:$0xff]
    %v871 = vld [vmem:[#allocation8 + $0x4a8] sm:$0xff]
    %v872 = vld [vmem:[#allocation8 + $0x4b0] sm:$0xff]
    %v873 = vld [vmem:[#allocation8 + $0x4b8] sm:$0xff]
    %v874 = vld [vmem:[#allocation8 + $0x4c0] sm:$0xff]
    %v875 = vld [vmem:[#allocation8 + $0x4c8] sm:$0xff]
    %v876 = vld [vmem:[#allocation8 + $0x4d0] sm:$0xff]
    %v877 = vld [vmem:[#allocation8 + $0x4d8] sm:$0xff]
    %v878 = vld [vmem:[#allocation8 + $0x4e0] sm:$0xff]
    %v879 = vld [vmem:[#allocation8 + $0x4e8] sm:$0xff]
    %v880 = vld [vmem:[#allocation8 + $0x4f0] sm:$0xff]
    %v881 = vld [vmem:[#allocation8 + $0x4f8] sm:$0xff]
    %v882 = vld [vmem:[#allocation8 + $0x500] sm:$0xff]
    %v883 = vld [vmem:[#allocation8 + $0x508] sm:$0xff]
    %v884 = vld [vmem:[#allocation8 + $0x510] sm:$0xff]
    %v885 = vld [vmem:[#allocation8 + $0x518] sm:$0xff]
    %v886 = vld [vmem:[#allocation8 + $0x520] sm:$0xff]
    %v887 = vld [vmem:[#allocation8 + $0x528] sm:$0xff]
    %v888 = vld [vmem:[#allocation8 + $0x530] sm:$0xff]
    %v889 = vld [vmem:[#allocation8 + $0x538] sm:$0xff]
    %v890 = vld [vmem:[#allocation8 + $0x540] sm:$0xff]
    %v891 = vld [vmem:[#allocation8 + $0x548] sm:$0xff]
    %v892 = vld [vmem:[#allocation8 + $0x550] sm:$0xff]
    %v893 = vld [vmem:[#allocation8 + $0x558] sm:$0xff]
    %v894 = vld [vmem:[#allocation8 + $0x560] sm:$0xff]
    %v895 = vld [vmem:[#allocation8 + $0x568] sm:$0xff]
    %v896 = vld [vmem:[#allocation8 + $0x570] sm:$0xff]
    %v897 = vld [vmem:[#allocation8 + $0x578] sm:$0xff]
    %v898 = vld [vmem:[#allocation8 + $0x580] sm:$0xff]
    %v899 = vld [vmem:[#allocation8 + $0x588] sm:$0xff]
    %v900 = vld [vmem:[#allocation8 + $0x590] sm:$0xff]
    %v901 = vld [vmem:[#allocation8 + $0x598] sm:$0xff]
    %v902 = vld [vmem:[#allocation8 + $0x5a0] sm:$0xff]
    %v903 = vld [vmem:[#allocation8 + $0x5a8] sm:$0xff]
    %v904 = vld [vmem:[#allocation8 + $0x5b0] sm:$0xff]
    %v905 = vld [vmem:[#allocation8 + $0x5b8] sm:$0xff]
    %v906 = vld [vmem:[#allocation8 + $0x5c0] sm:$0xff]
    %v907 = vld [vmem:[#allocation8 + $0x5c8] sm:$0xff]
    %v908 = vld [vmem:[#allocation8 + $0x5d0] sm:$0xff]
    %v909 = vld [vmem:[#allocation8 + $0x5d8] sm:$0xff]
    %v910 = vld [vmem:[#allocation8 + $0x5e0] sm:$0xff]
    %v911 = vld [vmem:[#allocation8 + $0x5e8] sm:$0xff]
    %v912 = vld [vmem:[#allocation8 + $0x5f0] sm:$0xff]
    %v913 = vld [vmem:[#allocation8 + $0x5f8] sm:$0xff]
    %v914 = vld [vmem:[#allocation8 + $0x600] sm:$0xff]
    %v915 = vld [vmem:[#allocation8 + $0x608] sm:$0xff]
    %v916 = vld [vmem:[#allocation8 + $0x610] sm:$0xff]
    %v917 = vld [vmem:[#allocation8 + $0x618] sm:$0xff]
    %v918 = vld [vmem:[#allocation8 + $0x620] sm:$0xff]
    %v919 = vld [vmem:[#allocation8 + $0x628] sm:$0xff]
    %v920 = vld [vmem:[#allocation8 + $0x630] sm:$0xff]
    %v921 = vld [vmem:[#allocation8 + $0x638] sm:$0xff]
    %v922 = vld [vmem:[#allocation8 + $0x640] sm:$0xff]
    %v923 = vld [vmem:[#allocation8 + $0x648] sm:$0xff]
    %v924 = vld [vmem:[#allocation8 + $0x650] sm:$0xff]
    %v925 = vld [vmem:[#allocation8 + $0x658] sm:$0xff]
    %v926 = vld [vmem:[#allocation8 + $0x660] sm:$0xff]
    %v927 = vld [vmem:[#allocation8 + $0x668] sm:$0xff]
    %v928 = vld [vmem:[#allocation8 + $0x670] sm:$0xff]
    %v929 = vld [vmem:[#allocation8 + $0x678] sm:$0xff]
    %v930 = vld [vmem:[#allocation8 + $0x680] sm:$0xff]
    %v931 = vld [vmem:[#allocation8 + $0x688] sm:$0xff]
    %v932 = vld [vmem:[#allocation8 + $0x690] sm:$0xff]
    %v933 = vld [vmem:[#allocation8 + $0x698] sm:$0xff]
    %v934 = vld [vmem:[#allocation8 + $0x6a0] sm:$0xff]
    %v935 = vld [vmem:[#allocation8 + $0x6a8] sm:$0xff]
    %v936 = vld [vmem:[#allocation8 + $0x6b0] sm:$0xff]
    %v937 = vld [vmem:[#allocation8 + $0x6b8] sm:$0xff]
    %v938 = vld [vmem:[#allocation8 + $0x6c0] sm:$0xff]
    %v939 = vld [vmem:[#allocation8 + $0x6c8] sm:$0xff]
    %v940 = vld [vmem:[#allocation8 + $0x6d0] sm:$0xff]
    %v941 = vld [vmem:[#allocation8 + $0x6d8] sm:$0xff]
    %v942 = vld [vmem:[#allocation8 + $0x6e0] sm:$0xff]
    %v943 = vld [vmem:[#allocation8 + $0x6e8] sm:$0xff]
    %v944 = vld [vmem:[#allocation8 + $0x6f0] sm:$0xff]
    %v945 = vld [vmem:[#allocation8 + $0x6f8] sm:$0xff]
    %v946 = vld [vmem:[#allocation8 + $0x700] sm:$0xff]
    %v947 = vld [vmem:[#allocation8 + $0x708] sm:$0xff]
    %v948 = vld [vmem:[#allocation8 + $0x710] sm:$0xff]
    %v949 = vld [vmem:[#allocation8 + $0x718] sm:$0xff]
    %v950 = vld [vmem:[#allocation8 + $0x720] sm:$0xff]
    %v951 = vld [vmem:[#allocation8 + $0x728] sm:$0xff]
    %v952 = vld [vmem:[#allocation8 + $0x730] sm:$0xff]
    %v953 = vld [vmem:[#allocation8 + $0x738] sm:$0xff]
    %v954 = vld [vmem:[#allocation8 + $0x740] sm:$0xff]
    %v955 = vld [vmem:[#allocation8 + $0x748] sm:$0xff]
    %v956 = vld [vmem:[#allocation8 + $0x750] sm:$0xff]
    %v957 = vld [vmem:[#allocation8 + $0x758] sm:$0xff]
    %v958 = vld [vmem:[#allocation8 + $0x760] sm:$0xff]
    %v959 = vld [vmem:[#allocation8 + $0x768] sm:$0xff]
    %v960 = vld [vmem:[#allocation8 + $0x770] sm:$0xff]
    %v961 = vld [vmem:[#allocation8 + $0x778] sm:$0xff]
    %v962 = vld [vmem:[#allocation8 + $0x780] sm:$0xff]
    %v963 = vld [vmem:[#allocation8 + $0x788] sm:$0xff]
    %v964 = vld [vmem:[#allocation8 + $0x790] sm:$0xff]
    %v965 = vld [vmem:[#allocation8 + $0x798] sm:$0xff]
    %v966 = vld [vmem:[#allocation8 + $0x7a0] sm:$0xff]
    %v967 = vld [vmem:[#allocation8 + $0x7a8] sm:$0xff]
    %v968 = vld [vmem:[#allocation8 + $0x7b0] sm:$0xff]
    %v969 = vld [vmem:[#allocation8 + $0x7b8] sm:$0xff]
    %v970 = vld [vmem:[#allocation8 + $0x7c0] sm:$0xff]
    %v971 = vld [vmem:[#allocation8 + $0x7c8] sm:$0xff]
    %v972 = vld [vmem:[#allocation8 + $0x7d0] sm:$0xff]
    %v973 = vld [vmem:[#allocation8 + $0x7d8] sm:$0xff]
    %v974 = vld [vmem:[#allocation8 + $0x7e0] sm:$0xff]
    %v975 = vld [vmem:[#allocation8 + $0x7e8] sm:$0xff]
    %v976 = vld [vmem:[#allocation8 + $0x7f0] sm:$0xff]
    %v977 = vld [vmem:[#allocation8 + $0x7f8] sm:$0xff]
    %v978 = vld [vmem:[#allocation8 + $0x800] sm:$0xff]
    %v979 = vld [vmem:[#allocation8 + $0x808] sm:$0xff]
    %v980 = vld [vmem:[#allocation8 + $0x810] sm:$0xff]
    %v981 = vld [vmem:[#allocation8 + $0x818] sm:$0xff]
    %v982 = vld [vmem:[#allocation8 + $0x820] sm:$0xff]
    %v983 = vld [vmem:[#allocation8 + $0x828] sm:$0xff]
    %v984 = vld [vmem:[#allocation8 + $0x830] sm:$0xff]
    %v985 = vld [vmem:[#allocation8 + $0x838] sm:$0xff]
    %v986 = vld [vmem:[#allocation8 + $0x840] sm:$0xff]
    %v987 = vld [vmem:[#allocation8 + $0x848] sm:$0xff]
    %v988 = vld [vmem:[#allocation8 + $0x850] sm:$0xff]
    %v989 = vld [vmem:[#allocation8 + $0x858] sm:$0xff]
    %v990 = vld [vmem:[#allocation8 + $0x860] sm:$0xff]
    %v991 = vld [vmem:[#allocation8 + $0x868] sm:$0xff]
    %v992 = vld [vmem:[#allocation8 + $0x870] sm:$0xff]
    %v993 = vld [vmem:[#allocation8 + $0x878] sm:$0xff]
    %v994 = vld [vmem:[#allocation8 + $0x880] sm:$0xff]
    %v995 = vld [vmem:[#allocation8 + $0x888] sm:$0xff]
    %v996 = vld [vmem:[#allocation8 + $0x890] sm:$0xff]
    %v997 = vld [vmem:[#allocation8 + $0x898] sm:$0xff]
    %v998 = vld [vmem:[#allocation8 + $0x8a0] sm:$0xff]
    %v999 = vld [vmem:[#allocation8 + $0x8a8] sm:$0xff]
    %v1000 = vld [vmem:[#allocation8 + $0x8b0] sm:$0xff]
    %v1001 = vld [vmem:[#allocation8 + $0x8b8] sm:$0xff]
    %v1002 = vld [vmem:[#allocation8 + $0x8c0] sm:$0xff]
    %v1003 = vld [vmem:[#allocation8 + $0x8c8] sm:$0xff]
    %v1004 = vld [vmem:[#allocation8 + $0x8d0] sm:$0xff]
    %v1005 = vld [vmem:[#allocation8 + $0x8d8] sm:$0xff]
    %v1006 = vld [vmem:[#allocation8 + $0x8e0] sm:$0xff]
    %v1007 = vld [vmem:[#allocation8 + $0x8e8] sm:$0xff]
    %v1008 = vld [vmem:[#allocation8 + $0x8f0] sm:$0xff]
    %v1009 = vld [vmem:[#allocation8 + $0x8f8] sm:$0xff]
    %v1010 = vld [vmem:[#allocation8 + $0x900] sm:$0xff]
    %v1011 = vld [vmem:[#allocation8 + $0x908] sm:$0xff]
    %v1012 = vld [vmem:[#allocation8 + $0x910] sm:$0xff]
    %v1013 = vld [vmem:[#allocation8 + $0x918] sm:$0xff]
    %v1014 = vld [vmem:[#allocation8 + $0x920] sm:$0xff]
    %v1015 = vld [vmem:[#allocation8 + $0x928] sm:$0xff]
    %v1016 = vld [vmem:[#allocation8 + $0x930] sm:$0xff]
    %v1017 = vld [vmem:[#allocation8 + $0x938] sm:$0xff]
    %v1018 = vld [vmem:[#allocation8 + $0x940] sm:$0xff]
    %v1019 = vld [vmem:[#allocation8 + $0x948] sm:$0xff]
    %v1020 = vld [vmem:[#allocation8 + $0x950] sm:$0xff]
    %v1021 = vld [vmem:[#allocation8 + $0x958] sm:$0xff]
    %v1022 = vld [vmem:[#allocation8 + $0x960] sm:$0xff]
    %v1023 = vld [vmem:[#allocation8 + $0x968] sm:$0xff]
    %v1024 = vld [vmem:[#allocation8 + $0x970] sm:$0xff]
    %v1025 = vld [vmem:[#allocation8 + $0x978] sm:$0xff]
    %v1026 = vld [vmem:[#allocation8 + $0x980] sm:$0xff]
    %v1027 = vld [vmem:[#allocation8 + $0x988] sm:$0xff]
    %v1028 = vld [vmem:[#allocation8 + $0x990] sm:$0xff]
    %v1029 = vld [vmem:[#allocation8 + $0x998] sm:$0xff]
    %v1030 = vld [vmem:[#allocation8 + $0x9a0] sm:$0xff]
    %v1031 = vld [vmem:[#allocation8 + $0x9a8] sm:$0xff]
    %v1032 = vld [vmem:[#allocation8 + $0x9b0] sm:$0xff]
    %v1033 = vld [vmem:[#allocation8 + $0x9b8] sm:$0xff]
    %v1034 = vld [vmem:[#allocation8 + $0x9c0] sm:$0xff]
    %v1035 = vld [vmem:[#allocation8 + $0x9c8] sm:$0xff]
    %v1036 = vld [vmem:[#allocation8 + $0x9d0] sm:$0xff]
    %v1037 = vld [vmem:[#allocation8 + $0x9d8] sm:$0xff]
    %v1038 = vld [vmem:[#allocation8 + $0x9e0] sm:$0xff]
    %v1039 = vld [vmem:[#allocation8 + $0x9e8] sm:$0xff]
    %v1040 = vld [vmem:[#allocation8 + $0x9f0] sm:$0xff]
    %v1041 = vld [vmem:[#allocation8 + $0x9f8] sm:$0xff]
    %v1042 = vld [vmem:[#allocation8 + $0xa00] sm:$0xff]
    %v1043 = vld [vmem:[#allocation8 + $0xa08] sm:$0xff]
    %v1044 = vld [vmem:[#allocation8 + $0xa10] sm:$0xff]
    %v1045 = vld [vmem:[#allocation8 + $0xa18] sm:$0xff]
    %v1046 = vld [vmem:[#allocation8 + $0xa20] sm:$0xff]
    %v1047 = vld [vmem:[#allocation8 + $0xa28] sm:$0xff]
    %v1048 = vld [vmem:[#allocation8 + $0xa30] sm:$0xff]
    %v1049 = vld [vmem:[#allocation8 + $0xa38] sm:$0xff]
    %v1050 = vld [vmem:[#allocation8 + $0xa40] sm:$0xff]
    %v1051 = vld [vmem:[#allocation8 + $0xa48] sm:$0xff]
    %v1052 = vld [vmem:[#allocation8 + $0xa50] sm:$0xff]
    %v1053 = vld [vmem:[#allocation8 + $0xa58] sm:$0xff]
    %v1054 = vld [vmem:[#allocation8 + $0xa60] sm:$0xff]
    %v1055 = vld [vmem:[#allocation8 + $0xa68] sm:$0xff]
    %v1056 = vld [vmem:[#allocation8 + $0xa70] sm:$0xff]
    %v1057 = vld [vmem:[#allocation8 + $0xa78] sm:$0xff]
    %v1058 = vld [vmem:[#allocation8 + $0xa80] sm:$0xff]
    %v1059 = vld [vmem:[#allocation8 + $0xa88] sm:$0xff]
    %v1060 = vld [vmem:[#allocation8 + $0xa90] sm:$0xff]
    %v1061 = vld [vmem:[#allocation8 + $0xa98] sm:$0xff]
    %v1062 = vld [vmem:[#allocation8 + $0xaa0] sm:$0xff]
    %v1063 = vld [vmem:[#allocation8 + $0xaa8] sm:$0xff]
    %v1064 = vld [vmem:[#allocation8 + $0xab0] sm:$0xff]
    %v1065 = vld [vmem:[#allocation8 + $0xab8] sm:$0xff]
    %v1066 = vld [vmem:[#allocation8 + $0xac0] sm:$0xff]
    %v1067 = vld [vmem:[#allocation8 + $0xac8] sm:$0xff]
    %v1068 = vld [vmem:[#allocation8 + $0xad0] sm:$0xff]
    %v1069 = vld [vmem:[#allocation8 + $0xad8] sm:$0xff]
    %v1070 = vld [vmem:[#allocation8 + $0xae0] sm:$0xff]
    %v1071 = vld [vmem:[#allocation8 + $0xae8] sm:$0xff]
    %v1072 = vld [vmem:[#allocation8 + $0xaf0] sm:$0xff]
    %v1073 = vld [vmem:[#allocation8 + $0xaf8] sm:$0xff]
    %v1074 = vld [vmem:[#allocation8 + $0xb00] sm:$0xff]
    %v1075 = vld [vmem:[#allocation8 + $0xb08] sm:$0xff]
    %v1076 = vld [vmem:[#allocation8 + $0xb10] sm:$0xff]
    %v1077 = vld [vmem:[#allocation8 + $0xb18] sm:$0xff]
    %v1078 = vld [vmem:[#allocation8 + $0xb20] sm:$0xff]
    %v1079 = vld [vmem:[#allocation8 + $0xb28] sm:$0xff]
    %v1080 = vld [vmem:[#allocation8 + $0xb30] sm:$0xff]
    %v1081 = vld [vmem:[#allocation8 + $0xb38] sm:$0xff]
    %v1082 = vld [vmem:[#allocation8 + $0xb40] sm:$0xff]
    %v1083 = vld [vmem:[#allocation8 + $0xb48] sm:$0xff]
    %v1084 = vld [vmem:[#allocation8 + $0xb50] sm:$0xff]
    %v1085 = vld [vmem:[#allocation8 + $0xb58] sm:$0xff]
    %v1086 = vld [vmem:[#allocation8 + $0xb60] sm:$0xff]
    %v1087 = vld [vmem:[#allocation8 + $0xb68] sm:$0xff]
    %v1088 = vld [vmem:[#allocation8 + $0xb70] sm:$0xff]
    %v1089 = vld [vmem:[#allocation8 + $0xb78] sm:$0xff]
    %v1090 = vld [vmem:[#allocation8 + $0xb80] sm:$0xff]
    %v1091 = vld [vmem:[#allocation8 + $0xb88] sm:$0xff]
    %v1092 = vld [vmem:[#allocation8 + $0xb90] sm:$0xff]
    %v1093 = vld [vmem:[#allocation8 + $0xb98] sm:$0xff]
    %v1094 = vld [vmem:[#allocation8 + $0xba0] sm:$0xff]
    %v1095 = vld [vmem:[#allocation8 + $0xba8] sm:$0xff]
    %v1096 = vld [vmem:[#allocation8 + $0xbb0] sm:$0xff]
    %v1097 = vld [vmem:[#allocation8 + $0xbb8] sm:$0xff]
    %v1098 = vld [vmem:[#allocation8 + $0xbc0] sm:$0xff]
    %v1099 = vld [vmem:[#allocation8 + $0xbc8] sm:$0xff]
    %v1100 = vld [vmem:[#allocation8 + $0xbd0] sm:$0xff]
    %v1101 = vld [vmem:[#allocation8 + $0xbd8] sm:$0xff]
    %v1102 = vld [vmem:[#allocation8 + $0xbe0] sm:$0xff]
    %v1103 = vld [vmem:[#allocation8 + $0xbe8] sm:$0xff]
    %v1104 = vld [vmem:[#allocation8 + $0xbf0] sm:$0xff]
    %v1105 = vld [vmem:[#allocation8 + $0xbf8] sm:$0xff]
    %v1106 = vld [vmem:[#allocation8 + $0xc00] sm:$0xff]
    %v1107 = vld [vmem:[#allocation8 + $0xc08] sm:$0xff]
    %v1108 = vld [vmem:[#allocation8 + $0xc10] sm:$0xff]
    %v1109 = vld [vmem:[#allocation8 + $0xc18] sm:$0xff]
    %v1110 = vld [vmem:[#allocation8 + $0xc20] sm:$0xff]
    %v1111 = vld [vmem:[#allocation8 + $0xc28] sm:$0xff]
    %v1112 = vld [vmem:[#allocation8 + $0xc30] sm:$0xff]
    %v1113 = vld [vmem:[#allocation8 + $0xc38] sm:$0xff]
    %v1114 = vld [vmem:[#allocation8 + $0xc40] sm:$0xff]
    %v1115 = vld [vmem:[#allocation8 + $0xc48] sm:$0xff]
    %v1116 = vld [vmem:[#allocation8 + $0xc50] sm:$0xff]
    %v1117 = vld [vmem:[#allocation8 + $0xc58] sm:$0xff]
    %v1118 = vld [vmem:[#allocation8 + $0xc60] sm:$0xff]
    %v1119 = vld [vmem:[#allocation8 + $0xc68] sm:$0xff]
    %v1120 = vld [vmem:[#allocation8 + $0xc70] sm:$0xff]
    %v1121 = vld [vmem:[#allocation8 + $0xc78] sm:$0xff]
    %v1122 = vld [vmem:[#allocation8 + $0xc80] sm:$0xff]
    %v1123 = vld [vmem:[#allocation8 + $0xc88] sm:$0xff]
    %v1124 = vld [vmem:[#allocation8 + $0xc90] sm:$0xff]
    %v1125 = vld [vmem:[#allocation8 + $0xc98] sm:$0xff]
    %v1126 = vld [vmem:[#allocation8 + $0xca0] sm:$0xff]
    %v1127 = vld [vmem:[#allocation8 + $0xca8] sm:$0xff]
    %v1128 = vld [vmem:[#allocation8 + $0xcb0] sm:$0xff]
    %v1129 = vld [vmem:[#allocation8 + $0xcb8] sm:$0xff]
    %v1130 = vld [vmem:[#allocation8 + $0xcc0] sm:$0xff]
    %v1131 = vld [vmem:[#allocation8 + $0xcc8] sm:$0xff]
    %v1132 = vld [vmem:[#allocation8 + $0xcd0] sm:$0xff]
    %v1133 = vld [vmem:[#allocation8 + $0xcd8] sm:$0xff]
    %v1134 = vld [vmem:[#allocation8 + $0xce0] sm:$0xff]
    %v1135 = vld [vmem:[#allocation8 + $0xce8] sm:$0xff]
    %v1136 = vld [vmem:[#allocation8 + $0xcf0] sm:$0xff]
    %v1137 = vld [vmem:[#allocation8 + $0xcf8] sm:$0xff]
    %v1138 = vld [vmem:[#allocation8 + $0xd00] sm:$0xff]
    %v1139 = vld [vmem:[#allocation8 + $0xd08] sm:$0xff]
    %v1140 = vld [vmem:[#allocation8 + $0xd10] sm:$0xff]
    %v1141 = vld [vmem:[#allocation8 + $0xd18] sm:$0xff]
    %v1142 = vld [vmem:[#allocation8 + $0xd20] sm:$0xff]
    %v1143 = vld [vmem:[#allocation8 + $0xd28] sm:$0xff]
    %v1144 = vld [vmem:[#allocation8 + $0xd30] sm:$0xff]
    %v1145 = vld [vmem:[#allocation8 + $0xd38] sm:$0xff]
    %v1146 = vld [vmem:[#allocation8 + $0xd40] sm:$0xff]
    %v1147 = vld [vmem:[#allocation8 + $0xd48] sm:$0xff]
    %v1148 = vld [vmem:[#allocation8 + $0xd50] sm:$0xff]
    %v1149 = vld [vmem:[#allocation8 + $0xd58] sm:$0xff]
    %v1150 = vld [vmem:[#allocation8 + $0xd60] sm:$0xff]
    %v1151 = vld [vmem:[#allocation8 + $0xd68] sm:$0xff]
    %v1152 = vld [vmem:[#allocation8 + $0xd70] sm:$0xff]
    %v1153 = vld [vmem:[#allocation8 + $0xd78] sm:$0xff]
    %v1154 = vld [vmem:[#allocation8 + $0xd80] sm:$0xff]
    %v1155 = vld [vmem:[#allocation8 + $0xd88] sm:$0xff]
    %v1156 = vld [vmem:[#allocation8 + $0xd90] sm:$0xff]
    %v1157 = vld [vmem:[#allocation8 + $0xd98] sm:$0xff]
    %v1158 = vld [vmem:[#allocation8 + $0xda0] sm:$0xff]
    %v1159 = vld [vmem:[#allocation8 + $0xda8] sm:$0xff]
    %v1160 = vld [vmem:[#allocation8 + $0xdb0] sm:$0xff]
    %v1161 = vld [vmem:[#allocation8 + $0xdb8] sm:$0xff]
    %v1162 = vld [vmem:[#allocation8 + $0xdc0] sm:$0xff]
    %v1163 = vld [vmem:[#allocation8 + $0xdc8] sm:$0xff]
    %v1164 = vld [vmem:[#allocation8 + $0xdd0] sm:$0xff]
    %v1165 = vld [vmem:[#allocation8 + $0xdd8] sm:$0xff]
    %v1166 = vld [vmem:[#allocation8 + $0xde0] sm:$0xff]
    %v1167 = vld [vmem:[#allocation8 + $0xde8] sm:$0xff]
    %v1168 = vld [vmem:[#allocation8 + $0xdf0] sm:$0xff]
    %v1169 = vld [vmem:[#allocation8 + $0xdf8] sm:$0xff]
    %v1170 = vld [vmem:[#allocation8 + $0xe00] sm:$0xff]
    %v1171 = vld [vmem:[#allocation8 + $0xe08] sm:$0xff]
    %v1172 = vld [vmem:[#allocation8 + $0xe10] sm:$0xff]
    %v1173 = vld [vmem:[#allocation8 + $0xe18] sm:$0xff]
    %v1174 = vld [vmem:[#allocation8 + $0xe20] sm:$0xff]
    %v1175 = vld [vmem:[#allocation8 + $0xe28] sm:$0xff]
    %v1176 = vld [vmem:[#allocation8 + $0xe30] sm:$0xff]
    %v1177 = vld [vmem:[#allocation8 + $0xe38] sm:$0xff]
    %v1178 = vld [vmem:[#allocation8 + $0xe40] sm:$0xff]
    %v1179 = vld [vmem:[#allocation8 + $0xe48] sm:$0xff]
    %v1180 = vld [vmem:[#allocation8 + $0xe50] sm:$0xff]
    %v1181 = vld [vmem:[#allocation8 + $0xe58] sm:$0xff]
    %v1182 = vld [vmem:[#allocation8 + $0xe60] sm:$0xff]
    %v1183 = vld [vmem:[#allocation8 + $0xe68] sm:$0xff]
    %v1184 = vld [vmem:[#allocation8 + $0xe70] sm:$0xff]
    %v1185 = vld [vmem:[#allocation8 + $0xe78] sm:$0xff]
    %v1186 = vld [vmem:[#allocation8 + $0xe80] sm:$0xff]
    %v1187 = vld [vmem:[#allocation8 + $0xe88] sm:$0xff]
    %v1188 = vld [vmem:[#allocation8 + $0xe90] sm:$0xff]
    %v1189 = vld [vmem:[#allocation8 + $0xe98] sm:$0xff]
    %v1190 = vld [vmem:[#allocation8 + $0xea0] sm:$0xff]
    %v1191 = vld [vmem:[#allocation8 + $0xea8] sm:$0xff]
    %v1192 = vld [vmem:[#allocation8 + $0xeb0] sm:$0xff]
    %v1193 = vld [vmem:[#allocation8 + $0xeb8] sm:$0xff]
    %v1194 = vld [vmem:[#allocation8 + $0xec0] sm:$0xff]
    %v1195 = vld [vmem:[#allocation8 + $0xec8] sm:$0xff]
    %v1196 = vld [vmem:[#allocation8 + $0xed0] sm:$0xff]
    %v1197 = vld [vmem:[#allocation8 + $0xed8] sm:$0xff]
    %v1198 = vld [vmem:[#allocation8 + $0xee0] sm:$0xff]
    %v1199 = vld [vmem:[#allocation8 + $0xee8] sm:$0xff]
    %v1200 = vld [vmem:[#allocation8 + $0xef0] sm:$0xff]
    %v1201 = vld [vmem:[#allocation8 + $0xef8] sm:$0xff]
    %v1202 = vld [vmem:[#allocation8 + $0xf00] sm:$0xff]
    %v1203 = vld [vmem:[#allocation8 + $0xf08] sm:$0xff]
    %v1204 = vld [vmem:[#allocation8 + $0xf10] sm:$0xff]
    %v1205 = vld [vmem:[#allocation8 + $0xf18] sm:$0xff]
    %v1206 = vld [vmem:[#allocation8 + $0xf20] sm:$0xff]
    %v1207 = vld [vmem:[#allocation8 + $0xf28] sm:$0xff]
    %v1208 = vld [vmem:[#allocation8 + $0xf30] sm:$0xff]
    %v1209 = vld [vmem:[#allocation8 + $0xf38] sm:$0xff]
    %v1210 = vld [vmem:[#allocation8 + $0xf40] sm:$0xff]
    %v1211 = vld [vmem:[#allocation8 + $0xf48] sm:$0xff]
    %v1212 = vld [vmem:[#allocation8 + $0xf50] sm:$0xff]
    %v1213 = vld [vmem:[#allocation8 + $0xf58] sm:$0xff]
    %v1214 = vld [vmem:[#allocation8 + $0xf60] sm:$0xff]
    %v1215 = vld [vmem:[#allocation8 + $0xf68] sm:$0xff]
    %v1216 = vld [vmem:[#allocation8 + $0xf70] sm:$0xff]
    %v1217 = vld [vmem:[#allocation8 + $0xf78] sm:$0xff]
    %v1218 = vld [vmem:[#allocation8 + $0xf80] sm:$0xff]
    %v1219 = vld [vmem:[#allocation8 + $0xf88] sm:$0xff]
    %v1220 = vld [vmem:[#allocation8 + $0xf90] sm:$0xff]
    %v1221 = vld [vmem:[#allocation8 + $0xf98] sm:$0xff]
    %v1222 = vld [vmem:[#allocation8 + $0xfa0] sm:$0xff]
    %v1223 = vld [vmem:[#allocation8 + $0xfa8] sm:$0xff]
    %v1224 = vld [vmem:[#allocation8 + $0xfb0] sm:$0xff]
    %v1225 = vld [vmem:[#allocation8 + $0xfb8] sm:$0xff]
    %v1226 = vld [vmem:[#allocation8 + $0xfc0] sm:$0xff]
    %v1227 = vld [vmem:[#allocation8 + $0xfc8] sm:$0xff]
    %v1228 = vld [vmem:[#allocation8 + $0xfd0] sm:$0xff]
    %v1229 = vld [vmem:[#allocation8 + $0xfd8] sm:$0xff]
    %v1230 = vld [vmem:[#allocation8 + $0xfe0] sm:$0xff]
    %v1231 = vld [vmem:[#allocation8 + $0xfe8] sm:$0xff]
    %v1232 = vld [vmem:[#allocation8 + $0xff0] sm:$0xff]
    %v1233 = vld [vmem:[#allocation8 + $0xff8] sm:$0xff]
    %v1234 = vld [vmem:[#allocation10] sm:$0xff]
    %v1236 = vlaneseq
    %v1237 = vshrl.u32 %v1236, 7
    %v1238 = vsub.s32 0, %v1237
    %v1239 = vrot.slane %v1234, %v1238
    %v1240 = vlaneseq
    %v1241 = vshrl.u32 %v1240, 7
    %v1242 = vsub.s32 1, %v1241
    %v1243 = vrot.slane %v1234, %v1242
    %v1244 = vlaneseq
    %v1245 = vshrl.u32 %v1244, 7
    %v1246 = vsub.s32 2, %v1245
    %v1247 = vrot.slane %v1234, %v1246
    %v1248 = vlaneseq
    %v1249 = vshrl.u32 %v1248, 7
    %v1250 = vsub.s32 3, %v1249
    %v1251 = vrot.slane %v1234, %v1250
    %v1252 = vlaneseq
    %v1253 = vshrl.u32 %v1252, 7
    %v1254 = vsub.s32 4, %v1253
    %v1255 = vrot.slane %v1234, %v1254
    %v1256 = vlaneseq
    %v1257 = vshrl.u32 %v1256, 7
    %v1258 = vsub.s32 5, %v1257
    %v1259 = vrot.slane %v1234, %v1258
    %v1260 = vlaneseq
    %v1261 = vshrl.u32 %v1260, 7
    %v1262 = vsub.s32 6, %v1261
    %v1263 = vrot.slane %v1234, %v1262
    %v1264 = vlaneseq
    %v1265 = vshrl.u32 %v1264, 7
    %v1266 = vsub.s32 7, %v1265
    %v1267 = vrot.slane %v1234, %v1266
    %v1788 = vunpack.c.l.b16 %v722
    %v1789 = vunpack.c.h.b16 %v722
    %v1790 = vunpack.c.l.b16 %v723
    %v1791 = vunpack.c.h.b16 %v723
    %v1792 = vunpack.c.l.b16 %v724
    %v1793 = vunpack.c.h.b16 %v724
    %v1794 = vunpack.c.l.b16 %v725
    %v1795 = vunpack.c.h.b16 %v725
    %v1796 = vunpack.c.l.b16 %v726
    %v1797 = vunpack.c.h.b16 %v726
    %v1798 = vunpack.c.l.b16 %v727
    %v1799 = vunpack.c.h.b16 %v727
    %v1800 = vunpack.c.l.b16 %v728
    %v1801 = vunpack.c.h.b16 %v728
    %v1802 = vunpack.c.l.b16 %v729
    %v1803 = vunpack.c.h.b16 %v729
    %v1804 = vunpack.c.l.b16 %v730
    %v1805 = vunpack.c.h.b16 %v730
    %v1806 = vunpack.c.l.b16 %v731
    %v1807 = vunpack.c.h.b16 %v731
    %v1808 = vunpack.c.l.b16 %v732
    %v1809 = vunpack.c.h.b16 %v732
    %v1810 = vunpack.c.l.b16 %v733
    %v1811 = vunpack.c.h.b16 %v733
    %v1812 = vunpack.c.l.b16 %v734
    %v1813 = vunpack.c.h.b16 %v734
    %v1814 = vunpack.c.l.b16 %v735
    %v1815 = vunpack.c.h.b16 %v735
    %v1816 = vunpack.c.l.b16 %v736
    %v1817 = vunpack.c.h.b16 %v736
    %v1818 = vunpack.c.l.b16 %v737
    %v1819 = vunpack.c.h.b16 %v737
    %v1820 = vunpack.c.l.b16 %v738
    %v1821 = vunpack.c.h.b16 %v738
    %v1822 = vunpack.c.l.b16 %v739
    %v1823 = vunpack.c.h.b16 %v739
    %v1824 = vunpack.c.l.b16 %v740
    %v1825 = vunpack.c.h.b16 %v740
    %v1826 = vunpack.c.l.b16 %v741
    %v1827 = vunpack.c.h.b16 %v741
    %v1828 = vunpack.c.l.b16 %v742
    %v1829 = vunpack.c.h.b16 %v742
    %v1830 = vunpack.c.l.b16 %v743
    %v1831 = vunpack.c.h.b16 %v743
    %v1832 = vunpack.c.l.b16 %v744
    %v1833 = vunpack.c.h.b16 %v744
    %v1834 = vunpack.c.l.b16 %v745
    %v1835 = vunpack.c.h.b16 %v745
    %v1836 = vunpack.c.l.b16 %v746
    %v1837 = vunpack.c.h.b16 %v746
    %v1838 = vunpack.c.l.b16 %v747
    %v1839 = vunpack.c.h.b16 %v747
    %v1840 = vunpack.c.l.b16 %v748
    %v1841 = vunpack.c.h.b16 %v748
    %v1842 = vunpack.c.l.b16 %v749
    %v1843 = vunpack.c.h.b16 %v749
    %v1844 = vunpack.c.l.b16 %v750
    %v1845 = vunpack.c.h.b16 %v750
    %v1846 = vunpack.c.l.b16 %v751
    %v1847 = vunpack.c.h.b16 %v751
    %v1848 = vunpack.c.l.b16 %v752
    %v1849 = vunpack.c.h.b16 %v752
    %v1850 = vunpack.c.l.b16 %v753
    %v1851 = vunpack.c.h.b16 %v753
    %v1852 = vunpack.c.l.b16 %v754
    %v1853 = vunpack.c.h.b16 %v754
    %v1854 = vunpack.c.l.b16 %v755
    %v1855 = vunpack.c.h.b16 %v755
    %v1856 = vunpack.c.l.b16 %v756
    %v1857 = vunpack.c.h.b16 %v756
    %v1858 = vunpack.c.l.b16 %v757
    %v1859 = vunpack.c.h.b16 %v757
    %v1860 = vunpack.c.l.b16 %v758
    %v1861 = vunpack.c.h.b16 %v758
    %v1862 = vunpack.c.l.b16 %v759
    %v1863 = vunpack.c.h.b16 %v759
    %v1864 = vunpack.c.l.b16 %v760
    %v1865 = vunpack.c.h.b16 %v760
    %v1866 = vunpack.c.l.b16 %v761
    %v1867 = vunpack.c.h.b16 %v761
    %v1868 = vunpack.c.l.b16 %v762
    %v1869 = vunpack.c.h.b16 %v762
    %v1870 = vunpack.c.l.b16 %v763
    %v1871 = vunpack.c.h.b16 %v763
    %v1872 = vunpack.c.l.b16 %v764
    %v1873 = vunpack.c.h.b16 %v764
    %v1874 = vunpack.c.l.b16 %v765
    %v1875 = vunpack.c.h.b16 %v765
    %v1876 = vunpack.c.l.b16 %v766
    %v1877 = vunpack.c.h.b16 %v766
    %v1878 = vunpack.c.l.b16 %v767
    %v1879 = vunpack.c.h.b16 %v767
    %v1880 = vunpack.c.l.b16 %v768
    %v1881 = vunpack.c.h.b16 %v768
    %v1882 = vunpack.c.l.b16 %v769
    %v1883 = vunpack.c.h.b16 %v769
    %v1884 = vunpack.c.l.b16 %v770
    %v1885 = vunpack.c.h.b16 %v770
    %v1886 = vunpack.c.l.b16 %v771
    %v1887 = vunpack.c.h.b16 %v771
    %v1888 = vunpack.c.l.b16 %v772
    %v1889 = vunpack.c.h.b16 %v772
    %v1890 = vunpack.c.l.b16 %v773
    %v1891 = vunpack.c.h.b16 %v773
    %v1892 = vunpack.c.l.b16 %v774
    %v1893 = vunpack.c.h.b16 %v774
    %v1894 = vunpack.c.l.b16 %v775
    %v1895 = vunpack.c.h.b16 %v775
    %v1896 = vunpack.c.l.b16 %v776
    %v1897 = vunpack.c.h.b16 %v776
    %v1898 = vunpack.c.l.b16 %v777
    %v1899 = vunpack.c.h.b16 %v777
    %v1900 = vunpack.c.l.b16 %v778
    %v1901 = vunpack.c.h.b16 %v778
    %v1902 = vunpack.c.l.b16 %v779
    %v1903 = vunpack.c.h.b16 %v779
    %v1904 = vunpack.c.l.b16 %v780
    %v1905 = vunpack.c.h.b16 %v780
    %v1906 = vunpack.c.l.b16 %v781
    %v1907 = vunpack.c.h.b16 %v781
    %v1908 = vunpack.c.l.b16 %v782
    %v1909 = vunpack.c.h.b16 %v782
    %v1910 = vunpack.c.l.b16 %v783
    %v1911 = vunpack.c.h.b16 %v783
    %v1912 = vunpack.c.l.b16 %v784
    %v1913 = vunpack.c.h.b16 %v784
    %v1914 = vunpack.c.l.b16 %v785
    %v1915 = vunpack.c.h.b16 %v785
    %v1916 = vunpack.c.l.b16 %v786
    %v1917 = vunpack.c.h.b16 %v786
    %v1918 = vunpack.c.l.b16 %v787
    %v1919 = vunpack.c.h.b16 %v787
    %v1920 = vunpack.c.l.b16 %v788
    %v1921 = vunpack.c.h.b16 %v788
    %v1922 = vunpack.c.l.b16 %v789
    %v1923 = vunpack.c.h.b16 %v789
    %v1924 = vunpack.c.l.b16 %v790
    %v1925 = vunpack.c.h.b16 %v790
    %v1926 = vunpack.c.l.b16 %v791
    %v1927 = vunpack.c.h.b16 %v791
    %v1928 = vunpack.c.l.b16 %v792
    %v1929 = vunpack.c.h.b16 %v792
    %v1930 = vunpack.c.l.b16 %v793
    %v1931 = vunpack.c.h.b16 %v793
    %v1932 = vunpack.c.l.b16 %v794
    %v1933 = vunpack.c.h.b16 %v794
    %v1934 = vunpack.c.l.b16 %v795
    %v1935 = vunpack.c.h.b16 %v795
    %v1936 = vunpack.c.l.b16 %v796
    %v1937 = vunpack.c.h.b16 %v796
    %v1938 = vunpack.c.l.b16 %v797
    %v1939 = vunpack.c.h.b16 %v797
    %v1940 = vunpack.c.l.b16 %v798
    %v1941 = vunpack.c.h.b16 %v798
    %v1942 = vunpack.c.l.b16 %v799
    %v1943 = vunpack.c.h.b16 %v799
    %v1944 = vunpack.c.l.b16 %v800
    %v1945 = vunpack.c.h.b16 %v800
    %v1946 = vunpack.c.l.b16 %v801
    %v1947 = vunpack.c.h.b16 %v801
    %v1948 = vunpack.c.l.b16 %v802
    %v1949 = vunpack.c.h.b16 %v802
    %v1950 = vunpack.c.l.b16 %v803
    %v1951 = vunpack.c.h.b16 %v803
    %v1952 = vunpack.c.l.b16 %v804
    %v1953 = vunpack.c.h.b16 %v804
    %v1954 = vunpack.c.l.b16 %v805
    %v1955 = vunpack.c.h.b16 %v805
    %v1956 = vunpack.c.l.b16 %v806
    %v1957 = vunpack.c.h.b16 %v806
    %v1958 = vunpack.c.l.b16 %v807
    %v1959 = vunpack.c.h.b16 %v807
    %v1960 = vunpack.c.l.b16 %v808
    %v1961 = vunpack.c.h.b16 %v808
    %v1962 = vunpack.c.l.b16 %v809
    %v1963 = vunpack.c.h.b16 %v809
    %v1964 = vunpack.c.l.b16 %v810
    %v1965 = vunpack.c.h.b16 %v810
    %v1966 = vunpack.c.l.b16 %v811
    %v1967 = vunpack.c.h.b16 %v811
    %v1968 = vunpack.c.l.b16 %v812
    %v1969 = vunpack.c.h.b16 %v812
    %v1970 = vunpack.c.l.b16 %v813
    %v1971 = vunpack.c.h.b16 %v813
    %v1972 = vunpack.c.l.b16 %v814
    %v1973 = vunpack.c.h.b16 %v814
    %v1974 = vunpack.c.l.b16 %v815
    %v1975 = vunpack.c.h.b16 %v815
    %v1976 = vunpack.c.l.b16 %v816
    %v1977 = vunpack.c.h.b16 %v816
    %v1978 = vunpack.c.l.b16 %v817
    %v1979 = vunpack.c.h.b16 %v817
    %v1980 = vunpack.c.l.b16 %v818
    %v1981 = vunpack.c.h.b16 %v818
    %v1982 = vunpack.c.l.b16 %v819
    %v1983 = vunpack.c.h.b16 %v819
    %v1984 = vunpack.c.l.b16 %v820
    %v1985 = vunpack.c.h.b16 %v820
    %v1986 = vunpack.c.l.b16 %v821
    %v1987 = vunpack.c.h.b16 %v821
    %v1988 = vunpack.c.l.b16 %v822
    %v1989 = vunpack.c.h.b16 %v822
    %v1990 = vunpack.c.l.b16 %v823
    %v1991 = vunpack.c.h.b16 %v823
    %v1992 = vunpack.c.l.b16 %v824
    %v1993 = vunpack.c.h.b16 %v824
    %v1994 = vunpack.c.l.b16 %v825
    %v1995 = vunpack.c.h.b16 %v825
    %v1996 = vunpack.c.l.b16 %v826
    %v1997 = vunpack.c.h.b16 %v826
    %v1998 = vunpack.c.l.b16 %v827
    %v1999 = vunpack.c.h.b16 %v827
    %v2000 = vunpack.c.l.b16 %v828
    %v2001 = vunpack.c.h.b16 %v828
    %v2002 = vunpack.c.l.b16 %v829
    %v2003 = vunpack.c.h.b16 %v829
    %v2004 = vunpack.c.l.b16 %v830
    %v2005 = vunpack.c.h.b16 %v830
    %v2006 = vunpack.c.l.b16 %v831
    %v2007 = vunpack.c.h.b16 %v831
    %v2008 = vunpack.c.l.b16 %v832
    %v2009 = vunpack.c.h.b16 %v832
    %v2010 = vunpack.c.l.b16 %v833
    %v2011 = vunpack.c.h.b16 %v833
    %v2012 = vunpack.c.l.b16 %v834
    %v2013 = vunpack.c.h.b16 %v834
    %v2014 = vunpack.c.l.b16 %v835
    %v2015 = vunpack.c.h.b16 %v835
    %v2016 = vunpack.c.l.b16 %v836
    %v2017 = vunpack.c.h.b16 %v836
    %v2018 = vunpack.c.l.b16 %v837
    %v2019 = vunpack.c.h.b16 %v837
    %v2020 = vunpack.c.l.b16 %v838
    %v2021 = vunpack.c.h.b16 %v838
    %v2022 = vunpack.c.l.b16 %v839
    %v2023 = vunpack.c.h.b16 %v839
    %v2024 = vunpack.c.l.b16 %v840
    %v2025 = vunpack.c.h.b16 %v840
    %v2026 = vunpack.c.l.b16 %v841
    %v2027 = vunpack.c.h.b16 %v841
    %v2028 = vunpack.c.l.b16 %v842
    %v2029 = vunpack.c.h.b16 %v842
    %v2030 = vunpack.c.l.b16 %v843
    %v2031 = vunpack.c.h.b16 %v843
    %v2032 = vunpack.c.l.b16 %v844
    %v2033 = vunpack.c.h.b16 %v844
    %v2034 = vunpack.c.l.b16 %v845
    %v2035 = vunpack.c.h.b16 %v845
    %v2036 = vunpack.c.l.b16 %v846
    %v2037 = vunpack.c.h.b16 %v846
    %v2038 = vunpack.c.l.b16 %v847
    %v2039 = vunpack.c.h.b16 %v847
    %v2040 = vunpack.c.l.b16 %v848
    %v2041 = vunpack.c.h.b16 %v848
    %v2042 = vunpack.c.l.b16 %v849
    %v2043 = vunpack.c.h.b16 %v849
    %v2044 = vunpack.c.l.b16 %v850
    %v2045 = vunpack.c.h.b16 %v850
    %v2046 = vunpack.c.l.b16 %v851
    %v2047 = vunpack.c.h.b16 %v851
    %v2048 = vunpack.c.l.b16 %v852
    %v2049 = vunpack.c.h.b16 %v852
    %v2050 = vunpack.c.l.b16 %v853
    %v2051 = vunpack.c.h.b16 %v853
    %v2052 = vunpack.c.l.b16 %v854
    %v2053 = vunpack.c.h.b16 %v854
    %v2054 = vunpack.c.l.b16 %v855
    %v2055 = vunpack.c.h.b16 %v855
    %v2056 = vunpack.c.l.b16 %v856
    %v2057 = vunpack.c.h.b16 %v856
    %v2058 = vunpack.c.l.b16 %v857
    %v2059 = vunpack.c.h.b16 %v857
    %v2060 = vunpack.c.l.b16 %v858
    %v2061 = vunpack.c.h.b16 %v858
    %v2062 = vunpack.c.l.b16 %v859
    %v2063 = vunpack.c.h.b16 %v859
    %v2064 = vunpack.c.l.b16 %v860
    %v2065 = vunpack.c.h.b16 %v860
    %v2066 = vunpack.c.l.b16 %v861
    %v2067 = vunpack.c.h.b16 %v861
    %v2068 = vunpack.c.l.b16 %v862
    %v2069 = vunpack.c.h.b16 %v862
    %v2070 = vunpack.c.l.b16 %v863
    %v2071 = vunpack.c.h.b16 %v863
    %v2072 = vunpack.c.l.b16 %v864
    %v2073 = vunpack.c.h.b16 %v864
    %v2074 = vunpack.c.l.b16 %v865
    %v2075 = vunpack.c.h.b16 %v865
    %v2076 = vunpack.c.l.b16 %v866
    %v2077 = vunpack.c.h.b16 %v866
    %v2078 = vunpack.c.l.b16 %v867
    %v2079 = vunpack.c.h.b16 %v867
    %v2080 = vunpack.c.l.b16 %v868
    %v2081 = vunpack.c.h.b16 %v868
    %v2082 = vunpack.c.l.b16 %v869
    %v2083 = vunpack.c.h.b16 %v869
    %v2084 = vunpack.c.l.b16 %v870
    %v2085 = vunpack.c.h.b16 %v870
    %v2086 = vunpack.c.l.b16 %v871
    %v2087 = vunpack.c.h.b16 %v871
    %v2088 = vunpack.c.l.b16 %v872
    %v2089 = vunpack.c.h.b16 %v872
    %v2090 = vunpack.c.l.b16 %v873
    %v2091 = vunpack.c.h.b16 %v873
    %v2092 = vunpack.c.l.b16 %v874
    %v2093 = vunpack.c.h.b16 %v874
    %v2094 = vunpack.c.l.b16 %v875
    %v2095 = vunpack.c.h.b16 %v875
    %v2096 = vunpack.c.l.b16 %v876
    %v2097 = vunpack.c.h.b16 %v876
    %v2098 = vunpack.c.l.b16 %v877
    %v2099 = vunpack.c.h.b16 %v877
    %v2100 = vunpack.c.l.b16 %v878
    %v2101 = vunpack.c.h.b16 %v878
    %v2102 = vunpack.c.l.b16 %v879
    %v2103 = vunpack.c.h.b16 %v879
    %v2104 = vunpack.c.l.b16 %v880
    %v2105 = vunpack.c.h.b16 %v880
    %v2106 = vunpack.c.l.b16 %v881
    %v2107 = vunpack.c.h.b16 %v881
    %v2108 = vunpack.c.l.b16 %v882
    %v2109 = vunpack.c.h.b16 %v882
    %v2110 = vunpack.c.l.b16 %v883
    %v2111 = vunpack.c.h.b16 %v883
    %v2112 = vunpack.c.l.b16 %v884
    %v2113 = vunpack.c.h.b16 %v884
    %v2114 = vunpack.c.l.b16 %v885
    %v2115 = vunpack.c.h.b16 %v885
    %v2116 = vunpack.c.l.b16 %v886
    %v2117 = vunpack.c.h.b16 %v886
    %v2118 = vunpack.c.l.b16 %v887
    %v2119 = vunpack.c.h.b16 %v887
    %v2120 = vunpack.c.l.b16 %v888
    %v2121 = vunpack.c.h.b16 %v888
    %v2122 = vunpack.c.l.b16 %v889
    %v2123 = vunpack.c.h.b16 %v889
    %v2124 = vunpack.c.l.b16 %v890
    %v2125 = vunpack.c.h.b16 %v890
    %v2126 = vunpack.c.l.b16 %v891
    %v2127 = vunpack.c.h.b16 %v891
    %v2128 = vunpack.c.l.b16 %v892
    %v2129 = vunpack.c.h.b16 %v892
    %v2130 = vunpack.c.l.b16 %v893
    %v2131 = vunpack.c.h.b16 %v893
    %v2132 = vunpack.c.l.b16 %v894
    %v2133 = vunpack.c.h.b16 %v894
    %v2134 = vunpack.c.l.b16 %v895
    %v2135 = vunpack.c.h.b16 %v895
    %v2136 = vunpack.c.l.b16 %v896
    %v2137 = vunpack.c.h.b16 %v896
    %v2138 = vunpack.c.l.b16 %v897
    %v2139 = vunpack.c.h.b16 %v897
    %v2140 = vunpack.c.l.b16 %v898
    %v2141 = vunpack.c.h.b16 %v898
    %v2142 = vunpack.c.l.b16 %v899
    %v2143 = vunpack.c.h.b16 %v899
    %v2144 = vunpack.c.l.b16 %v900
    %v2145 = vunpack.c.h.b16 %v900
    %v2146 = vunpack.c.l.b16 %v901
    %v2147 = vunpack.c.h.b16 %v901
    %v2148 = vunpack.c.l.b16 %v902
    %v2149 = vunpack.c.h.b16 %v902
    %v2150 = vunpack.c.l.b16 %v903
    %v2151 = vunpack.c.h.b16 %v903
    %v2152 = vunpack.c.l.b16 %v904
    %v2153 = vunpack.c.h.b16 %v904
    %v2154 = vunpack.c.l.b16 %v905
    %v2155 = vunpack.c.h.b16 %v905
    %v2156 = vunpack.c.l.b16 %v906
    %v2157 = vunpack.c.h.b16 %v906
    %v2158 = vunpack.c.l.b16 %v907
    %v2159 = vunpack.c.h.b16 %v907
    %v2160 = vunpack.c.l.b16 %v908
    %v2161 = vunpack.c.h.b16 %v908
    %v2162 = vunpack.c.l.b16 %v909
    %v2163 = vunpack.c.h.b16 %v909
    %v2164 = vunpack.c.l.b16 %v910
    %v2165 = vunpack.c.h.b16 %v910
    %v2166 = vunpack.c.l.b16 %v911
    %v2167 = vunpack.c.h.b16 %v911
    %v2168 = vunpack.c.l.b16 %v912
    %v2169 = vunpack.c.h.b16 %v912
    %v2170 = vunpack.c.l.b16 %v913
    %v2171 = vunpack.c.h.b16 %v913
    %v2172 = vunpack.c.l.b16 %v914
    %v2173 = vunpack.c.h.b16 %v914
    %v2174 = vunpack.c.l.b16 %v915
    %v2175 = vunpack.c.h.b16 %v915
    %v2176 = vunpack.c.l.b16 %v916
    %v2177 = vunpack.c.h.b16 %v916
    %v2178 = vunpack.c.l.b16 %v917
    %v2179 = vunpack.c.h.b16 %v917
    %v2180 = vunpack.c.l.b16 %v918
    %v2181 = vunpack.c.h.b16 %v918
    %v2182 = vunpack.c.l.b16 %v919
    %v2183 = vunpack.c.h.b16 %v919
    %v2184 = vunpack.c.l.b16 %v920
    %v2185 = vunpack.c.h.b16 %v920
    %v2186 = vunpack.c.l.b16 %v921
    %v2187 = vunpack.c.h.b16 %v921
    %v2188 = vunpack.c.l.b16 %v922
    %v2189 = vunpack.c.h.b16 %v922
    %v2190 = vunpack.c.l.b16 %v923
    %v2191 = vunpack.c.h.b16 %v923
    %v2192 = vunpack.c.l.b16 %v924
    %v2193 = vunpack.c.h.b16 %v924
    %v2194 = vunpack.c.l.b16 %v925
    %v2195 = vunpack.c.h.b16 %v925
    %v2196 = vunpack.c.l.b16 %v926
    %v2197 = vunpack.c.h.b16 %v926
    %v2198 = vunpack.c.l.b16 %v927
    %v2199 = vunpack.c.h.b16 %v927
    %v2200 = vunpack.c.l.b16 %v928
    %v2201 = vunpack.c.h.b16 %v928
    %v2202 = vunpack.c.l.b16 %v929
    %v2203 = vunpack.c.h.b16 %v929
    %v2204 = vunpack.c.l.b16 %v930
    %v2205 = vunpack.c.h.b16 %v930
    %v2206 = vunpack.c.l.b16 %v931
    %v2207 = vunpack.c.h.b16 %v931
    %v2208 = vunpack.c.l.b16 %v932
    %v2209 = vunpack.c.h.b16 %v932
    %v2210 = vunpack.c.l.b16 %v933
    %v2211 = vunpack.c.h.b16 %v933
    %v2212 = vunpack.c.l.b16 %v934
    %v2213 = vunpack.c.h.b16 %v934
    %v2214 = vunpack.c.l.b16 %v935
    %v2215 = vunpack.c.h.b16 %v935
    %v2216 = vunpack.c.l.b16 %v936
    %v2217 = vunpack.c.h.b16 %v936
    %v2218 = vunpack.c.l.b16 %v937
    %v2219 = vunpack.c.h.b16 %v937
    %v2220 = vunpack.c.l.b16 %v938
    %v2221 = vunpack.c.h.b16 %v938
    %v2222 = vunpack.c.l.b16 %v939
    %v2223 = vunpack.c.h.b16 %v939
    %v2224 = vunpack.c.l.b16 %v940
    %v2225 = vunpack.c.h.b16 %v940
    %v2226 = vunpack.c.l.b16 %v941
    %v2227 = vunpack.c.h.b16 %v941
    %v2228 = vunpack.c.l.b16 %v942
    %v2229 = vunpack.c.h.b16 %v942
    %v2230 = vunpack.c.l.b16 %v943
    %v2231 = vunpack.c.h.b16 %v943
    %v2232 = vunpack.c.l.b16 %v944
    %v2233 = vunpack.c.h.b16 %v944
    %v2234 = vunpack.c.l.b16 %v945
    %v2235 = vunpack.c.h.b16 %v945
    %v2236 = vunpack.c.l.b16 %v946
    %v2237 = vunpack.c.h.b16 %v946
    %v2238 = vunpack.c.l.b16 %v947
    %v2239 = vunpack.c.h.b16 %v947
    %v2240 = vunpack.c.l.b16 %v948
    %v2241 = vunpack.c.h.b16 %v948
    %v2242 = vunpack.c.l.b16 %v949
    %v2243 = vunpack.c.h.b16 %v949
    %v2244 = vunpack.c.l.b16 %v950
    %v2245 = vunpack.c.h.b16 %v950
    %v2246 = vunpack.c.l.b16 %v951
    %v2247 = vunpack.c.h.b16 %v951
    %v2248 = vunpack.c.l.b16 %v952
    %v2249 = vunpack.c.h.b16 %v952
    %v2250 = vunpack.c.l.b16 %v953
    %v2251 = vunpack.c.h.b16 %v953
    %v2252 = vunpack.c.l.b16 %v954
    %v2253 = vunpack.c.h.b16 %v954
    %v2254 = vunpack.c.l.b16 %v955
    %v2255 = vunpack.c.h.b16 %v955
    %v2256 = vunpack.c.l.b16 %v956
    %v2257 = vunpack.c.h.b16 %v956
    %v2258 = vunpack.c.l.b16 %v957
    %v2259 = vunpack.c.h.b16 %v957
    %v2260 = vunpack.c.l.b16 %v958
    %v2261 = vunpack.c.h.b16 %v958
    %v2262 = vunpack.c.l.b16 %v959
    %v2263 = vunpack.c.h.b16 %v959
    %v2264 = vunpack.c.l.b16 %v960
    %v2265 = vunpack.c.h.b16 %v960
    %v2266 = vunpack.c.l.b16 %v961
    %v2267 = vunpack.c.h.b16 %v961
    %v2268 = vunpack.c.l.b16 %v962
    %v2269 = vunpack.c.h.b16 %v962
    %v2270 = vunpack.c.l.b16 %v963
    %v2271 = vunpack.c.h.b16 %v963
    %v2272 = vunpack.c.l.b16 %v964
    %v2273 = vunpack.c.h.b16 %v964
    %v2274 = vunpack.c.l.b16 %v965
    %v2275 = vunpack.c.h.b16 %v965
    %v2276 = vunpack.c.l.b16 %v966
    %v2277 = vunpack.c.h.b16 %v966
    %v2278 = vunpack.c.l.b16 %v967
    %v2279 = vunpack.c.h.b16 %v967
    %v2280 = vunpack.c.l.b16 %v968
    %v2281 = vunpack.c.h.b16 %v968
    %v2282 = vunpack.c.l.b16 %v969
    %v2283 = vunpack.c.h.b16 %v969
    %v2284 = vunpack.c.l.b16 %v970
    %v2285 = vunpack.c.h.b16 %v970
    %v2286 = vunpack.c.l.b16 %v971
    %v2287 = vunpack.c.h.b16 %v971
    %v2288 = vunpack.c.l.b16 %v972
    %v2289 = vunpack.c.h.b16 %v972
    %v2290 = vunpack.c.l.b16 %v973
    %v2291 = vunpack.c.h.b16 %v973
    %v2292 = vunpack.c.l.b16 %v974
    %v2293 = vunpack.c.h.b16 %v974
    %v2294 = vunpack.c.l.b16 %v975
    %v2295 = vunpack.c.h.b16 %v975
    %v2296 = vunpack.c.l.b16 %v976
    %v2297 = vunpack.c.h.b16 %v976
    %v2298 = vunpack.c.l.b16 %v977
    %v2299 = vunpack.c.h.b16 %v977
    %v2300 = vunpack.c.l.b16 %v978
    %v2301 = vunpack.c.h.b16 %v978
    %v2302 = vunpack.c.l.b16 %v979
    %v2303 = vunpack.c.h.b16 %v979
    %v2304 = vunpack.c.l.b16 %v980
    %v2305 = vunpack.c.h.b16 %v980
    %v2306 = vunpack.c.l.b16 %v981
    %v2307 = vunpack.c.h.b16 %v981
    %v2308 = vunpack.c.l.b16 %v982
    %v2309 = vunpack.c.h.b16 %v982
    %v2310 = vunpack.c.l.b16 %v983
    %v2311 = vunpack.c.h.b16 %v983
    %v2312 = vunpack.c.l.b16 %v984
    %v2313 = vunpack.c.h.b16 %v984
    %v2314 = vunpack.c.l.b16 %v985
    %v2315 = vunpack.c.h.b16 %v985
    %v2316 = vunpack.c.l.b16 %v986
    %v2317 = vunpack.c.h.b16 %v986
    %v2318 = vunpack.c.l.b16 %v987
    %v2319 = vunpack.c.h.b16 %v987
    %v2320 = vunpack.c.l.b16 %v988
    %v2321 = vunpack.c.h.b16 %v988
    %v2322 = vunpack.c.l.b16 %v989
    %v2323 = vunpack.c.h.b16 %v989
    %v2324 = vunpack.c.l.b16 %v990
    %v2325 = vunpack.c.h.b16 %v990
    %v2326 = vunpack.c.l.b16 %v991
    %v2327 = vunpack.c.h.b16 %v991
    %v2328 = vunpack.c.l.b16 %v992
    %v2329 = vunpack.c.h.b16 %v992
    %v2330 = vunpack.c.l.b16 %v993
    %v2331 = vunpack.c.h.b16 %v993
    %v2332 = vunpack.c.l.b16 %v994
    %v2333 = vunpack.c.h.b16 %v994
    %v2334 = vunpack.c.l.b16 %v995
    %v2335 = vunpack.c.h.b16 %v995
    %v2336 = vunpack.c.l.b16 %v996
    %v2337 = vunpack.c.h.b16 %v996
    %v2338 = vunpack.c.l.b16 %v997
    %v2339 = vunpack.c.h.b16 %v997
    %v2340 = vunpack.c.l.b16 %v998
    %v2341 = vunpack.c.h.b16 %v998
    %v2342 = vunpack.c.l.b16 %v999
    %v2343 = vunpack.c.h.b16 %v999
    %v2344 = vunpack.c.l.b16 %v1000
    %v2345 = vunpack.c.h.b16 %v1000
    %v2346 = vunpack.c.l.b16 %v1001
    %v2347 = vunpack.c.h.b16 %v1001
    %v2348 = vunpack.c.l.b16 %v1002
    %v2349 = vunpack.c.h.b16 %v1002
    %v2350 = vunpack.c.l.b16 %v1003
    %v2351 = vunpack.c.h.b16 %v1003
    %v2352 = vunpack.c.l.b16 %v1004
    %v2353 = vunpack.c.h.b16 %v1004
    %v2354 = vunpack.c.l.b16 %v1005
    %v2355 = vunpack.c.h.b16 %v1005
    %v2356 = vunpack.c.l.b16 %v1006
    %v2357 = vunpack.c.h.b16 %v1006
    %v2358 = vunpack.c.l.b16 %v1007
    %v2359 = vunpack.c.h.b16 %v1007
    %v2360 = vunpack.c.l.b16 %v1008
    %v2361 = vunpack.c.h.b16 %v1008
    %v2362 = vunpack.c.l.b16 %v1009
    %v2363 = vunpack.c.h.b16 %v1009
    %v2364 = vunpack.c.l.b16 %v1010
    %v2365 = vunpack.c.h.b16 %v1010
    %v2366 = vunpack.c.l.b16 %v1011
    %v2367 = vunpack.c.h.b16 %v1011
    %v2368 = vunpack.c.l.b16 %v1012
    %v2369 = vunpack.c.h.b16 %v1012
    %v2370 = vunpack.c.l.b16 %v1013
    %v2371 = vunpack.c.h.b16 %v1013
    %v2372 = vunpack.c.l.b16 %v1014
    %v2373 = vunpack.c.h.b16 %v1014
    %v2374 = vunpack.c.l.b16 %v1015
    %v2375 = vunpack.c.h.b16 %v1015
    %v2376 = vunpack.c.l.b16 %v1016
    %v2377 = vunpack.c.h.b16 %v1016
    %v2378 = vunpack.c.l.b16 %v1017
    %v2379 = vunpack.c.h.b16 %v1017
    %v2380 = vunpack.c.l.b16 %v1018
    %v2381 = vunpack.c.h.b16 %v1018
    %v2382 = vunpack.c.l.b16 %v1019
    %v2383 = vunpack.c.h.b16 %v1019
    %v2384 = vunpack.c.l.b16 %v1020
    %v2385 = vunpack.c.h.b16 %v1020
    %v2386 = vunpack.c.l.b16 %v1021
    %v2387 = vunpack.c.h.b16 %v1021
    %v2388 = vunpack.c.l.b16 %v1022
    %v2389 = vunpack.c.h.b16 %v1022
    %v2390 = vunpack.c.l.b16 %v1023
    %v2391 = vunpack.c.h.b16 %v1023
    %v2392 = vunpack.c.l.b16 %v1024
    %v2393 = vunpack.c.h.b16 %v1024
    %v2394 = vunpack.c.l.b16 %v1025
    %v2395 = vunpack.c.h.b16 %v1025
    %v2396 = vunpack.c.l.b16 %v1026
    %v2397 = vunpack.c.h.b16 %v1026
    %v2398 = vunpack.c.l.b16 %v1027
    %v2399 = vunpack.c.h.b16 %v1027
    %v2400 = vunpack.c.l.b16 %v1028
    %v2401 = vunpack.c.h.b16 %v1028
    %v2402 = vunpack.c.l.b16 %v1029
    %v2403 = vunpack.c.h.b16 %v1029
    %v2404 = vunpack.c.l.b16 %v1030
    %v2405 = vunpack.c.h.b16 %v1030
    %v2406 = vunpack.c.l.b16 %v1031
    %v2407 = vunpack.c.h.b16 %v1031
    %v2408 = vunpack.c.l.b16 %v1032
    %v2409 = vunpack.c.h.b16 %v1032
    %v2410 = vunpack.c.l.b16 %v1033
    %v2411 = vunpack.c.h.b16 %v1033
    %v2412 = vunpack.c.l.b16 %v1034
    %v2413 = vunpack.c.h.b16 %v1034
    %v2414 = vunpack.c.l.b16 %v1035
    %v2415 = vunpack.c.h.b16 %v1035
    %v2416 = vunpack.c.l.b16 %v1036
    %v2417 = vunpack.c.h.b16 %v1036
    %v2418 = vunpack.c.l.b16 %v1037
    %v2419 = vunpack.c.h.b16 %v1037
    %v2420 = vunpack.c.l.b16 %v1038
    %v2421 = vunpack.c.h.b16 %v1038
    %v2422 = vunpack.c.l.b16 %v1039
    %v2423 = vunpack.c.h.b16 %v1039
    %v2424 = vunpack.c.l.b16 %v1040
    %v2425 = vunpack.c.h.b16 %v1040
    %v2426 = vunpack.c.l.b16 %v1041
    %v2427 = vunpack.c.h.b16 %v1041
    %v2428 = vunpack.c.l.b16 %v1042
    %v2429 = vunpack.c.h.b16 %v1042
    %v2430 = vunpack.c.l.b16 %v1043
    %v2431 = vunpack.c.h.b16 %v1043
    %v2432 = vunpack.c.l.b16 %v1044
    %v2433 = vunpack.c.h.b16 %v1044
    %v2434 = vunpack.c.l.b16 %v1045
    %v2435 = vunpack.c.h.b16 %v1045
    %v2436 = vunpack.c.l.b16 %v1046
    %v2437 = vunpack.c.h.b16 %v1046
    %v2438 = vunpack.c.l.b16 %v1047
    %v2439 = vunpack.c.h.b16 %v1047
    %v2440 = vunpack.c.l.b16 %v1048
    %v2441 = vunpack.c.h.b16 %v1048
    %v2442 = vunpack.c.l.b16 %v1049
    %v2443 = vunpack.c.h.b16 %v1049
    %v2444 = vunpack.c.l.b16 %v1050
    %v2445 = vunpack.c.h.b16 %v1050
    %v2446 = vunpack.c.l.b16 %v1051
    %v2447 = vunpack.c.h.b16 %v1051
    %v2448 = vunpack.c.l.b16 %v1052
    %v2449 = vunpack.c.h.b16 %v1052
    %v2450 = vunpack.c.l.b16 %v1053
    %v2451 = vunpack.c.h.b16 %v1053
    %v2452 = vunpack.c.l.b16 %v1054
    %v2453 = vunpack.c.h.b16 %v1054
    %v2454 = vunpack.c.l.b16 %v1055
    %v2455 = vunpack.c.h.b16 %v1055
    %v2456 = vunpack.c.l.b16 %v1056
    %v2457 = vunpack.c.h.b16 %v1056
    %v2458 = vunpack.c.l.b16 %v1057
    %v2459 = vunpack.c.h.b16 %v1057
    %v2460 = vunpack.c.l.b16 %v1058
    %v2461 = vunpack.c.h.b16 %v1058
    %v2462 = vunpack.c.l.b16 %v1059
    %v2463 = vunpack.c.h.b16 %v1059
    %v2464 = vunpack.c.l.b16 %v1060
    %v2465 = vunpack.c.h.b16 %v1060
    %v2466 = vunpack.c.l.b16 %v1061
    %v2467 = vunpack.c.h.b16 %v1061
    %v2468 = vunpack.c.l.b16 %v1062
    %v2469 = vunpack.c.h.b16 %v1062
    %v2470 = vunpack.c.l.b16 %v1063
    %v2471 = vunpack.c.h.b16 %v1063
    %v2472 = vunpack.c.l.b16 %v1064
    %v2473 = vunpack.c.h.b16 %v1064
    %v2474 = vunpack.c.l.b16 %v1065
    %v2475 = vunpack.c.h.b16 %v1065
    %v2476 = vunpack.c.l.b16 %v1066
    %v2477 = vunpack.c.h.b16 %v1066
    %v2478 = vunpack.c.l.b16 %v1067
    %v2479 = vunpack.c.h.b16 %v1067
    %v2480 = vunpack.c.l.b16 %v1068
    %v2481 = vunpack.c.h.b16 %v1068
    %v2482 = vunpack.c.l.b16 %v1069
    %v2483 = vunpack.c.h.b16 %v1069
    %v2484 = vunpack.c.l.b16 %v1070
    %v2485 = vunpack.c.h.b16 %v1070
    %v2486 = vunpack.c.l.b16 %v1071
    %v2487 = vunpack.c.h.b16 %v1071
    %v2488 = vunpack.c.l.b16 %v1072
    %v2489 = vunpack.c.h.b16 %v1072
    %v2490 = vunpack.c.l.b16 %v1073
    %v2491 = vunpack.c.h.b16 %v1073
    %v2492 = vunpack.c.l.b16 %v1074
    %v2493 = vunpack.c.h.b16 %v1074
    %v2494 = vunpack.c.l.b16 %v1075
    %v2495 = vunpack.c.h.b16 %v1075
    %v2496 = vunpack.c.l.b16 %v1076
    %v2497 = vunpack.c.h.b16 %v1076
    %v2498 = vunpack.c.l.b16 %v1077
    %v2499 = vunpack.c.h.b16 %v1077
    %v2500 = vunpack.c.l.b16 %v1078
    %v2501 = vunpack.c.h.b16 %v1078
    %v2502 = vunpack.c.l.b16 %v1079
    %v2503 = vunpack.c.h.b16 %v1079
    %v2504 = vunpack.c.l.b16 %v1080
    %v2505 = vunpack.c.h.b16 %v1080
    %v2506 = vunpack.c.l.b16 %v1081
    %v2507 = vunpack.c.h.b16 %v1081
    %v2508 = vunpack.c.l.b16 %v1082
    %v2509 = vunpack.c.h.b16 %v1082
    %v2510 = vunpack.c.l.b16 %v1083
    %v2511 = vunpack.c.h.b16 %v1083
    %v2512 = vunpack.c.l.b16 %v1084
    %v2513 = vunpack.c.h.b16 %v1084
    %v2514 = vunpack.c.l.b16 %v1085
    %v2515 = vunpack.c.h.b16 %v1085
    %v2516 = vunpack.c.l.b16 %v1086
    %v2517 = vunpack.c.h.b16 %v1086
    %v2518 = vunpack.c.l.b16 %v1087
    %v2519 = vunpack.c.h.b16 %v1087
    %v2520 = vunpack.c.l.b16 %v1088
    %v2521 = vunpack.c.h.b16 %v1088
    %v2522 = vunpack.c.l.b16 %v1089
    %v2523 = vunpack.c.h.b16 %v1089
    %v2524 = vunpack.c.l.b16 %v1090
    %v2525 = vunpack.c.h.b16 %v1090
    %v2526 = vunpack.c.l.b16 %v1091
    %v2527 = vunpack.c.h.b16 %v1091
    %v2528 = vunpack.c.l.b16 %v1092
    %v2529 = vunpack.c.h.b16 %v1092
    %v2530 = vunpack.c.l.b16 %v1093
    %v2531 = vunpack.c.h.b16 %v1093
    %v2532 = vunpack.c.l.b16 %v1094
    %v2533 = vunpack.c.h.b16 %v1094
    %v2534 = vunpack.c.l.b16 %v1095
    %v2535 = vunpack.c.h.b16 %v1095
    %v2536 = vunpack.c.l.b16 %v1096
    %v2537 = vunpack.c.h.b16 %v1096
    %v2538 = vunpack.c.l.b16 %v1097
    %v2539 = vunpack.c.h.b16 %v1097
    %v2540 = vunpack.c.l.b16 %v1098
    %v2541 = vunpack.c.h.b16 %v1098
    %v2542 = vunpack.c.l.b16 %v1099
    %v2543 = vunpack.c.h.b16 %v1099
    %v2544 = vunpack.c.l.b16 %v1100
    %v2545 = vunpack.c.h.b16 %v1100
    %v2546 = vunpack.c.l.b16 %v1101
    %v2547 = vunpack.c.h.b16 %v1101
    %v2548 = vunpack.c.l.b16 %v1102
    %v2549 = vunpack.c.h.b16 %v1102
    %v2550 = vunpack.c.l.b16 %v1103
    %v2551 = vunpack.c.h.b16 %v1103
    %v2552 = vunpack.c.l.b16 %v1104
    %v2553 = vunpack.c.h.b16 %v1104
    %v2554 = vunpack.c.l.b16 %v1105
    %v2555 = vunpack.c.h.b16 %v1105
    %v2556 = vunpack.c.l.b16 %v1106
    %v2557 = vunpack.c.h.b16 %v1106
    %v2558 = vunpack.c.l.b16 %v1107
    %v2559 = vunpack.c.h.b16 %v1107
    %v2560 = vunpack.c.l.b16 %v1108
    %v2561 = vunpack.c.h.b16 %v1108
    %v2562 = vunpack.c.l.b16 %v1109
    %v2563 = vunpack.c.h.b16 %v1109
    %v2564 = vunpack.c.l.b16 %v1110
    %v2565 = vunpack.c.h.b16 %v1110
    %v2566 = vunpack.c.l.b16 %v1111
    %v2567 = vunpack.c.h.b16 %v1111
    %v2568 = vunpack.c.l.b16 %v1112
    %v2569 = vunpack.c.h.b16 %v1112
    %v2570 = vunpack.c.l.b16 %v1113
    %v2571 = vunpack.c.h.b16 %v1113
    %v2572 = vunpack.c.l.b16 %v1114
    %v2573 = vunpack.c.h.b16 %v1114
    %v2574 = vunpack.c.l.b16 %v1115
    %v2575 = vunpack.c.h.b16 %v1115
    %v2576 = vunpack.c.l.b16 %v1116
    %v2577 = vunpack.c.h.b16 %v1116
    %v2578 = vunpack.c.l.b16 %v1117
    %v2579 = vunpack.c.h.b16 %v1117
    %v2580 = vunpack.c.l.b16 %v1118
    %v2581 = vunpack.c.h.b16 %v1118
    %v2582 = vunpack.c.l.b16 %v1119
    %v2583 = vunpack.c.h.b16 %v1119
    %v2584 = vunpack.c.l.b16 %v1120
    %v2585 = vunpack.c.h.b16 %v1120
    %v2586 = vunpack.c.l.b16 %v1121
    %v2587 = vunpack.c.h.b16 %v1121
    %v2588 = vunpack.c.l.b16 %v1122
    %v2589 = vunpack.c.h.b16 %v1122
    %v2590 = vunpack.c.l.b16 %v1123
    %v2591 = vunpack.c.h.b16 %v1123
    %v2592 = vunpack.c.l.b16 %v1124
    %v2593 = vunpack.c.h.b16 %v1124
    %v2594 = vunpack.c.l.b16 %v1125
    %v2595 = vunpack.c.h.b16 %v1125
    %v2596 = vunpack.c.l.b16 %v1126
    %v2597 = vunpack.c.h.b16 %v1126
    %v2598 = vunpack.c.l.b16 %v1127
    %v2599 = vunpack.c.h.b16 %v1127
    %v2600 = vunpack.c.l.b16 %v1128
    %v2601 = vunpack.c.h.b16 %v1128
    %v2602 = vunpack.c.l.b16 %v1129
    %v2603 = vunpack.c.h.b16 %v1129
    %v2604 = vunpack.c.l.b16 %v1130
    %v2605 = vunpack.c.h.b16 %v1130
    %v2606 = vunpack.c.l.b16 %v1131
    %v2607 = vunpack.c.h.b16 %v1131
    %v2608 = vunpack.c.l.b16 %v1132
    %v2609 = vunpack.c.h.b16 %v1132
    %v2610 = vunpack.c.l.b16 %v1133
    %v2611 = vunpack.c.h.b16 %v1133
    %v2612 = vunpack.c.l.b16 %v1134
    %v2613 = vunpack.c.h.b16 %v1134
    %v2614 = vunpack.c.l.b16 %v1135
    %v2615 = vunpack.c.h.b16 %v1135
    %v2616 = vunpack.c.l.b16 %v1136
    %v2617 = vunpack.c.h.b16 %v1136
    %v2618 = vunpack.c.l.b16 %v1137
    %v2619 = vunpack.c.h.b16 %v1137
    %v2620 = vunpack.c.l.b16 %v1138
    %v2621 = vunpack.c.h.b16 %v1138
    %v2622 = vunpack.c.l.b16 %v1139
    %v2623 = vunpack.c.h.b16 %v1139
    %v2624 = vunpack.c.l.b16 %v1140
    %v2625 = vunpack.c.h.b16 %v1140
    %v2626 = vunpack.c.l.b16 %v1141
    %v2627 = vunpack.c.h.b16 %v1141
    %v2628 = vunpack.c.l.b16 %v1142
    %v2629 = vunpack.c.h.b16 %v1142
    %v2630 = vunpack.c.l.b16 %v1143
    %v2631 = vunpack.c.h.b16 %v1143
    %v2632 = vunpack.c.l.b16 %v1144
    %v2633 = vunpack.c.h.b16 %v1144
    %v2634 = vunpack.c.l.b16 %v1145
    %v2635 = vunpack.c.h.b16 %v1145
    %v2636 = vunpack.c.l.b16 %v1146
    %v2637 = vunpack.c.h.b16 %v1146
    %v2638 = vunpack.c.l.b16 %v1147
    %v2639 = vunpack.c.h.b16 %v1147
    %v2640 = vunpack.c.l.b16 %v1148
    %v2641 = vunpack.c.h.b16 %v1148
    %v2642 = vunpack.c.l.b16 %v1149
    %v2643 = vunpack.c.h.b16 %v1149
    %v2644 = vunpack.c.l.b16 %v1150
    %v2645 = vunpack.c.h.b16 %v1150
    %v2646 = vunpack.c.l.b16 %v1151
    %v2647 = vunpack.c.h.b16 %v1151
    %v2648 = vunpack.c.l.b16 %v1152
    %v2649 = vunpack.c.h.b16 %v1152
    %v2650 = vunpack.c.l.b16 %v1153
    %v2651 = vunpack.c.h.b16 %v1153
    %v2652 = vunpack.c.l.b16 %v1154
    %v2653 = vunpack.c.h.b16 %v1154
    %v2654 = vunpack.c.l.b16 %v1155
    %v2655 = vunpack.c.h.b16 %v1155
    %v2656 = vunpack.c.l.b16 %v1156
    %v2657 = vunpack.c.h.b16 %v1156
    %v2658 = vunpack.c.l.b16 %v1157
    %v2659 = vunpack.c.h.b16 %v1157
    %v2660 = vunpack.c.l.b16 %v1158
    %v2661 = vunpack.c.h.b16 %v1158
    %v2662 = vunpack.c.l.b16 %v1159
    %v2663 = vunpack.c.h.b16 %v1159
    %v2664 = vunpack.c.l.b16 %v1160
    %v2665 = vunpack.c.h.b16 %v1160
    %v2666 = vunpack.c.l.b16 %v1161
    %v2667 = vunpack.c.h.b16 %v1161
    %v2668 = vunpack.c.l.b16 %v1162
    %v2669 = vunpack.c.h.b16 %v1162
    %v2670 = vunpack.c.l.b16 %v1163
    %v2671 = vunpack.c.h.b16 %v1163
    %v2672 = vunpack.c.l.b16 %v1164
    %v2673 = vunpack.c.h.b16 %v1164
    %v2674 = vunpack.c.l.b16 %v1165
    %v2675 = vunpack.c.h.b16 %v1165
    %v2676 = vunpack.c.l.b16 %v1166
    %v2677 = vunpack.c.h.b16 %v1166
    %v2678 = vunpack.c.l.b16 %v1167
    %v2679 = vunpack.c.h.b16 %v1167
    %v2680 = vunpack.c.l.b16 %v1168
    %v2681 = vunpack.c.h.b16 %v1168
    %v2682 = vunpack.c.l.b16 %v1169
    %v2683 = vunpack.c.h.b16 %v1169
    %v2684 = vunpack.c.l.b16 %v1170
    %v2685 = vunpack.c.h.b16 %v1170
    %v2686 = vunpack.c.l.b16 %v1171
    %v2687 = vunpack.c.h.b16 %v1171
    %v2688 = vunpack.c.l.b16 %v1172
    %v2689 = vunpack.c.h.b16 %v1172
    %v2690 = vunpack.c.l.b16 %v1173
    %v2691 = vunpack.c.h.b16 %v1173
    %v2692 = vunpack.c.l.b16 %v1174
    %v2693 = vunpack.c.h.b16 %v1174
    %v2694 = vunpack.c.l.b16 %v1175
    %v2695 = vunpack.c.h.b16 %v1175
    %v2696 = vunpack.c.l.b16 %v1176
    %v2697 = vunpack.c.h.b16 %v1176
    %v2698 = vunpack.c.l.b16 %v1177
    %v2699 = vunpack.c.h.b16 %v1177
    %v2700 = vunpack.c.l.b16 %v1178
    %v2701 = vunpack.c.h.b16 %v1178
    %v2702 = vunpack.c.l.b16 %v1179
    %v2703 = vunpack.c.h.b16 %v1179
    %v2704 = vunpack.c.l.b16 %v1180
    %v2705 = vunpack.c.h.b16 %v1180
    %v2706 = vunpack.c.l.b16 %v1181
    %v2707 = vunpack.c.h.b16 %v1181
    %v2708 = vunpack.c.l.b16 %v1182
    %v2709 = vunpack.c.h.b16 %v1182
    %v2710 = vunpack.c.l.b16 %v1183
    %v2711 = vunpack.c.h.b16 %v1183
    %v2712 = vunpack.c.l.b16 %v1184
    %v2713 = vunpack.c.h.b16 %v1184
    %v2714 = vunpack.c.l.b16 %v1185
    %v2715 = vunpack.c.h.b16 %v1185
    %v2716 = vunpack.c.l.b16 %v1186
    %v2717 = vunpack.c.h.b16 %v1186
    %v2718 = vunpack.c.l.b16 %v1187
    %v2719 = vunpack.c.h.b16 %v1187
    %v2720 = vunpack.c.l.b16 %v1188
    %v2721 = vunpack.c.h.b16 %v1188
    %v2722 = vunpack.c.l.b16 %v1189
    %v2723 = vunpack.c.h.b16 %v1189
    %v2724 = vunpack.c.l.b16 %v1190
    %v2725 = vunpack.c.h.b16 %v1190
    %v2726 = vunpack.c.l.b16 %v1191
    %v2727 = vunpack.c.h.b16 %v1191
    %v2728 = vunpack.c.l.b16 %v1192
    %v2729 = vunpack.c.h.b16 %v1192
    %v2730 = vunpack.c.l.b16 %v1193
    %v2731 = vunpack.c.h.b16 %v1193
    %v2732 = vunpack.c.l.b16 %v1194
    %v2733 = vunpack.c.h.b16 %v1194
    %v2734 = vunpack.c.l.b16 %v1195
    %v2735 = vunpack.c.h.b16 %v1195
    %v2736 = vunpack.c.l.b16 %v1196
    %v2737 = vunpack.c.h.b16 %v1196
    %v2738 = vunpack.c.l.b16 %v1197
    %v2739 = vunpack.c.h.b16 %v1197
    %v2740 = vunpack.c.l.b16 %v1198
    %v2741 = vunpack.c.h.b16 %v1198
    %v2742 = vunpack.c.l.b16 %v1199
    %v2743 = vunpack.c.h.b16 %v1199
    %v2744 = vunpack.c.l.b16 %v1200
    %v2745 = vunpack.c.h.b16 %v1200
    %v2746 = vunpack.c.l.b16 %v1201
    %v2747 = vunpack.c.h.b16 %v1201
    %v2748 = vunpack.c.l.b16 %v1202
    %v2749 = vunpack.c.h.b16 %v1202
    %v2750 = vunpack.c.l.b16 %v1203
    %v2751 = vunpack.c.h.b16 %v1203
    %v2752 = vunpack.c.l.b16 %v1204
    %v2753 = vunpack.c.h.b16 %v1204
    %v2754 = vunpack.c.l.b16 %v1205
    %v2755 = vunpack.c.h.b16 %v1205
    %v2756 = vunpack.c.l.b16 %v1206
    %v2757 = vunpack.c.h.b16 %v1206
    %v2758 = vunpack.c.l.b16 %v1207
    %v2759 = vunpack.c.h.b16 %v1207
    %v2760 = vunpack.c.l.b16 %v1208
    %v2761 = vunpack.c.h.b16 %v1208
    %v2762 = vunpack.c.l.b16 %v1209
    %v2763 = vunpack.c.h.b16 %v1209
    %v2764 = vunpack.c.l.b16 %v1210
    %v2765 = vunpack.c.h.b16 %v1210
    %v2766 = vunpack.c.l.b16 %v1211
    %v2767 = vunpack.c.h.b16 %v1211
    %v2768 = vunpack.c.l.b16 %v1212
    %v2769 = vunpack.c.h.b16 %v1212
    %v2770 = vunpack.c.l.b16 %v1213
    %v2771 = vunpack.c.h.b16 %v1213
    %v2772 = vunpack.c.l.b16 %v1214
    %v2773 = vunpack.c.h.b16 %v1214
    %v2774 = vunpack.c.l.b16 %v1215
    %v2775 = vunpack.c.h.b16 %v1215
    %v2776 = vunpack.c.l.b16 %v1216
    %v2777 = vunpack.c.h.b16 %v1216
    %v2778 = vunpack.c.l.b16 %v1217
    %v2779 = vunpack.c.h.b16 %v1217
    %v2780 = vunpack.c.l.b16 %v1218
    %v2781 = vunpack.c.h.b16 %v1218
    %v2782 = vunpack.c.l.b16 %v1219
    %v2783 = vunpack.c.h.b16 %v1219
    %v2784 = vunpack.c.l.b16 %v1220
    %v2785 = vunpack.c.h.b16 %v1220
    %v2786 = vunpack.c.l.b16 %v1221
    %v2787 = vunpack.c.h.b16 %v1221
    %v2788 = vunpack.c.l.b16 %v1222
    %v2789 = vunpack.c.h.b16 %v1222
    %v2790 = vunpack.c.l.b16 %v1223
    %v2791 = vunpack.c.h.b16 %v1223
    %v2792 = vunpack.c.l.b16 %v1224
    %v2793 = vunpack.c.h.b16 %v1224
    %v2794 = vunpack.c.l.b16 %v1225
    %v2795 = vunpack.c.h.b16 %v1225
    %v2796 = vunpack.c.l.b16 %v1226
    %v2797 = vunpack.c.h.b16 %v1226
    %v2798 = vunpack.c.l.b16 %v1227
    %v2799 = vunpack.c.h.b16 %v1227
    %v2800 = vunpack.c.l.b16 %v1228
    %v2801 = vunpack.c.h.b16 %v1228
    %v2802 = vunpack.c.l.b16 %v1229
    %v2803 = vunpack.c.h.b16 %v1229
    %v2804 = vunpack.c.l.b16 %v1230
    %v2805 = vunpack.c.h.b16 %v1230
    %v2806 = vunpack.c.l.b16 %v1231
    %v2807 = vunpack.c.h.b16 %v1231
    %v2808 = vunpack.c.l.b16 %v1232
    %v2809 = vunpack.c.h.b16 %v1232
    %v2810 = vunpack.c.l.b16 %v1233
    %v2811 = vunpack.c.h.b16 %v1233
    %v2812 = vpack.c.b16 %v1796, %v1788
    %v2813 = vpack.c.b16 %v1797, %v1789
    %v2814 = vpack.c.b16 %v1798, %v1790
    %v2815 = vpack.c.b16 %v1799, %v1791
    %v2816 = vpack.c.b16 %v1800, %v1792
    %v2817 = vpack.c.b16 %v1801, %v1793
    %v2818 = vpack.c.b16 %v1802, %v1794
    %v2819 = vpack.c.b16 %v1803, %v1795
    %v2820 = vpack.c.b16 %v1812, %v1804
    %v2821 = vpack.c.b16 %v1813, %v1805
    %v2822 = vpack.c.b16 %v1814, %v1806
    %v2823 = vpack.c.b16 %v1815, %v1807
    %v2824 = vpack.c.b16 %v1816, %v1808
    %v2825 = vpack.c.b16 %v1817, %v1809
    %v2826 = vpack.c.b16 %v1818, %v1810
    %v2827 = vpack.c.b16 %v1819, %v1811
    %v2828 = vpack.c.b16 %v1828, %v1820
    %v2829 = vpack.c.b16 %v1829, %v1821
    %v2830 = vpack.c.b16 %v1830, %v1822
    %v2831 = vpack.c.b16 %v1831, %v1823
    %v2832 = vpack.c.b16 %v1832, %v1824
    %v2833 = vpack.c.b16 %v1833, %v1825
    %v2834 = vpack.c.b16 %v1834, %v1826
    %v2835 = vpack.c.b16 %v1835, %v1827
    %v2836 = vpack.c.b16 %v1844, %v1836
    %v2837 = vpack.c.b16 %v1845, %v1837
    %v2838 = vpack.c.b16 %v1846, %v1838
    %v2839 = vpack.c.b16 %v1847, %v1839
    %v2840 = vpack.c.b16 %v1848, %v1840
    %v2841 = vpack.c.b16 %v1849, %v1841
    %v2842 = vpack.c.b16 %v1850, %v1842
    %v2843 = vpack.c.b16 %v1851, %v1843
    %v2844 = vpack.c.b16 %v1860, %v1852
    %v2845 = vpack.c.b16 %v1861, %v1853
    %v2846 = vpack.c.b16 %v1862, %v1854
    %v2847 = vpack.c.b16 %v1863, %v1855
    %v2848 = vpack.c.b16 %v1864, %v1856
    %v2849 = vpack.c.b16 %v1865, %v1857
    %v2850 = vpack.c.b16 %v1866, %v1858
    %v2851 = vpack.c.b16 %v1867, %v1859
    %v2852 = vpack.c.b16 %v1876, %v1868
    %v2853 = vpack.c.b16 %v1877, %v1869
    %v2854 = vpack.c.b16 %v1878, %v1870
    %v2855 = vpack.c.b16 %v1879, %v1871
    %v2856 = vpack.c.b16 %v1880, %v1872
    %v2857 = vpack.c.b16 %v1881, %v1873
    %v2858 = vpack.c.b16 %v1882, %v1874
    %v2859 = vpack.c.b16 %v1883, %v1875
    %v2860 = vpack.c.b16 %v1892, %v1884
    %v2861 = vpack.c.b16 %v1893, %v1885
    %v2862 = vpack.c.b16 %v1894, %v1886
    %v2863 = vpack.c.b16 %v1895, %v1887
    %v2864 = vpack.c.b16 %v1896, %v1888
    %v2865 = vpack.c.b16 %v1897, %v1889
    %v2866 = vpack.c.b16 %v1898, %v1890
    %v2867 = vpack.c.b16 %v1899, %v1891
    %v2868 = vpack.c.b16 %v1908, %v1900
    %v2869 = vpack.c.b16 %v1909, %v1901
    %v2870 = vpack.c.b16 %v1910, %v1902
    %v2871 = vpack.c.b16 %v1911, %v1903
    %v2872 = vpack.c.b16 %v1912, %v1904
    %v2873 = vpack.c.b16 %v1913, %v1905
    %v2874 = vpack.c.b16 %v1914, %v1906
    %v2875 = vpack.c.b16 %v1915, %v1907
    %v2876 = vpack.c.b16 %v1924, %v1916
    %v2877 = vpack.c.b16 %v1925, %v1917
    %v2878 = vpack.c.b16 %v1926, %v1918
    %v2879 = vpack.c.b16 %v1927, %v1919
    %v2880 = vpack.c.b16 %v1928, %v1920
    %v2881 = vpack.c.b16 %v1929, %v1921
    %v2882 = vpack.c.b16 %v1930, %v1922
    %v2883 = vpack.c.b16 %v1931, %v1923
    %v2884 = vpack.c.b16 %v1940, %v1932
    %v2885 = vpack.c.b16 %v1941, %v1933
    %v2886 = vpack.c.b16 %v1942, %v1934
    %v2887 = vpack.c.b16 %v1943, %v1935
    %v2888 = vpack.c.b16 %v1944, %v1936
    %v2889 = vpack.c.b16 %v1945, %v1937
    %v2890 = vpack.c.b16 %v1946, %v1938
    %v2891 = vpack.c.b16 %v1947, %v1939
    %v2892 = vpack.c.b16 %v1956, %v1948
    %v2893 = vpack.c.b16 %v1957, %v1949
    %v2894 = vpack.c.b16 %v1958, %v1950
    %v2895 = vpack.c.b16 %v1959, %v1951
    %v2896 = vpack.c.b16 %v1960, %v1952
    %v2897 = vpack.c.b16 %v1961, %v1953
    %v2898 = vpack.c.b16 %v1962, %v1954
    %v2899 = vpack.c.b16 %v1963, %v1955
    %v2900 = vpack.c.b16 %v1972, %v1964
    %v2901 = vpack.c.b16 %v1973, %v1965
    %v2902 = vpack.c.b16 %v1974, %v1966
    %v2903 = vpack.c.b16 %v1975, %v1967
    %v2904 = vpack.c.b16 %v1976, %v1968
    %v2905 = vpack.c.b16 %v1977, %v1969
    %v2906 = vpack.c.b16 %v1978, %v1970
    %v2907 = vpack.c.b16 %v1979, %v1971
    %v2908 = vpack.c.b16 %v1988, %v1980
    %v2909 = vpack.c.b16 %v1989, %v1981
    %v2910 = vpack.c.b16 %v1990, %v1982
    %v2911 = vpack.c.b16 %v1991, %v1983
    %v2912 = vpack.c.b16 %v1992, %v1984
    %v2913 = vpack.c.b16 %v1993, %v1985
    %v2914 = vpack.c.b16 %v1994, %v1986
    %v2915 = vpack.c.b16 %v1995, %v1987
    %v2916 = vpack.c.b16 %v2004, %v1996
    %v2917 = vpack.c.b16 %v2005, %v1997
    %v2918 = vpack.c.b16 %v2006, %v1998
    %v2919 = vpack.c.b16 %v2007, %v1999
    %v2920 = vpack.c.b16 %v2008, %v2000
    %v2921 = vpack.c.b16 %v2009, %v2001
    %v2922 = vpack.c.b16 %v2010, %v2002
    %v2923 = vpack.c.b16 %v2011, %v2003
    %v2924 = vpack.c.b16 %v2020, %v2012
    %v2925 = vpack.c.b16 %v2021, %v2013
    %v2926 = vpack.c.b16 %v2022, %v2014
    %v2927 = vpack.c.b16 %v2023, %v2015
    %v2928 = vpack.c.b16 %v2024, %v2016
    %v2929 = vpack.c.b16 %v2025, %v2017
    %v2930 = vpack.c.b16 %v2026, %v2018
    %v2931 = vpack.c.b16 %v2027, %v2019
    %v2932 = vpack.c.b16 %v2036, %v2028
    %v2933 = vpack.c.b16 %v2037, %v2029
    %v2934 = vpack.c.b16 %v2038, %v2030
    %v2935 = vpack.c.b16 %v2039, %v2031
    %v2936 = vpack.c.b16 %v2040, %v2032
    %v2937 = vpack.c.b16 %v2041, %v2033
    %v2938 = vpack.c.b16 %v2042, %v2034
    %v2939 = vpack.c.b16 %v2043, %v2035
    %v2940 = vpack.c.b16 %v2052, %v2044
    %v2941 = vpack.c.b16 %v2053, %v2045
    %v2942 = vpack.c.b16 %v2054, %v2046
    %v2943 = vpack.c.b16 %v2055, %v2047
    %v2944 = vpack.c.b16 %v2056, %v2048
    %v2945 = vpack.c.b16 %v2057, %v2049
    %v2946 = vpack.c.b16 %v2058, %v2050
    %v2947 = vpack.c.b16 %v2059, %v2051
    %v2948 = vpack.c.b16 %v2068, %v2060
    %v2949 = vpack.c.b16 %v2069, %v2061
    %v2950 = vpack.c.b16 %v2070, %v2062
    %v2951 = vpack.c.b16 %v2071, %v2063
    %v2952 = vpack.c.b16 %v2072, %v2064
    %v2953 = vpack.c.b16 %v2073, %v2065
    %v2954 = vpack.c.b16 %v2074, %v2066
    %v2955 = vpack.c.b16 %v2075, %v2067
    %v2956 = vpack.c.b16 %v2084, %v2076
    %v2957 = vpack.c.b16 %v2085, %v2077
    %v2958 = vpack.c.b16 %v2086, %v2078
    %v2959 = vpack.c.b16 %v2087, %v2079
    %v2960 = vpack.c.b16 %v2088, %v2080
    %v2961 = vpack.c.b16 %v2089, %v2081
    %v2962 = vpack.c.b16 %v2090, %v2082
    %v2963 = vpack.c.b16 %v2091, %v2083
    %v2964 = vpack.c.b16 %v2100, %v2092
    %v2965 = vpack.c.b16 %v2101, %v2093
    %v2966 = vpack.c.b16 %v2102, %v2094
    %v2967 = vpack.c.b16 %v2103, %v2095
    %v2968 = vpack.c.b16 %v2104, %v2096
    %v2969 = vpack.c.b16 %v2105, %v2097
    %v2970 = vpack.c.b16 %v2106, %v2098
    %v2971 = vpack.c.b16 %v2107, %v2099
    %v2972 = vpack.c.b16 %v2116, %v2108
    %v2973 = vpack.c.b16 %v2117, %v2109
    %v2974 = vpack.c.b16 %v2118, %v2110
    %v2975 = vpack.c.b16 %v2119, %v2111
    %v2976 = vpack.c.b16 %v2120, %v2112
    %v2977 = vpack.c.b16 %v2121, %v2113
    %v2978 = vpack.c.b16 %v2122, %v2114
    %v2979 = vpack.c.b16 %v2123, %v2115
    %v2980 = vpack.c.b16 %v2132, %v2124
    %v2981 = vpack.c.b16 %v2133, %v2125
    %v2982 = vpack.c.b16 %v2134, %v2126
    %v2983 = vpack.c.b16 %v2135, %v2127
    %v2984 = vpack.c.b16 %v2136, %v2128
    %v2985 = vpack.c.b16 %v2137, %v2129
    %v2986 = vpack.c.b16 %v2138, %v2130
    %v2987 = vpack.c.b16 %v2139, %v2131
    %v2988 = vpack.c.b16 %v2148, %v2140
    %v2989 = vpack.c.b16 %v2149, %v2141
    %v2990 = vpack.c.b16 %v2150, %v2142
    %v2991 = vpack.c.b16 %v2151, %v2143
    %v2992 = vpack.c.b16 %v2152, %v2144
    %v2993 = vpack.c.b16 %v2153, %v2145
    %v2994 = vpack.c.b16 %v2154, %v2146
    %v2995 = vpack.c.b16 %v2155, %v2147
    %v2996 = vpack.c.b16 %v2164, %v2156
    %v2997 = vpack.c.b16 %v2165, %v2157
    %v2998 = vpack.c.b16 %v2166, %v2158
    %v2999 = vpack.c.b16 %v2167, %v2159
    %v3000 = vpack.c.b16 %v2168, %v2160
    %v3001 = vpack.c.b16 %v2169, %v2161
    %v3002 = vpack.c.b16 %v2170, %v2162
    %v3003 = vpack.c.b16 %v2171, %v2163
    %v3004 = vpack.c.b16 %v2180, %v2172
    %v3005 = vpack.c.b16 %v2181, %v2173
    %v3006 = vpack.c.b16 %v2182, %v2174
    %v3007 = vpack.c.b16 %v2183, %v2175
    %v3008 = vpack.c.b16 %v2184, %v2176
    %v3009 = vpack.c.b16 %v2185, %v2177
    %v3010 = vpack.c.b16 %v2186, %v2178
    %v3011 = vpack.c.b16 %v2187, %v2179
    %v3012 = vpack.c.b16 %v2196, %v2188
    %v3013 = vpack.c.b16 %v2197, %v2189
    %v3014 = vpack.c.b16 %v2198, %v2190
    %v3015 = vpack.c.b16 %v2199, %v2191
    %v3016 = vpack.c.b16 %v2200, %v2192
    %v3017 = vpack.c.b16 %v2201, %v2193
    %v3018 = vpack.c.b16 %v2202, %v2194
    %v3019 = vpack.c.b16 %v2203, %v2195
    %v3020 = vpack.c.b16 %v2212, %v2204
    %v3021 = vpack.c.b16 %v2213, %v2205
    %v3022 = vpack.c.b16 %v2214, %v2206
    %v3023 = vpack.c.b16 %v2215, %v2207
    %v3024 = vpack.c.b16 %v2216, %v2208
    %v3025 = vpack.c.b16 %v2217, %v2209
    %v3026 = vpack.c.b16 %v2218, %v2210
    %v3027 = vpack.c.b16 %v2219, %v2211
    %v3028 = vpack.c.b16 %v2228, %v2220
    %v3029 = vpack.c.b16 %v2229, %v2221
    %v3030 = vpack.c.b16 %v2230, %v2222
    %v3031 = vpack.c.b16 %v2231, %v2223
    %v3032 = vpack.c.b16 %v2232, %v2224
    %v3033 = vpack.c.b16 %v2233, %v2225
    %v3034 = vpack.c.b16 %v2234, %v2226
    %v3035 = vpack.c.b16 %v2235, %v2227
    %v3036 = vpack.c.b16 %v2244, %v2236
    %v3037 = vpack.c.b16 %v2245, %v2237
    %v3038 = vpack.c.b16 %v2246, %v2238
    %v3039 = vpack.c.b16 %v2247, %v2239
    %v3040 = vpack.c.b16 %v2248, %v2240
    %v3041 = vpack.c.b16 %v2249, %v2241
    %v3042 = vpack.c.b16 %v2250, %v2242
    %v3043 = vpack.c.b16 %v2251, %v2243
    %v3044 = vpack.c.b16 %v2260, %v2252
    %v3045 = vpack.c.b16 %v2261, %v2253
    %v3046 = vpack.c.b16 %v2262, %v2254
    %v3047 = vpack.c.b16 %v2263, %v2255
    %v3048 = vpack.c.b16 %v2264, %v2256
    %v3049 = vpack.c.b16 %v2265, %v2257
    %v3050 = vpack.c.b16 %v2266, %v2258
    %v3051 = vpack.c.b16 %v2267, %v2259
    %v3052 = vpack.c.b16 %v2276, %v2268
    %v3053 = vpack.c.b16 %v2277, %v2269
    %v3054 = vpack.c.b16 %v2278, %v2270
    %v3055 = vpack.c.b16 %v2279, %v2271
    %v3056 = vpack.c.b16 %v2280, %v2272
    %v3057 = vpack.c.b16 %v2281, %v2273
    %v3058 = vpack.c.b16 %v2282, %v2274
    %v3059 = vpack.c.b16 %v2283, %v2275
    %v3060 = vpack.c.b16 %v2292, %v2284
    %v3061 = vpack.c.b16 %v2293, %v2285
    %v3062 = vpack.c.b16 %v2294, %v2286
    %v3063 = vpack.c.b16 %v2295, %v2287
    %v3064 = vpack.c.b16 %v2296, %v2288
    %v3065 = vpack.c.b16 %v2297, %v2289
    %v3066 = vpack.c.b16 %v2298, %v2290
    %v3067 = vpack.c.b16 %v2299, %v2291
    %v3068 = vpack.c.b16 %v2308, %v2300
    %v3069 = vpack.c.b16 %v2309, %v2301
    %v3070 = vpack.c.b16 %v2310, %v2302
    %v3071 = vpack.c.b16 %v2311, %v2303
    %v3072 = vpack.c.b16 %v2312, %v2304
    %v3073 = vpack.c.b16 %v2313, %v2305
    %v3074 = vpack.c.b16 %v2314, %v2306
    %v3075 = vpack.c.b16 %v2315, %v2307
    %v3076 = vpack.c.b16 %v2324, %v2316
    %v3077 = vpack.c.b16 %v2325, %v2317
    %v3078 = vpack.c.b16 %v2326, %v2318
    %v3079 = vpack.c.b16 %v2327, %v2319
    %v3080 = vpack.c.b16 %v2328, %v2320
    %v3081 = vpack.c.b16 %v2329, %v2321
    %v3082 = vpack.c.b16 %v2330, %v2322
    %v3083 = vpack.c.b16 %v2331, %v2323
    %v3084 = vpack.c.b16 %v2340, %v2332
    %v3085 = vpack.c.b16 %v2341, %v2333
    %v3086 = vpack.c.b16 %v2342, %v2334
    %v3087 = vpack.c.b16 %v2343, %v2335
    %v3088 = vpack.c.b16 %v2344, %v2336
    %v3089 = vpack.c.b16 %v2345, %v2337
    %v3090 = vpack.c.b16 %v2346, %v2338
    %v3091 = vpack.c.b16 %v2347, %v2339
    %v3092 = vpack.c.b16 %v2356, %v2348
    %v3093 = vpack.c.b16 %v2357, %v2349
    %v3094 = vpack.c.b16 %v2358, %v2350
    %v3095 = vpack.c.b16 %v2359, %v2351
    %v3096 = vpack.c.b16 %v2360, %v2352
    %v3097 = vpack.c.b16 %v2361, %v2353
    %v3098 = vpack.c.b16 %v2362, %v2354
    %v3099 = vpack.c.b16 %v2363, %v2355
    %v3100 = vpack.c.b16 %v2372, %v2364
    %v3101 = vpack.c.b16 %v2373, %v2365
    %v3102 = vpack.c.b16 %v2374, %v2366
    %v3103 = vpack.c.b16 %v2375, %v2367
    %v3104 = vpack.c.b16 %v2376, %v2368
    %v3105 = vpack.c.b16 %v2377, %v2369
    %v3106 = vpack.c.b16 %v2378, %v2370
    %v3107 = vpack.c.b16 %v2379, %v2371
    %v3108 = vpack.c.b16 %v2388, %v2380
    %v3109 = vpack.c.b16 %v2389, %v2381
    %v3110 = vpack.c.b16 %v2390, %v2382
    %v3111 = vpack.c.b16 %v2391, %v2383
    %v3112 = vpack.c.b16 %v2392, %v2384
    %v3113 = vpack.c.b16 %v2393, %v2385
    %v3114 = vpack.c.b16 %v2394, %v2386
    %v3115 = vpack.c.b16 %v2395, %v2387
    %v3116 = vpack.c.b16 %v2404, %v2396
    %v3117 = vpack.c.b16 %v2405, %v2397
    %v3118 = vpack.c.b16 %v2406, %v2398
    %v3119 = vpack.c.b16 %v2407, %v2399
    %v3120 = vpack.c.b16 %v2408, %v2400
    %v3121 = vpack.c.b16 %v2409, %v2401
    %v3122 = vpack.c.b16 %v2410, %v2402
    %v3123 = vpack.c.b16 %v2411, %v2403
    %v3124 = vpack.c.b16 %v2420, %v2412
    %v3125 = vpack.c.b16 %v2421, %v2413
    %v3126 = vpack.c.b16 %v2422, %v2414
    %v3127 = vpack.c.b16 %v2423, %v2415
    %v3128 = vpack.c.b16 %v2424, %v2416
    %v3129 = vpack.c.b16 %v2425, %v2417
    %v3130 = vpack.c.b16 %v2426, %v2418
    %v3131 = vpack.c.b16 %v2427, %v2419
    %v3132 = vpack.c.b16 %v2436, %v2428
    %v3133 = vpack.c.b16 %v2437, %v2429
    %v3134 = vpack.c.b16 %v2438, %v2430
    %v3135 = vpack.c.b16 %v2439, %v2431
    %v3136 = vpack.c.b16 %v2440, %v2432
    %v3137 = vpack.c.b16 %v2441, %v2433
    %v3138 = vpack.c.b16 %v2442, %v2434
    %v3139 = vpack.c.b16 %v2443, %v2435
    %v3140 = vpack.c.b16 %v2452, %v2444
    %v3141 = vpack.c.b16 %v2453, %v2445
    %v3142 = vpack.c.b16 %v2454, %v2446
    %v3143 = vpack.c.b16 %v2455, %v2447
    %v3144 = vpack.c.b16 %v2456, %v2448
    %v3145 = vpack.c.b16 %v2457, %v2449
    %v3146 = vpack.c.b16 %v2458, %v2450
    %v3147 = vpack.c.b16 %v2459, %v2451
    %v3148 = vpack.c.b16 %v2468, %v2460
    %v3149 = vpack.c.b16 %v2469, %v2461
    %v3150 = vpack.c.b16 %v2470, %v2462
    %v3151 = vpack.c.b16 %v2471, %v2463
    %v3152 = vpack.c.b16 %v2472, %v2464
    %v3153 = vpack.c.b16 %v2473, %v2465
    %v3154 = vpack.c.b16 %v2474, %v2466
    %v3155 = vpack.c.b16 %v2475, %v2467
    %v3156 = vpack.c.b16 %v2484, %v2476
    %v3157 = vpack.c.b16 %v2485, %v2477
    %v3158 = vpack.c.b16 %v2486, %v2478
    %v3159 = vpack.c.b16 %v2487, %v2479
    %v3160 = vpack.c.b16 %v2488, %v2480
    %v3161 = vpack.c.b16 %v2489, %v2481
    %v3162 = vpack.c.b16 %v2490, %v2482
    %v3163 = vpack.c.b16 %v2491, %v2483
    %v3164 = vpack.c.b16 %v2500, %v2492
    %v3165 = vpack.c.b16 %v2501, %v2493
    %v3166 = vpack.c.b16 %v2502, %v2494
    %v3167 = vpack.c.b16 %v2503, %v2495
    %v3168 = vpack.c.b16 %v2504, %v2496
    %v3169 = vpack.c.b16 %v2505, %v2497
    %v3170 = vpack.c.b16 %v2506, %v2498
    %v3171 = vpack.c.b16 %v2507, %v2499
    %v3172 = vpack.c.b16 %v2516, %v2508
    %v3173 = vpack.c.b16 %v2517, %v2509
    %v3174 = vpack.c.b16 %v2518, %v2510
    %v3175 = vpack.c.b16 %v2519, %v2511
    %v3176 = vpack.c.b16 %v2520, %v2512
    %v3177 = vpack.c.b16 %v2521, %v2513
    %v3178 = vpack.c.b16 %v2522, %v2514
    %v3179 = vpack.c.b16 %v2523, %v2515
    %v3180 = vpack.c.b16 %v2532, %v2524
    %v3181 = vpack.c.b16 %v2533, %v2525
    %v3182 = vpack.c.b16 %v2534, %v2526
    %v3183 = vpack.c.b16 %v2535, %v2527
    %v3184 = vpack.c.b16 %v2536, %v2528
    %v3185 = vpack.c.b16 %v2537, %v2529
    %v3186 = vpack.c.b16 %v2538, %v2530
    %v3187 = vpack.c.b16 %v2539, %v2531
    %v3188 = vpack.c.b16 %v2548, %v2540
    %v3189 = vpack.c.b16 %v2549, %v2541
    %v3190 = vpack.c.b16 %v2550, %v2542
    %v3191 = vpack.c.b16 %v2551, %v2543
    %v3192 = vpack.c.b16 %v2552, %v2544
    %v3193 = vpack.c.b16 %v2553, %v2545
    %v3194 = vpack.c.b16 %v2554, %v2546
    %v3195 = vpack.c.b16 %v2555, %v2547
    %v3196 = vpack.c.b16 %v2564, %v2556
    %v3197 = vpack.c.b16 %v2565, %v2557
    %v3198 = vpack.c.b16 %v2566, %v2558
    %v3199 = vpack.c.b16 %v2567, %v2559
    %v3200 = vpack.c.b16 %v2568, %v2560
    %v3201 = vpack.c.b16 %v2569, %v2561
    %v3202 = vpack.c.b16 %v2570, %v2562
    %v3203 = vpack.c.b16 %v2571, %v2563
    %v3204 = vpack.c.b16 %v2580, %v2572
    %v3205 = vpack.c.b16 %v2581, %v2573
    %v3206 = vpack.c.b16 %v2582, %v2574
    %v3207 = vpack.c.b16 %v2583, %v2575
    %v3208 = vpack.c.b16 %v2584, %v2576
    %v3209 = vpack.c.b16 %v2585, %v2577
    %v3210 = vpack.c.b16 %v2586, %v2578
    %v3211 = vpack.c.b16 %v2587, %v2579
    %v3212 = vpack.c.b16 %v2596, %v2588
    %v3213 = vpack.c.b16 %v2597, %v2589
    %v3214 = vpack.c.b16 %v2598, %v2590
    %v3215 = vpack.c.b16 %v2599, %v2591
    %v3216 = vpack.c.b16 %v2600, %v2592
    %v3217 = vpack.c.b16 %v2601, %v2593
    %v3218 = vpack.c.b16 %v2602, %v2594
    %v3219 = vpack.c.b16 %v2603, %v2595
    %v3220 = vpack.c.b16 %v2612, %v2604
    %v3221 = vpack.c.b16 %v2613, %v2605
    %v3222 = vpack.c.b16 %v2614, %v2606
    %v3223 = vpack.c.b16 %v2615, %v2607
    %v3224 = vpack.c.b16 %v2616, %v2608
    %v3225 = vpack.c.b16 %v2617, %v2609
    %v3226 = vpack.c.b16 %v2618, %v2610
    %v3227 = vpack.c.b16 %v2619, %v2611
    %v3228 = vpack.c.b16 %v2628, %v2620
    %v3229 = vpack.c.b16 %v2629, %v2621
    %v3230 = vpack.c.b16 %v2630, %v2622
    %v3231 = vpack.c.b16 %v2631, %v2623
    %v3232 = vpack.c.b16 %v2632, %v2624
    %v3233 = vpack.c.b16 %v2633, %v2625
    %v3234 = vpack.c.b16 %v2634, %v2626
    %v3235 = vpack.c.b16 %v2635, %v2627
    %v3236 = vpack.c.b16 %v2644, %v2636
    %v3237 = vpack.c.b16 %v2645, %v2637
    %v3238 = vpack.c.b16 %v2646, %v2638
    %v3239 = vpack.c.b16 %v2647, %v2639
    %v3240 = vpack.c.b16 %v2648, %v2640
    %v3241 = vpack.c.b16 %v2649, %v2641
    %v3242 = vpack.c.b16 %v2650, %v2642
    %v3243 = vpack.c.b16 %v2651, %v2643
    %v3244 = vpack.c.b16 %v2660, %v2652
    %v3245 = vpack.c.b16 %v2661, %v2653
    %v3246 = vpack.c.b16 %v2662, %v2654
    %v3247 = vpack.c.b16 %v2663, %v2655
    %v3248 = vpack.c.b16 %v2664, %v2656
    %v3249 = vpack.c.b16 %v2665, %v2657
    %v3250 = vpack.c.b16 %v2666, %v2658
    %v3251 = vpack.c.b16 %v2667, %v2659
    %v3252 = vpack.c.b16 %v2676, %v2668
    %v3253 = vpack.c.b16 %v2677, %v2669
    %v3254 = vpack.c.b16 %v2678, %v2670
    %v3255 = vpack.c.b16 %v2679, %v2671
    %v3256 = vpack.c.b16 %v2680, %v2672
    %v3257 = vpack.c.b16 %v2681, %v2673
    %v3258 = vpack.c.b16 %v2682, %v2674
    %v3259 = vpack.c.b16 %v2683, %v2675
    %v3260 = vpack.c.b16 %v2692, %v2684
    %v3261 = vpack.c.b16 %v2693, %v2685
    %v3262 = vpack.c.b16 %v2694, %v2686
    %v3263 = vpack.c.b16 %v2695, %v2687
    %v3264 = vpack.c.b16 %v2696, %v2688
    %v3265 = vpack.c.b16 %v2697, %v2689
    %v3266 = vpack.c.b16 %v2698, %v2690
    %v3267 = vpack.c.b16 %v2699, %v2691
    %v3268 = vpack.c.b16 %v2708, %v2700
    %v3269 = vpack.c.b16 %v2709, %v2701
    %v3270 = vpack.c.b16 %v2710, %v2702
    %v3271 = vpack.c.b16 %v2711, %v2703
    %v3272 = vpack.c.b16 %v2712, %v2704
    %v3273 = vpack.c.b16 %v2713, %v2705
    %v3274 = vpack.c.b16 %v2714, %v2706
    %v3275 = vpack.c.b16 %v2715, %v2707
    %v3276 = vpack.c.b16 %v2724, %v2716
    %v3277 = vpack.c.b16 %v2725, %v2717
    %v3278 = vpack.c.b16 %v2726, %v2718
    %v3279 = vpack.c.b16 %v2727, %v2719
    %v3280 = vpack.c.b16 %v2728, %v2720
    %v3281 = vpack.c.b16 %v2729, %v2721
    %v3282 = vpack.c.b16 %v2730, %v2722
    %v3283 = vpack.c.b16 %v2731, %v2723
    %v3284 = vpack.c.b16 %v2740, %v2732
    %v3285 = vpack.c.b16 %v2741, %v2733
    %v3286 = vpack.c.b16 %v2742, %v2734
    %v3287 = vpack.c.b16 %v2743, %v2735
    %v3288 = vpack.c.b16 %v2744, %v2736
    %v3289 = vpack.c.b16 %v2745, %v2737
    %v3290 = vpack.c.b16 %v2746, %v2738
    %v3291 = vpack.c.b16 %v2747, %v2739
    %v3292 = vpack.c.b16 %v2756, %v2748
    %v3293 = vpack.c.b16 %v2757, %v2749
    %v3294 = vpack.c.b16 %v2758, %v2750
    %v3295 = vpack.c.b16 %v2759, %v2751
    %v3296 = vpack.c.b16 %v2760, %v2752
    %v3297 = vpack.c.b16 %v2761, %v2753
    %v3298 = vpack.c.b16 %v2762, %v2754
    %v3299 = vpack.c.b16 %v2763, %v2755
    %v3300 = vpack.c.b16 %v2772, %v2764
    %v3301 = vpack.c.b16 %v2773, %v2765
    %v3302 = vpack.c.b16 %v2774, %v2766
    %v3303 = vpack.c.b16 %v2775, %v2767
    %v3304 = vpack.c.b16 %v2776, %v2768
    %v3305 = vpack.c.b16 %v2777, %v2769
    %v3306 = vpack.c.b16 %v2778, %v2770
    %v3307 = vpack.c.b16 %v2779, %v2771
    %v3308 = vpack.c.b16 %v2788, %v2780
    %v3309 = vpack.c.b16 %v2789, %v2781
    %v3310 = vpack.c.b16 %v2790, %v2782
    %v3311 = vpack.c.b16 %v2791, %v2783
    %v3312 = vpack.c.b16 %v2792, %v2784
    %v3313 = vpack.c.b16 %v2793, %v2785
    %v3314 = vpack.c.b16 %v2794, %v2786
    %v3315 = vpack.c.b16 %v2795, %v2787
    %v3316 = vpack.c.b16 %v2804, %v2796
    %v3317 = vpack.c.b16 %v2805, %v2797
    %v3318 = vpack.c.b16 %v2806, %v2798
    %v3319 = vpack.c.b16 %v2807, %v2799
    %v3320 = vpack.c.b16 %v2808, %v2800
    %v3321 = vpack.c.b16 %v2809, %v2801
    %v3322 = vpack.c.b16 %v2810, %v2802
    %v3323 = vpack.c.b16 %v2811, %v2803
    %3836 = vmatprep.subr.bf16.mxu0 %v2869
    %3837 = vmatpush1.bf16.msra.mxu0 %v2868
    %3838 = vmatprep.subr.bf16.mxu0 %v2861
    %3839 = vmatpush1.bf16.msra.mxu0 %v2860
    %3840 = vmatprep.subr.bf16.mxu0 %v2853
    %3841 = vmatpush1.bf16.msra.mxu0 %v2852
    %3842 = vmatprep.subr.bf16.mxu0 %v2845
    %3843 = vmatpush1.bf16.msra.mxu0 %v2844
    %3844 = vmatprep.subr.bf16.mxu0 %v2837
    %3845 = vmatpush1.bf16.msra.mxu0 %v2836
    %3846 = vmatprep.subr.bf16.mxu0 %v2829
    %3847 = vmatpush1.bf16.msra.mxu0 %v2828
    %3848 = vmatprep.subr.bf16.mxu0 %v2821
    %3849 = vmatpush1.bf16.msra.mxu0 %v2820
    %3850 = vmatprep.subr.bf16.mxu0 %v2813
    %3851 = vmatpush1.bf16.msra.mxu0 %v2812
    %3852 = vmatprep.subr.bf16.mxu0 %v2933
    %3853 = vmatpush2.bf16.msra.mxu0 %v2932
    %3854 = vmatprep.subr.bf16.mxu0 %v2925
    %3855 = vmatpush2.bf16.msra.mxu0 %v2924
    %3856 = vmatprep.subr.bf16.mxu0 %v2917
    %3857 = vmatpush2.bf16.msra.mxu0 %v2916
    %3858 = vmatprep.subr.bf16.mxu0 %v2909
    %3859 = vmatpush2.bf16.msra.mxu0 %v2908
    %3860 = vmatprep.subr.bf16.mxu0 %v2901
    %3861 = vmatpush2.bf16.msra.mxu0 %v2900
    %3862 = vmatprep.subr.bf16.mxu0 %v2893
    %3863 = vmatpush2.bf16.msra.mxu0 %v2892
    %3864 = vmatprep.subr.bf16.mxu0 %v2885
    %3865 = vmatpush2.bf16.msra.mxu0 %v2884
    %3866 = vmatprep.subr.bf16.mxu0 %v2877
    %3867 = vmatpush2.bf16.msra.mxu0 %v2876
    %3868 = vmatprep.mubr.bf16.mxu0 %v715
    %3869 = vmatmul.mubr.bf16.gmra.mxu0 %v714
    %v3870 = vpop.f32.mrf.mxu0
    %v3871 = vadd.f32 %v1239, %v3870
    %v3872 = vpop.f32.mrf.mxu0
    %v3873 = vadd.f32 %v1243, %v3872
    %v3874 = vpop.f32.mrf.mxu0
    %v3875 = vpop.f32.mrf.mxu0
    %3876 = vdwg.mxu0
    %3877 = vmatprep.subr.bf16.mxu0 %v2997
    %3878 = vmatpush1.bf16.msra.mxu0 %v2996
    %3879 = vmatprep.subr.bf16.mxu0 %v2989
    %3880 = vmatpush1.bf16.msra.mxu0 %v2988
    %3881 = vmatprep.subr.bf16.mxu0 %v2981
    %3882 = vmatpush1.bf16.msra.mxu0 %v2980
    %3883 = vmatprep.subr.bf16.mxu0 %v2973
    %3884 = vmatpush1.bf16.msra.mxu0 %v2972
    %3885 = vmatprep.subr.bf16.mxu0 %v2965
    %3886 = vmatpush1.bf16.msra.mxu0 %v2964
    %3887 = vmatprep.subr.bf16.mxu0 %v2957
    %3888 = vmatpush1.bf16.msra.mxu0 %v2956
    %3889 = vmatprep.subr.bf16.mxu0 %v2949
    %3890 = vmatpush1.bf16.msra.mxu0 %v2948
    %3891 = vmatprep.subr.bf16.mxu0 %v2941
    %3892 = vmatpush1.bf16.msra.mxu0 %v2940
    %3893 = vmatprep.subr.bf16.mxu0 %v3061
    %3894 = vmatpush2.bf16.msra.mxu0 %v3060
    %3895 = vmatprep.subr.bf16.mxu0 %v3053
    %3896 = vmatpush2.bf16.msra.mxu0 %v3052
    %3897 = vmatprep.subr.bf16.mxu0 %v3045
    %3898 = vmatpush2.bf16.msra.mxu0 %v3044
    %3899 = vmatprep.subr.bf16.mxu0 %v3037
    %3900 = vmatpush2.bf16.msra.mxu0 %v3036
    %3901 = vmatprep.subr.bf16.mxu0 %v3029
    %3902 = vmatpush2.bf16.msra.mxu0 %v3028
    %3903 = vmatprep.subr.bf16.mxu0 %v3021
    %3904 = vmatpush2.bf16.msra.mxu0 %v3020
    %3905 = vmatprep.subr.bf16.mxu0 %v3013
    %3906 = vmatpush2.bf16.msra.mxu0 %v3012
    %3907 = vmatprep.subr.bf16.mxu0 %v3005
    %3908 = vmatpush2.bf16.msra.mxu0 %v3004
    %3909 = vmatprep.mubr.bf16.mxu0 %v717
    %3910 = vmatmul.mubr.bf16.gmra.mxu0 %v716
    %v3911 = vpop.f32.mrf.mxu0
    %v3912 = vadd.f32 %v3871, %v3911
    %v3913 = vpop.f32.mrf.mxu0
    %v3914 = vadd.f32 %v3873, %v3913
    %v3915 = vpop.f32.mrf.mxu0
    %v3916 = vpop.f32.mrf.mxu0
    %3917 = vdwg.mxu0
    %3918 = vmatprep.subr.bf16.mxu0 %v3125
    %3919 = vmatpush1.bf16.msra.mxu0 %v3124
    %3920 = vmatprep.subr.bf16.mxu0 %v3117
    %3921 = vmatpush1.bf16.msra.mxu0 %v3116
    %3922 = vmatprep.subr.bf16.mxu0 %v3109
    %3923 = vmatpush1.bf16.msra.mxu0 %v3108
    %3924 = vmatprep.subr.bf16.mxu0 %v3101
    %3925 = vmatpush1.bf16.msra.mxu0 %v3100
    %3926 = vmatprep.subr.bf16.mxu0 %v3093
    %3927 = vmatpush1.bf16.msra.mxu0 %v3092
    %3928 = vmatprep.subr.bf16.mxu0 %v3085
    %3929 = vmatpush1.bf16.msra.mxu0 %v3084
    %3930 = vmatprep.subr.bf16.mxu0 %v3077
    %3931 = vmatpush1.bf16.msra.mxu0 %v3076
    %3932 = vmatprep.subr.bf16.mxu0 %v3069
    %3933 = vmatpush1.bf16.msra.mxu0 %v3068
    %3934 = vmatprep.subr.bf16.mxu0 %v3189
    %3935 = vmatpush2.bf16.msra.mxu0 %v3188
    %3936 = vmatprep.subr.bf16.mxu0 %v3181
    %3937 = vmatpush2.bf16.msra.mxu0 %v3180
    %3938 = vmatprep.subr.bf16.mxu0 %v3173
    %3939 = vmatpush2.bf16.msra.mxu0 %v3172
    %3940 = vmatprep.subr.bf16.mxu0 %v3165
    %3941 = vmatpush2.bf16.msra.mxu0 %v3164
    %3942 = vmatprep.subr.bf16.mxu0 %v3157
    %3943 = vmatpush2.bf16.msra.mxu0 %v3156
    %3944 = vmatprep.subr.bf16.mxu0 %v3149
    %3945 = vmatpush2.bf16.msra.mxu0 %v3148
    %3946 = vmatprep.subr.bf16.mxu0 %v3141
    %3947 = vmatpush2.bf16.msra.mxu0 %v3140
    %3948 = vmatprep.subr.bf16.mxu0 %v3133
    %3949 = vmatpush2.bf16.msra.mxu0 %v3132
    %3950 = vmatprep.mubr.bf16.mxu0 %v719
    %3951 = vmatmul.mubr.bf16.gmra.mxu0 %v718
    %v3952 = vpop.f32.mrf.mxu0
    %v3953 = vadd.f32 %v3912, %v3952
    %v3954 = vpop.f32.mrf.mxu0
    %v3955 = vadd.f32 %v3914, %v3954
    %v3956 = vpop.f32.mrf.mxu0
    %v3957 = vpop.f32.mrf.mxu0
    %3958 = vdwg.mxu0
    %3959 = vmatprep.subr.bf16.mxu0 %v3253
    %3960 = vmatpush1.bf16.msra.mxu0 %v3252
    %3961 = vmatprep.subr.bf16.mxu0 %v3245
    %3962 = vmatpush1.bf16.msra.mxu0 %v3244
    %3963 = vmatprep.subr.bf16.mxu0 %v3237
    %3964 = vmatpush1.bf16.msra.mxu0 %v3236
    %3965 = vmatprep.subr.bf16.mxu0 %v3229
    %3966 = vmatpush1.bf16.msra.mxu0 %v3228
    %3967 = vmatprep.subr.bf16.mxu0 %v3221
    %3968 = vmatpush1.bf16.msra.mxu0 %v3220
    %3969 = vmatprep.subr.bf16.mxu0 %v3213
    %3970 = vmatpush1.bf16.msra.mxu0 %v3212
    %3971 = vmatprep.subr.bf16.mxu0 %v3205
    %3972 = vmatpush1.bf16.msra.mxu0 %v3204
    %3973 = vmatprep.subr.bf16.mxu0 %v3197
    %3974 = vmatpush1.bf16.msra.mxu0 %v3196
    %3975 = vmatprep.subr.bf16.mxu0 %v3317
    %3976 = vmatpush2.bf16.msra.mxu0 %v3316
    %3977 = vmatprep.subr.bf16.mxu0 %v3309
    %3978 = vmatpush2.bf16.msra.mxu0 %v3308
    %3979 = vmatprep.subr.bf16.mxu0 %v3301
    %3980 = vmatpush2.bf16.msra.mxu0 %v3300
    %3981 = vmatprep.subr.bf16.mxu0 %v3293
    %3982 = vmatpush2.bf16.msra.mxu0 %v3292
    %3983 = vmatprep.subr.bf16.mxu0 %v3285
    %3984 = vmatpush2.bf16.msra.mxu0 %v3284
    %3985 = vmatprep.subr.bf16.mxu0 %v3277
    %3986 = vmatpush2.bf16.msra.mxu0 %v3276
    %3987 = vmatprep.subr.bf16.mxu0 %v3269
    %3988 = vmatpush2.bf16.msra.mxu0 %v3268
    %3989 = vmatprep.subr.bf16.mxu0 %v3261
    %3990 = vmatpush2.bf16.msra.mxu0 %v3260
    %3991 = vmatprep.mubr.bf16.mxu0 %v721
    %3992 = vmatmul.mubr.bf16.gmra.mxu0 %v720
    %v3993 = vpop.f32.mrf.mxu0
    %v3994 = vadd.f32 %v3953, %v3993
    %v3995 = vpop.f32.mrf.mxu0
    %v3996 = vadd.f32 %v3955, %v3995
    %v3997 = vpop.f32.mrf.mxu0
    %v3998 = vpop.f32.mrf.mxu0
    %3999 = vdwg.mxu0
    %4000 = vmatprep.subr.bf16.mxu0 %v2871
    %4001 = vmatpush1.bf16.msra.mxu0 %v2870
    %4002 = vmatprep.subr.bf16.mxu0 %v2863
    %4003 = vmatpush1.bf16.msra.mxu0 %v2862
    %4004 = vmatprep.subr.bf16.mxu0 %v2855
    %4005 = vmatpush1.bf16.msra.mxu0 %v2854
    %4006 = vmatprep.subr.bf16.mxu0 %v2847
    %4007 = vmatpush1.bf16.msra.mxu0 %v2846
    %4008 = vmatprep.subr.bf16.mxu0 %v2839
    %4009 = vmatpush1.bf16.msra.mxu0 %v2838
    %4010 = vmatprep.subr.bf16.mxu0 %v2831
    %4011 = vmatpush1.bf16.msra.mxu0 %v2830
    %4012 = vmatprep.subr.bf16.mxu0 %v2823
    %4013 = vmatpush1.bf16.msra.mxu0 %v2822
    %4014 = vmatprep.subr.bf16.mxu0 %v2815
    %4015 = vmatpush1.bf16.msra.mxu0 %v2814
    %4016 = vmatprep.subr.bf16.mxu0 %v2935
    %4017 = vmatpush2.bf16.msra.mxu0 %v2934
    %4018 = vmatprep.subr.bf16.mxu0 %v2927
    %4019 = vmatpush2.bf16.msra.mxu0 %v2926
    %4020 = vmatprep.subr.bf16.mxu0 %v2919
    %4021 = vmatpush2.bf16.msra.mxu0 %v2918
    %4022 = vmatprep.subr.bf16.mxu0 %v2911
    %4023 = vmatpush2.bf16.msra.mxu0 %v2910
    %4024 = vmatprep.subr.bf16.mxu0 %v2903
    %4025 = vmatpush2.bf16.msra.mxu0 %v2902
    %4026 = vmatprep.subr.bf16.mxu0 %v2895
    %4027 = vmatpush2.bf16.msra.mxu0 %v2894
    %4028 = vmatprep.subr.bf16.mxu0 %v2887
    %4029 = vmatpush2.bf16.msra.mxu0 %v2886
    %4030 = vmatprep.subr.bf16.mxu0 %v2879
    %4031 = vmatpush2.bf16.msra.mxu0 %v2878
    %4032 = vmatprep.mubr.bf16.mxu0 %v715
    %4033 = vmatmul.mubr.bf16.gmra.mxu0 %v714
    %v4034 = vpop.f32.mrf.mxu0
    %v4035 = vadd.f32 %v1247, %v4034
    %v4036 = vpop.f32.mrf.mxu0
    %v4037 = vadd.f32 %v1251, %v4036
    %v4038 = vpop.f32.mrf.mxu0
    %v4039 = vpop.f32.mrf.mxu0
    %4040 = vdwg.mxu0
    %4041 = vmatprep.subr.bf16.mxu0 %v2999
    %4042 = vmatpush1.bf16.msra.mxu0 %v2998
    %4043 = vmatprep.subr.bf16.mxu0 %v2991
    %4044 = vmatpush1.bf16.msra.mxu0 %v2990
    %4045 = vmatprep.subr.bf16.mxu0 %v2983
    %4046 = vmatpush1.bf16.msra.mxu0 %v2982
    %4047 = vmatprep.subr.bf16.mxu0 %v2975
    %4048 = vmatpush1.bf16.msra.mxu0 %v2974
    %4049 = vmatprep.subr.bf16.mxu0 %v2967
    %4050 = vmatpush1.bf16.msra.mxu0 %v2966
    %4051 = vmatprep.subr.bf16.mxu0 %v2959
    %4052 = vmatpush1.bf16.msra.mxu0 %v2958
    %4053 = vmatprep.subr.bf16.mxu0 %v2951
    %4054 = vmatpush1.bf16.msra.mxu0 %v2950
    %4055 = vmatprep.subr.bf16.mxu0 %v2943
    %4056 = vmatpush1.bf16.msra.mxu0 %v2942
    %4057 = vmatprep.subr.bf16.mxu0 %v3063
    %4058 = vmatpush2.bf16.msra.mxu0 %v3062
    %4059 = vmatprep.subr.bf16.mxu0 %v3055
    %4060 = vmatpush2.bf16.msra.mxu0 %v3054
    %4061 = vmatprep.subr.bf16.mxu0 %v3047
    %4062 = vmatpush2.bf16.msra.mxu0 %v3046
    %4063 = vmatprep.subr.bf16.mxu0 %v3039
    %4064 = vmatpush2.bf16.msra.mxu0 %v3038
    %4065 = vmatprep.subr.bf16.mxu0 %v3031
    %4066 = vmatpush2.bf16.msra.mxu0 %v3030
    %4067 = vmatprep.subr.bf16.mxu0 %v3023
    %4068 = vmatpush2.bf16.msra.mxu0 %v3022
    %4069 = vmatprep.subr.bf16.mxu0 %v3015
    %4070 = vmatpush2.bf16.msra.mxu0 %v3014
    %4071 = vmatprep.subr.bf16.mxu0 %v3007
    %4072 = vmatpush2.bf16.msra.mxu0 %v3006
    %4073 = vmatprep.mubr.bf16.mxu0 %v717
    %4074 = vmatmul.mubr.bf16.gmra.mxu0 %v716
    %v4075 = vpop.f32.mrf.mxu0
    %v4076 = vadd.f32 %v4035, %v4075
    %v4077 = vpop.f32.mrf.mxu0
    %v4078 = vadd.f32 %v4037, %v4077
    %v4079 = vpop.f32.mrf.mxu0
    %v4080 = vpop.f32.mrf.mxu0
    %4081 = vdwg.mxu0
    %4082 = vmatprep.subr.bf16.mxu0 %v3127
    %4083 = vmatpush1.bf16.msra.mxu0 %v3126
    %4084 = vmatprep.subr.bf16.mxu0 %v3119
    %4085 = vmatpush1.bf16.msra.mxu0 %v3118
    %4086 = vmatprep.subr.bf16.mxu0 %v3111
    %4087 = vmatpush1.bf16.msra.mxu0 %v3110
    %4088 = vmatprep.subr.bf16.mxu0 %v3103
    %4089 = vmatpush1.bf16.msra.mxu0 %v3102
    %4090 = vmatprep.subr.bf16.mxu0 %v3095
    %4091 = vmatpush1.bf16.msra.mxu0 %v3094
    %4092 = vmatprep.subr.bf16.mxu0 %v3087
    %4093 = vmatpush1.bf16.msra.mxu0 %v3086
    %4094 = vmatprep.subr.bf16.mxu0 %v3079
    %4095 = vmatpush1.bf16.msra.mxu0 %v3078
    %4096 = vmatprep.subr.bf16.mxu0 %v3071
    %4097 = vmatpush1.bf16.msra.mxu0 %v3070
    %4098 = vmatprep.subr.bf16.mxu0 %v3191
    %4099 = vmatpush2.bf16.msra.mxu0 %v3190
    %4100 = vmatprep.subr.bf16.mxu0 %v3183
    %4101 = vmatpush2.bf16.msra.mxu0 %v3182
    %4102 = vmatprep.subr.bf16.mxu0 %v3175
    %4103 = vmatpush2.bf16.msra.mxu0 %v3174
    %4104 = vmatprep.subr.bf16.mxu0 %v3167
    %4105 = vmatpush2.bf16.msra.mxu0 %v3166
    %4106 = vmatprep.subr.bf16.mxu0 %v3159
    %4107 = vmatpush2.bf16.msra.mxu0 %v3158
    %4108 = vmatprep.subr.bf16.mxu0 %v3151
    %4109 = vmatpush2.bf16.msra.mxu0 %v3150
    %4110 = vmatprep.subr.bf16.mxu0 %v3143
    %4111 = vmatpush2.bf16.msra.mxu0 %v3142
    %4112 = vmatprep.subr.bf16.mxu0 %v3135
    %4113 = vmatpush2.bf16.msra.mxu0 %v3134
    %4114 = vmatprep.mubr.bf16.mxu0 %v719
    %4115 = vmatmul.mubr.bf16.gmra.mxu0 %v718
    %v4116 = vpop.f32.mrf.mxu0
    %v4117 = vadd.f32 %v4076, %v4116
    %v4118 = vpop.f32.mrf.mxu0
    %v4119 = vadd.f32 %v4078, %v4118
    %v4120 = vpop.f32.mrf.mxu0
    %v4121 = vpop.f32.mrf.mxu0
    %4122 = vdwg.mxu0
    %4123 = vmatprep.subr.bf16.mxu0 %v3255
    %4124 = vmatpush1.bf16.msra.mxu0 %v3254
    %4125 = vmatprep.subr.bf16.mxu0 %v3247
    %4126 = vmatpush1.bf16.msra.mxu0 %v3246
    %4127 = vmatprep.subr.bf16.mxu0 %v3239
    %4128 = vmatpush1.bf16.msra.mxu0 %v3238
    %4129 = vmatprep.subr.bf16.mxu0 %v3231
    %4130 = vmatpush1.bf16.msra.mxu0 %v3230
    %4131 = vmatprep.subr.bf16.mxu0 %v3223
    %4132 = vmatpush1.bf16.msra.mxu0 %v3222
    %4133 = vmatprep.subr.bf16.mxu0 %v3215
    %4134 = vmatpush1.bf16.msra.mxu0 %v3214
    %4135 = vmatprep.subr.bf16.mxu0 %v3207
    %4136 = vmatpush1.bf16.msra.mxu0 %v3206
    %4137 = vmatprep.subr.bf16.mxu0 %v3199
    %4138 = vmatpush1.bf16.msra.mxu0 %v3198
    %4139 = vmatprep.subr.bf16.mxu0 %v3319
    %4140 = vmatpush2.bf16.msra.mxu0 %v3318
    %4141 = vmatprep.subr.bf16.mxu0 %v3311
    %4142 = vmatpush2.bf16.msra.mxu0 %v3310
    %4143 = vmatprep.subr.bf16.mxu0 %v3303
    %4144 = vmatpush2.bf16.msra.mxu0 %v3302
    %4145 = vmatprep.subr.bf16.mxu0 %v3295
    %4146 = vmatpush2.bf16.msra.mxu0 %v3294
    %4147 = vmatprep.subr.bf16.mxu0 %v3287
    %4148 = vmatpush2.bf16.msra.mxu0 %v3286
    %4149 = vmatprep.subr.bf16.mxu0 %v3279
    %4150 = vmatpush2.bf16.msra.mxu0 %v3278
    %4151 = vmatprep.subr.bf16.mxu0 %v3271
    %4152 = vmatpush2.bf16.msra.mxu0 %v3270
    %4153 = vmatprep.subr.bf16.mxu0 %v3263
    %4154 = vmatpush2.bf16.msra.mxu0 %v3262
    %4155 = vmatprep.mubr.bf16.mxu0 %v721
    %4156 = vmatmul.mubr.bf16.gmra.mxu0 %v720
    %v4157 = vpop.f32.mrf.mxu0
    %v4158 = vadd.f32 %v4117, %v4157
    %v4159 = vpop.f32.mrf.mxu0
    %v4160 = vadd.f32 %v4119, %v4159
    %v4161 = vpop.f32.mrf.mxu0
    %v4162 = vpop.f32.mrf.mxu0
    %4163 = vdwg.mxu0
    %4164 = vmatprep.subr.bf16.mxu0 %v2873
    %4165 = vmatpush1.bf16.msra.mxu0 %v2872
    %4166 = vmatprep.subr.bf16.mxu0 %v2865
    %4167 = vmatpush1.bf16.msra.mxu0 %v2864
    %4168 = vmatprep.subr.bf16.mxu0 %v2857
    %4169 = vmatpush1.bf16.msra.mxu0 %v2856
    %4170 = vmatprep.subr.bf16.mxu0 %v2849
    %4171 = vmatpush1.bf16.msra.mxu0 %v2848
    %4172 = vmatprep.subr.bf16.mxu0 %v2841
    %4173 = vmatpush1.bf16.msra.mxu0 %v2840
    %4174 = vmatprep.subr.bf16.mxu0 %v2833
    %4175 = vmatpush1.bf16.msra.mxu0 %v2832
    %4176 = vmatprep.subr.bf16.mxu0 %v2825
    %4177 = vmatpush1.bf16.msra.mxu0 %v2824
    %4178 = vmatprep.subr.bf16.mxu0 %v2817
    %4179 = vmatpush1.bf16.msra.mxu0 %v2816
    %4180 = vmatprep.subr.bf16.mxu0 %v2937
    %4181 = vmatpush2.bf16.msra.mxu0 %v2936
    %4182 = vmatprep.subr.bf16.mxu0 %v2929
    %4183 = vmatpush2.bf16.msra.mxu0 %v2928
    %4184 = vmatprep.subr.bf16.mxu0 %v2921
    %4185 = vmatpush2.bf16.msra.mxu0 %v2920
    %4186 = vmatprep.subr.bf16.mxu0 %v2913
    %4187 = vmatpush2.bf16.msra.mxu0 %v2912
    %4188 = vmatprep.subr.bf16.mxu0 %v2905
    %4189 = vmatpush2.bf16.msra.mxu0 %v2904
    %4190 = vmatprep.subr.bf16.mxu0 %v2897
    %4191 = vmatpush2.bf16.msra.mxu0 %v2896
    %4192 = vmatprep.subr.bf16.mxu0 %v2889
    %4193 = vmatpush2.bf16.msra.mxu0 %v2888
    %4194 = vmatprep.subr.bf16.mxu0 %v2881
    %4195 = vmatpush2.bf16.msra.mxu0 %v2880
    %4196 = vmatprep.mubr.bf16.mxu0 %v715
    %4197 = vmatmul.mubr.bf16.gmra.mxu0 %v714
    %v4198 = vpop.f32.mrf.mxu0
    %v4199 = vadd.f32 %v1255, %v4198
    %v4200 = vpop.f32.mrf.mxu0
    %v4201 = vadd.f32 %v1259, %v4200
    %v4202 = vpop.f32.mrf.mxu0
    %v4203 = vpop.f32.mrf.mxu0
    %4204 = vdwg.mxu0
    %4205 = vmatprep.subr.bf16.mxu0 %v3001
    %4206 = vmatpush1.bf16.msra.mxu0 %v3000
    %4207 = vmatprep.subr.bf16.mxu0 %v2993
    %4208 = vmatpush1.bf16.msra.mxu0 %v2992
    %4209 = vmatprep.subr.bf16.mxu0 %v2985
    %4210 = vmatpush1.bf16.msra.mxu0 %v2984
    %4211 = vmatprep.subr.bf16.mxu0 %v2977
    %4212 = vmatpush1.bf16.msra.mxu0 %v2976
    %4213 = vmatprep.subr.bf16.mxu0 %v2969
    %4214 = vmatpush1.bf16.msra.mxu0 %v2968
    %4215 = vmatprep.subr.bf16.mxu0 %v2961
    %4216 = vmatpush1.bf16.msra.mxu0 %v2960
    %4217 = vmatprep.subr.bf16.mxu0 %v2953
    %4218 = vmatpush1.bf16.msra.mxu0 %v2952
    %4219 = vmatprep.subr.bf16.mxu0 %v2945
    %4220 = vmatpush1.bf16.msra.mxu0 %v2944
    %4221 = vmatprep.subr.bf16.mxu0 %v3065
    %4222 = vmatpush2.bf16.msra.mxu0 %v3064
    %4223 = vmatprep.subr.bf16.mxu0 %v3057
    %4224 = vmatpush2.bf16.msra.mxu0 %v3056
    %4225 = vmatprep.subr.bf16.mxu0 %v3049
    %4226 = vmatpush2.bf16.msra.mxu0 %v3048
    %4227 = vmatprep.subr.bf16.mxu0 %v3041
    %4228 = vmatpush2.bf16.msra.mxu0 %v3040
    %4229 = vmatprep.subr.bf16.mxu0 %v3033
    %4230 = vmatpush2.bf16.msra.mxu0 %v3032
    %4231 = vmatprep.subr.bf16.mxu0 %v3025
    %4232 = vmatpush2.bf16.msra.mxu0 %v3024
    %4233 = vmatprep.subr.bf16.mxu0 %v3017
    %4234 = vmatpush2.bf16.msra.mxu0 %v3016
    %4235 = vmatprep.subr.bf16.mxu0 %v3009
    %4236 = vmatpush2.bf16.msra.mxu0 %v3008
    %4237 = vmatprep.mubr.bf16.mxu0 %v717
    %4238 = vmatmul.mubr.bf16.gmra.mxu0 %v716
    %v4239 = vpop.f32.mrf.mxu0
    %v4240 = vadd.f32 %v4199, %v4239
    %v4241 = vpop.f32.mrf.mxu0
    %v4242 = vadd.f32 %v4201, %v4241
    %v4243 = vpop.f32.mrf.mxu0
    %v4244 = vpop.f32.mrf.mxu0
    %4245 = vdwg.mxu0
    %4246 = vmatprep.subr.bf16.mxu0 %v3129
    %4247 = vmatpush1.bf16.msra.mxu0 %v3128
    %4248 = vmatprep.subr.bf16.mxu0 %v3121
    %4249 = vmatpush1.bf16.msra.mxu0 %v3120
    %4250 = vmatprep.subr.bf16.mxu0 %v3113
    %4251 = vmatpush1.bf16.msra.mxu0 %v3112
    %4252 = vmatprep.subr.bf16.mxu0 %v3105
    %4253 = vmatpush1.bf16.msra.mxu0 %v3104
    %4254 = vmatprep.subr.bf16.mxu0 %v3097
    %4255 = vmatpush1.bf16.msra.mxu0 %v3096
    %4256 = vmatprep.subr.bf16.mxu0 %v3089
    %4257 = vmatpush1.bf16.msra.mxu0 %v3088
    %4258 = vmatprep.subr.bf16.mxu0 %v3081
    %4259 = vmatpush1.bf16.msra.mxu0 %v3080
    %4260 = vmatprep.subr.bf16.mxu0 %v3073
    %4261 = vmatpush1.bf16.msra.mxu0 %v3072
    %4262 = vmatprep.subr.bf16.mxu0 %v3193
    %4263 = vmatpush2.bf16.msra.mxu0 %v3192
    %4264 = vmatprep.subr.bf16.mxu0 %v3185
    %4265 = vmatpush2.bf16.msra.mxu0 %v3184
    %4266 = vmatprep.subr.bf16.mxu0 %v3177
    %4267 = vmatpush2.bf16.msra.mxu0 %v3176
    %4268 = vmatprep.subr.bf16.mxu0 %v3169
    %4269 = vmatpush2.bf16.msra.mxu0 %v3168
    %4270 = vmatprep.subr.bf16.mxu0 %v3161
    %4271 = vmatpush2.bf16.msra.mxu0 %v3160
    %4272 = vmatprep.subr.bf16.mxu0 %v3153
    %4273 = vmatpush2.bf16.msra.mxu0 %v3152
    %4274 = vmatprep.subr.bf16.mxu0 %v3145
    %4275 = vmatpush2.bf16.msra.mxu0 %v3144
    %4276 = vmatprep.subr.bf16.mxu0 %v3137
    %4277 = vmatpush2.bf16.msra.mxu0 %v3136
    %4278 = vmatprep.mubr.bf16.mxu0 %v719
    %4279 = vmatmul.mubr.bf16.gmra.mxu0 %v718
    %v4280 = vpop.f32.mrf.mxu0
    %v4281 = vadd.f32 %v4240, %v4280
    %v4282 = vpop.f32.mrf.mxu0
    %v4283 = vadd.f32 %v4242, %v4282
    %v4284 = vpop.f32.mrf.mxu0
    %v4285 = vpop.f32.mrf.mxu0
    %4286 = vdwg.mxu0
    %4287 = vmatprep.subr.bf16.mxu0 %v3257
    %4288 = vmatpush1.bf16.msra.mxu0 %v3256
    %4289 = vmatprep.subr.bf16.mxu0 %v3249
    %4290 = vmatpush1.bf16.msra.mxu0 %v3248
    %4291 = vmatprep.subr.bf16.mxu0 %v3241
    %4292 = vmatpush1.bf16.msra.mxu0 %v3240
    %4293 = vmatprep.subr.bf16.mxu0 %v3233
    %4294 = vmatpush1.bf16.msra.mxu0 %v3232
    %4295 = vmatprep.subr.bf16.mxu0 %v3225
    %4296 = vmatpush1.bf16.msra.mxu0 %v3224
    %4297 = vmatprep.subr.bf16.mxu0 %v3217
    %4298 = vmatpush1.bf16.msra.mxu0 %v3216
    %4299 = vmatprep.subr.bf16.mxu0 %v3209
    %4300 = vmatpush1.bf16.msra.mxu0 %v3208
    %4301 = vmatprep.subr.bf16.mxu0 %v3201
    %4302 = vmatpush1.bf16.msra.mxu0 %v3200
    %4303 = vmatprep.subr.bf16.mxu0 %v3321
    %4304 = vmatpush2.bf16.msra.mxu0 %v3320
    %4305 = vmatprep.subr.bf16.mxu0 %v3313
    %4306 = vmatpush2.bf16.msra.mxu0 %v3312
    %4307 = vmatprep.subr.bf16.mxu0 %v3305
    %4308 = vmatpush2.bf16.msra.mxu0 %v3304
    %4309 = vmatprep.subr.bf16.mxu0 %v3297
    %4310 = vmatpush2.bf16.msra.mxu0 %v3296
    %4311 = vmatprep.subr.bf16.mxu0 %v3289
    %4312 = vmatpush2.bf16.msra.mxu0 %v3288
    %4313 = vmatprep.subr.bf16.mxu0 %v3281
    %4314 = vmatpush2.bf16.msra.mxu0 %v3280
    %4315 = vmatprep.subr.bf16.mxu0 %v3273
    %4316 = vmatpush2.bf16.msra.mxu0 %v3272
    %4317 = vmatprep.subr.bf16.mxu0 %v3265
    %4318 = vmatpush2.bf16.msra.mxu0 %v3264
    %4319 = vmatprep.mubr.bf16.mxu0 %v721
    %4320 = vmatmul.mubr.bf16.gmra.mxu0 %v720
    %v4321 = vpop.f32.mrf.mxu0
    %v4322 = vadd.f32 %v4281, %v4321
    %v4323 = vpop.f32.mrf.mxu0
    %v4324 = vadd.f32 %v4283, %v4323
    %v4325 = vpop.f32.mrf.mxu0
    %v4326 = vpop.f32.mrf.mxu0
    %4327 = vdwg.mxu0
    %4328 = vmatprep.subr.bf16.mxu0 %v2875
    %4329 = vmatpush1.bf16.msra.mxu0 %v2874
    %4330 = vmatprep.subr.bf16.mxu0 %v2867
    %4331 = vmatpush1.bf16.msra.mxu0 %v2866
    %4332 = vmatprep.subr.bf16.mxu0 %v2859
    %4333 = vmatpush1.bf16.msra.mxu0 %v2858
    %4334 = vmatprep.subr.bf16.mxu0 %v2851
    %4335 = vmatpush1.bf16.msra.mxu0 %v2850
    %4336 = vmatprep.subr.bf16.mxu0 %v2843
    %4337 = vmatpush1.bf16.msra.mxu0 %v2842
    %4338 = vmatprep.subr.bf16.mxu0 %v2835
    %4339 = vmatpush1.bf16.msra.mxu0 %v2834
    %4340 = vmatprep.subr.bf16.mxu0 %v2827
    %4341 = vmatpush1.bf16.msra.mxu0 %v2826
    %4342 = vmatprep.subr.bf16.mxu0 %v2819
    %4343 = vmatpush1.bf16.msra.mxu0 %v2818
    %4344 = vmatprep.subr.bf16.mxu0 %v2939
    %4345 = vmatpush2.bf16.msra.mxu0 %v2938
    %4346 = vmatprep.subr.bf16.mxu0 %v2931
    %4347 = vmatpush2.bf16.msra.mxu0 %v2930
    %4348 = vmatprep.subr.bf16.mxu0 %v2923
    %4349 = vmatpush2.bf16.msra.mxu0 %v2922
    %4350 = vmatprep.subr.bf16.mxu0 %v2915
    %4351 = vmatpush2.bf16.msra.mxu0 %v2914
    %4352 = vmatprep.subr.bf16.mxu0 %v2907
    %4353 = vmatpush2.bf16.msra.mxu0 %v2906
    %4354 = vmatprep.subr.bf16.mxu0 %v2899
    %4355 = vmatpush2.bf16.msra.mxu0 %v2898
    %4356 = vmatprep.subr.bf16.mxu0 %v2891
    %4357 = vmatpush2.bf16.msra.mxu0 %v2890
    %4358 = vmatprep.subr.bf16.mxu0 %v2883
    %4359 = vmatpush2.bf16.msra.mxu0 %v2882
    %4360 = vmatprep.mubr.bf16.mxu0 %v715
    %4361 = vmatmul.mubr.bf16.gmra.mxu0 %v714
    %v4362 = vpop.f32.mrf.mxu0
    %v4363 = vadd.f32 %v1263, %v4362
    %v4364 = vpop.f32.mrf.mxu0
    %v4365 = vadd.f32 %v1267, %v4364
    %v4366 = vpop.f32.mrf.mxu0
    %v4367 = vpop.f32.mrf.mxu0
    %4368 = vdwg.mxu0
    %4369 = vmatprep.subr.bf16.mxu0 %v3003
    %4370 = vmatpush1.bf16.msra.mxu0 %v3002
    %4371 = vmatprep.subr.bf16.mxu0 %v2995
    %4372 = vmatpush1.bf16.msra.mxu0 %v2994
    %4373 = vmatprep.subr.bf16.mxu0 %v2987
    %4374 = vmatpush1.bf16.msra.mxu0 %v2986
    %4375 = vmatprep.subr.bf16.mxu0 %v2979
    %4376 = vmatpush1.bf16.msra.mxu0 %v2978
    %4377 = vmatprep.subr.bf16.mxu0 %v2971
    %4378 = vmatpush1.bf16.msra.mxu0 %v2970
    %4379 = vmatprep.subr.bf16.mxu0 %v2963
    %4380 = vmatpush1.bf16.msra.mxu0 %v2962
    %4381 = vmatprep.subr.bf16.mxu0 %v2955
    %4382 = vmatpush1.bf16.msra.mxu0 %v2954
    %4383 = vmatprep.subr.bf16.mxu0 %v2947
    %4384 = vmatpush1.bf16.msra.mxu0 %v2946
    %4385 = vmatprep.subr.bf16.mxu0 %v3067
    %4386 = vmatpush2.bf16.msra.mxu0 %v3066
    %4387 = vmatprep.subr.bf16.mxu0 %v3059
    %4388 = vmatpush2.bf16.msra.mxu0 %v3058
    %4389 = vmatprep.subr.bf16.mxu0 %v3051
    %4390 = vmatpush2.bf16.msra.mxu0 %v3050
    %4391 = vmatprep.subr.bf16.mxu0 %v3043
    %4392 = vmatpush2.bf16.msra.mxu0 %v3042
    %4393 = vmatprep.subr.bf16.mxu0 %v3035
    %4394 = vmatpush2.bf16.msra.mxu0 %v3034
    %4395 = vmatprep.subr.bf16.mxu0 %v3027
    %4396 = vmatpush2.bf16.msra.mxu0 %v3026
    %4397 = vmatprep.subr.bf16.mxu0 %v3019
    %4398 = vmatpush2.bf16.msra.mxu0 %v3018
    %4399 = vmatprep.subr.bf16.mxu0 %v3011
    %4400 = vmatpush2.bf16.msra.mxu0 %v3010
    %4401 = vmatprep.mubr.bf16.mxu0 %v717
    %4402 = vmatmul.mubr.bf16.gmra.mxu0 %v716
    %v4403 = vpop.f32.mrf.mxu0
    %v4404 = vadd.f32 %v4363, %v4403
    %v4405 = vpop.f32.mrf.mxu0
    %v4406 = vadd.f32 %v4365, %v4405
    %v4407 = vpop.f32.mrf.mxu0
    %v4408 = vpop.f32.mrf.mxu0
    %4409 = vdwg.mxu0
    %4410 = vmatprep.subr.bf16.mxu0 %v3131
    %4411 = vmatpush1.bf16.msra.mxu0 %v3130
    %4412 = vmatprep.subr.bf16.mxu0 %v3123
    %4413 = vmatpush1.bf16.msra.mxu0 %v3122
    %4414 = vmatprep.subr.bf16.mxu0 %v3115
    %4415 = vmatpush1.bf16.msra.mxu0 %v3114
    %4416 = vmatprep.subr.bf16.mxu0 %v3107
    %4417 = vmatpush1.bf16.msra.mxu0 %v3106
    %4418 = vmatprep.subr.bf16.mxu0 %v3099
    %4419 = vmatpush1.bf16.msra.mxu0 %v3098
    %4420 = vmatprep.subr.bf16.mxu0 %v3091
    %4421 = vmatpush1.bf16.msra.mxu0 %v3090
    %4422 = vmatprep.subr.bf16.mxu0 %v3083
    %4423 = vmatpush1.bf16.msra.mxu0 %v3082
    %4424 = vmatprep.subr.bf16.mxu0 %v3075
    %4425 = vmatpush1.bf16.msra.mxu0 %v3074
    %4426 = vmatprep.subr.bf16.mxu0 %v3195
    %4427 = vmatpush2.bf16.msra.mxu0 %v3194
    %4428 = vmatprep.subr.bf16.mxu0 %v3187
    %4429 = vmatpush2.bf16.msra.mxu0 %v3186
    %4430 = vmatprep.subr.bf16.mxu0 %v3179
    %4431 = vmatpush2.bf16.msra.mxu0 %v3178
    %4432 = vmatprep.subr.bf16.mxu0 %v3171
    %4433 = vmatpush2.bf16.msra.mxu0 %v3170
    %4434 = vmatprep.subr.bf16.mxu0 %v3163
    %4435 = vmatpush2.bf16.msra.mxu0 %v3162
    %4436 = vmatprep.subr.bf16.mxu0 %v3155
    %4437 = vmatpush2.bf16.msra.mxu0 %v3154
    %4438 = vmatprep.subr.bf16.mxu0 %v3147
    %4439 = vmatpush2.bf16.msra.mxu0 %v3146
    %4440 = vmatprep.subr.bf16.mxu0 %v3139
    %4441 = vmatpush2.bf16.msra.mxu0 %v3138
    %4442 = vmatprep.mubr.bf16.mxu0 %v719
    %4443 = vmatmul.mubr.bf16.gmra.mxu0 %v718
    %v4444 = vpop.f32.mrf.mxu0
    %v4445 = vadd.f32 %v4404, %v4444
    %v4446 = vpop.f32.mrf.mxu0
    %v4447 = vadd.f32 %v4406, %v4446
    %v4448 = vpop.f32.mrf.mxu0
    %v4449 = vpop.f32.mrf.mxu0
    %4450 = vdwg.mxu0
    %4451 = vmatprep.subr.bf16.mxu0 %v3259
    %4452 = vmatpush1.bf16.msra.mxu0 %v3258
    %4453 = vmatprep.subr.bf16.mxu0 %v3251
    %4454 = vmatpush1.bf16.msra.mxu0 %v3250
    %4455 = vmatprep.subr.bf16.mxu0 %v3243
    %4456 = vmatpush1.bf16.msra.mxu0 %v3242
    %4457 = vmatprep.subr.bf16.mxu0 %v3235
    %4458 = vmatpush1.bf16.msra.mxu0 %v3234
    %4459 = vmatprep.subr.bf16.mxu0 %v3227
    %4460 = vmatpush1.bf16.msra.mxu0 %v3226
    %4461 = vmatprep.subr.bf16.mxu0 %v3219
    %4462 = vmatpush1.bf16.msra.mxu0 %v3218
    %4463 = vmatprep.subr.bf16.mxu0 %v3211
    %4464 = vmatpush1.bf16.msra.mxu0 %v3210
    %4465 = vmatprep.subr.bf16.mxu0 %v3203
    %4466 = vmatpush1.bf16.msra.mxu0 %v3202
    %4467 = vmatprep.subr.bf16.mxu0 %v3323
    %4468 = vmatpush2.bf16.msra.mxu0 %v3322
    %4469 = vmatprep.subr.bf16.mxu0 %v3315
    %4470 = vmatpush2.bf16.msra.mxu0 %v3314
    %4471 = vmatprep.subr.bf16.mxu0 %v3307
    %4472 = vmatpush2.bf16.msra.mxu0 %v3306
    %4473 = vmatprep.subr.bf16.mxu0 %v3299
    %4474 = vmatpush2.bf16.msra.mxu0 %v3298
    %4475 = vmatprep.subr.bf16.mxu0 %v3291
    %4476 = vmatpush2.bf16.msra.mxu0 %v3290
    %4477 = vmatprep.subr.bf16.mxu0 %v3283
    %4478 = vmatpush2.bf16.msra.mxu0 %v3282
    %4479 = vmatprep.subr.bf16.mxu0 %v3275
    %4480 = vmatpush2.bf16.msra.mxu0 %v3274
    %4481 = vmatprep.subr.bf16.mxu0 %v3267
    %4482 = vmatpush2.bf16.msra.mxu0 %v3266
    %4483 = vmatprep.mubr.bf16.mxu0 %v721
    %4484 = vmatmul.mubr.bf16.gmra.mxu0 %v720
    %v4485 = vpop.f32.mrf.mxu0
    %v4486 = vadd.f32 %v4445, %v4485
    %v4487 = vpop.f32.mrf.mxu0
    %v4488 = vadd.f32 %v4447, %v4487
    %v4489 = vpop.f32.mrf.mxu0
    %v4490 = vpop.f32.mrf.mxu0
    %4491 = vdwg.mxu0
    %v4492 = vmax.f32 %v3994, 0.0
    %v4493 = vmax.f32 %v3996, 0.0
    %v4494 = vmax.f32 %v4158, 0.0
    %v4495 = vmax.f32 %v4160, 0.0
    %v4496 = vmax.f32 %v4322, 0.0
    %v4497 = vmax.f32 %v4324, 0.0
    %v4498 = vmax.f32 %v4486, 0.0
    %v4499 = vmax.f32 %v4488, 0.0
    %v4500 = vpack.c.bf16 %v4492, %v4492
    %v4501 = vpack.c.bf16 %v4493, %v4493
    %v4502 = vpack.c.bf16 %v4494, %v4494
    %v4503 = vpack.c.bf16 %v4495, %v4495
    %v4504 = vpack.c.bf16 %v4496, %v4496
    %v4505 = vpack.c.bf16 %v4497, %v4497
    %v4506 = vpack.c.bf16 %v4498, %v4498
    %v4507 = vpack.c.bf16 %v4499, %v4499
    %v4508 = vld [vmem:[#allocation11] sm:$0xf]
    %v4509 = vld [vmem:[#allocation11 + $0x4] sm:$0xf]
    %v4510 = vld [vmem:[#allocation11 + $0x8] sm:$0xf]
    %v4511 = vld [vmem:[#allocation11 + $0xc] sm:$0xf]
    %v4512 = vld [vmem:[#allocation11 + $0x10] sm:$0xf]
    %v4513 = vld [vmem:[#allocation11 + $0x14] sm:$0xf]
    %v4514 = vld [vmem:[#allocation11 + $0x18] sm:$0xf]
    %v4515 = vld [vmem:[#allocation11 + $0x1c] sm:$0xf]
    %v4516 = vld [vmem:[#allocation11 + $0x20] sm:$0xf]
    %v4517 = vld [vmem:[#allocation11 + $0x24] sm:$0xf]
    %v4518 = vld [vmem:[#allocation11 + $0x28] sm:$0xf]
    %v4519 = vld [vmem:[#allocation11 + $0x2c] sm:$0xf]
    %v4520 = vld [vmem:[#allocation11 + $0x30] sm:$0xf]
    %v4521 = vld [vmem:[#allocation11 + $0x34] sm:$0xf]
    %v4522 = vld [vmem:[#allocation11 + $0x38] sm:$0xf]
    %v4523 = vld [vmem:[#allocation11 + $0x3c] sm:$0xf]
    %v4524 = vld [vmem:[#allocation11 + $0x40] sm:$0xf]
    %v4525 = vld [vmem:[#allocation11 + $0x44] sm:$0xf]
    %v4526 = vld [vmem:[#allocation11 + $0x48] sm:$0xf]
    %v4527 = vld [vmem:[#allocation11 + $0x4c] sm:$0xf]
    %v4528 = vld [vmem:[#allocation11 + $0x50] sm:$0xf]
    %v4529 = vld [vmem:[#allocation11 + $0x54] sm:$0xf]
    %v4530 = vld [vmem:[#allocation11 + $0x58] sm:$0xf]
    %v4531 = vld [vmem:[#allocation11 + $0x5c] sm:$0xf]
    %v4532 = vld [vmem:[#allocation11 + $0x60] sm:$0xf]
    %v4533 = vld [vmem:[#allocation11 + $0x64] sm:$0xf]
    %v4534 = vld [vmem:[#allocation11 + $0x68] sm:$0xf]
    %v4535 = vld [vmem:[#allocation11 + $0x6c] sm:$0xf]
    %v4536 = vld [vmem:[#allocation11 + $0x70] sm:$0xf]
    %v4537 = vld [vmem:[#allocation11 + $0x74] sm:$0xf]
    %v4538 = vld [vmem:[#allocation11 + $0x78] sm:$0xf]
    %v4539 = vld [vmem:[#allocation11 + $0x7c] sm:$0xf]
    %v4540 = vld [vmem:[#allocation11 + $0x80] sm:$0xf]
    %v4541 = vld [vmem:[#allocation11 + $0x84] sm:$0xf]
    %v4542 = vld [vmem:[#allocation11 + $0x88] sm:$0xf]
    %v4543 = vld [vmem:[#allocation11 + $0x8c] sm:$0xf]
    %v4544 = vld [vmem:[#allocation11 + $0x90] sm:$0xf]
    %v4545 = vld [vmem:[#allocation11 + $0x94] sm:$0xf]
    %v4546 = vld [vmem:[#allocation11 + $0x98] sm:$0xf]
    %v4547 = vld [vmem:[#allocation11 + $0x9c] sm:$0xf]
    %v4548 = vld [vmem:[#allocation11 + $0xa0] sm:$0xf]
    %v4549 = vld [vmem:[#allocation11 + $0xa4] sm:$0xf]
    %v4550 = vld [vmem:[#allocation11 + $0xa8] sm:$0xf]
    %v4551 = vld [vmem:[#allocation11 + $0xac] sm:$0xf]
    %v4552 = vld [vmem:[#allocation11 + $0xb0] sm:$0xf]
    %v4553 = vld [vmem:[#allocation11 + $0xb4] sm:$0xf]
    %v4554 = vld [vmem:[#allocation11 + $0xb8] sm:$0xf]
    %v4555 = vld [vmem:[#allocation11 + $0xbc] sm:$0xf]
    %v4556 = vld [vmem:[#allocation11 + $0xc0] sm:$0xf]
    %v4557 = vld [vmem:[#allocation11 + $0xc4] sm:$0xf]
    %v4558 = vld [vmem:[#allocation11 + $0xc8] sm:$0xf]
    %v4559 = vld [vmem:[#allocation11 + $0xcc] sm:$0xf]
    %v4560 = vld [vmem:[#allocation11 + $0xd0] sm:$0xf]
    %v4561 = vld [vmem:[#allocation11 + $0xd4] sm:$0xf]
    %v4562 = vld [vmem:[#allocation11 + $0xd8] sm:$0xf]
    %v4563 = vld [vmem:[#allocation11 + $0xdc] sm:$0xf]
    %v4564 = vld [vmem:[#allocation11 + $0xe0] sm:$0xf]
    %v4565 = vld [vmem:[#allocation11 + $0xe4] sm:$0xf]
    %v4566 = vld [vmem:[#allocation11 + $0xe8] sm:$0xf]
    %v4567 = vld [vmem:[#allocation11 + $0xec] sm:$0xf]
    %v4568 = vld [vmem:[#allocation11 + $0xf0] sm:$0xf]
    %v4569 = vld [vmem:[#allocation11 + $0xf4] sm:$0xf]
    %v4570 = vld [vmem:[#allocation11 + $0xf8] sm:$0xf]
    %v4571 = vld [vmem:[#allocation11 + $0xfc] sm:$0xf]
    %v4572 = vld [vmem:[#allocation11 + $0x100] sm:$0xf]
    %v4573 = vld [vmem:[#allocation11 + $0x104] sm:$0xf]
    %v4574 = vld [vmem:[#allocation11 + $0x108] sm:$0xf]
    %v4575 = vld [vmem:[#allocation11 + $0x10c] sm:$0xf]
    %v4576 = vld [vmem:[#allocation11 + $0x110] sm:$0xf]
    %v4577 = vld [vmem:[#allocation11 + $0x114] sm:$0xf]
    %v4578 = vld [vmem:[#allocation11 + $0x118] sm:$0xf]
    %v4579 = vld [vmem:[#allocation11 + $0x11c] sm:$0xf]
    %v4580 = vld [vmem:[#allocation11 + $0x120] sm:$0xf]
    %v4581 = vld [vmem:[#allocation11 + $0x124] sm:$0xf]
    %v4582 = vld [vmem:[#allocation11 + $0x128] sm:$0xf]
    %v4583 = vld [vmem:[#allocation11 + $0x12c] sm:$0xf]
    %v4584 = vld [vmem:[#allocation11 + $0x130] sm:$0xf]
    %v4585 = vld [vmem:[#allocation11 + $0x134] sm:$0xf]
    %v4586 = vld [vmem:[#allocation11 + $0x138] sm:$0xf]
    %v4587 = vld [vmem:[#allocation11 + $0x13c] sm:$0xf]
    %v4588 = vld [vmem:[#allocation11 + $0x140] sm:$0xf]
    %v4589 = vld [vmem:[#allocation11 + $0x144] sm:$0xf]
    %v4590 = vld [vmem:[#allocation11 + $0x148] sm:$0xf]
    %v4591 = vld [vmem:[#allocation11 + $0x14c] sm:$0xf]
    %v4592 = vld [vmem:[#allocation11 + $0x150] sm:$0xf]
    %v4593 = vld [vmem:[#allocation11 + $0x154] sm:$0xf]
    %v4594 = vld [vmem:[#allocation11 + $0x158] sm:$0xf]
    %v4595 = vld [vmem:[#allocation11 + $0x15c] sm:$0xf]
    %v4596 = vld [vmem:[#allocation11 + $0x160] sm:$0xf]
    %v4597 = vld [vmem:[#allocation11 + $0x164] sm:$0xf]
    %v4598 = vld [vmem:[#allocation11 + $0x168] sm:$0xf]
    %v4599 = vld [vmem:[#allocation11 + $0x16c] sm:$0xf]
    %v4600 = vld [vmem:[#allocation11 + $0x170] sm:$0xf]
    %v4601 = vld [vmem:[#allocation11 + $0x174] sm:$0xf]
    %v4602 = vld [vmem:[#allocation11 + $0x178] sm:$0xf]
    %v4603 = vld [vmem:[#allocation11 + $0x17c] sm:$0xf]
    %v4604 = vld [vmem:[#allocation11 + $0x180] sm:$0xf]
    %v4605 = vld [vmem:[#allocation11 + $0x184] sm:$0xf]
    %v4606 = vld [vmem:[#allocation11 + $0x188] sm:$0xf]
    %v4607 = vld [vmem:[#allocation11 + $0x18c] sm:$0xf]
    %v4608 = vld [vmem:[#allocation11 + $0x190] sm:$0xf]
    %v4609 = vld [vmem:[#allocation11 + $0x194] sm:$0xf]
    %v4610 = vld [vmem:[#allocation11 + $0x198] sm:$0xf]
    %v4611 = vld [vmem:[#allocation11 + $0x19c] sm:$0xf]
    %v4612 = vld [vmem:[#allocation11 + $0x1a0] sm:$0xf]
    %v4613 = vld [vmem:[#allocation11 + $0x1a4] sm:$0xf]
    %v4614 = vld [vmem:[#allocation11 + $0x1a8] sm:$0xf]
    %v4615 = vld [vmem:[#allocation11 + $0x1ac] sm:$0xf]
    %v4616 = vld [vmem:[#allocation11 + $0x1b0] sm:$0xf]
    %v4617 = vld [vmem:[#allocation11 + $0x1b4] sm:$0xf]
    %v4618 = vld [vmem:[#allocation11 + $0x1b8] sm:$0xf]
    %v4619 = vld [vmem:[#allocation11 + $0x1bc] sm:$0xf]
    %v4620 = vld [vmem:[#allocation11 + $0x1c0] sm:$0xf]
    %v4621 = vld [vmem:[#allocation11 + $0x1c4] sm:$0xf]
    %v4622 = vld [vmem:[#allocation11 + $0x1c8] sm:$0xf]
    %v4623 = vld [vmem:[#allocation11 + $0x1cc] sm:$0xf]
    %v4624 = vld [vmem:[#allocation11 + $0x1d0] sm:$0xf]
    %v4625 = vld [vmem:[#allocation11 + $0x1d4] sm:$0xf]
    %v4626 = vld [vmem:[#allocation11 + $0x1d8] sm:$0xf]
    %v4627 = vld [vmem:[#allocation11 + $0x1dc] sm:$0xf]
    %v4628 = vld [vmem:[#allocation11 + $0x1e0] sm:$0xf]
    %v4629 = vld [vmem:[#allocation11 + $0x1e4] sm:$0xf]
    %v4630 = vld [vmem:[#allocation11 + $0x1e8] sm:$0xf]
    %v4631 = vld [vmem:[#allocation11 + $0x1ec] sm:$0xf]
    %v4632 = vld [vmem:[#allocation11 + $0x1f0] sm:$0xf]
    %v4633 = vld [vmem:[#allocation11 + $0x1f4] sm:$0xf]
    %v4634 = vld [vmem:[#allocation11 + $0x1f8] sm:$0xf]
    %v4635 = vld [vmem:[#allocation11 + $0x1fc] sm:$0xf]
    %v4636 = vld [vmem:[#allocation13] sm:$0x1]
    %v4638 = vlaneseq
    %v4639 = vshrl.u32 %v4638, 7
    %v4640 = vsub.s32 0, %v4639
    %v4641 = vrot.slane %v4636, %v4640
    %v4771 = vunpack.c.l.b16 %v4508
    %v4772 = vunpack.c.l.b16 %v4509
    %v4773 = vunpack.c.l.b16 %v4510
    %v4774 = vunpack.c.l.b16 %v4511
    %v4775 = vunpack.c.l.b16 %v4512
    %v4776 = vunpack.c.l.b16 %v4513
    %v4777 = vunpack.c.l.b16 %v4514
    %v4778 = vunpack.c.l.b16 %v4515
    %v4779 = vunpack.c.l.b16 %v4516
    %v4780 = vunpack.c.l.b16 %v4517
    %v4781 = vunpack.c.l.b16 %v4518
    %v4782 = vunpack.c.l.b16 %v4519
    %v4783 = vunpack.c.l.b16 %v4520
    %v4784 = vunpack.c.l.b16 %v4521
    %v4785 = vunpack.c.l.b16 %v4522
    %v4786 = vunpack.c.l.b16 %v4523
    %v4787 = vunpack.c.l.b16 %v4524
    %v4788 = vunpack.c.l.b16 %v4525
    %v4789 = vunpack.c.l.b16 %v4526
    %v4790 = vunpack.c.l.b16 %v4527
    %v4791 = vunpack.c.l.b16 %v4528
    %v4792 = vunpack.c.l.b16 %v4529
    %v4793 = vunpack.c.l.b16 %v4530
    %v4794 = vunpack.c.l.b16 %v4531
    %v4795 = vunpack.c.l.b16 %v4532
    %v4796 = vunpack.c.l.b16 %v4533
    %v4797 = vunpack.c.l.b16 %v4534
    %v4798 = vunpack.c.l.b16 %v4535
    %v4799 = vunpack.c.l.b16 %v4536
    %v4800 = vunpack.c.l.b16 %v4537
    %v4801 = vunpack.c.l.b16 %v4538
    %v4802 = vunpack.c.l.b16 %v4539
    %v4803 = vunpack.c.l.b16 %v4540
    %v4804 = vunpack.c.l.b16 %v4541
    %v4805 = vunpack.c.l.b16 %v4542
    %v4806 = vunpack.c.l.b16 %v4543
    %v4807 = vunpack.c.l.b16 %v4544
    %v4808 = vunpack.c.l.b16 %v4545
    %v4809 = vunpack.c.l.b16 %v4546
    %v4810 = vunpack.c.l.b16 %v4547
    %v4811 = vunpack.c.l.b16 %v4548
    %v4812 = vunpack.c.l.b16 %v4549
    %v4813 = vunpack.c.l.b16 %v4550
    %v4814 = vunpack.c.l.b16 %v4551
    %v4815 = vunpack.c.l.b16 %v4552
    %v4816 = vunpack.c.l.b16 %v4553
    %v4817 = vunpack.c.l.b16 %v4554
    %v4818 = vunpack.c.l.b16 %v4555
    %v4819 = vunpack.c.l.b16 %v4556
    %v4820 = vunpack.c.l.b16 %v4557
    %v4821 = vunpack.c.l.b16 %v4558
    %v4822 = vunpack.c.l.b16 %v4559
    %v4823 = vunpack.c.l.b16 %v4560
    %v4824 = vunpack.c.l.b16 %v4561
    %v4825 = vunpack.c.l.b16 %v4562
    %v4826 = vunpack.c.l.b16 %v4563
    %v4827 = vunpack.c.l.b16 %v4564
    %v4828 = vunpack.c.l.b16 %v4565
    %v4829 = vunpack.c.l.b16 %v4566
    %v4830 = vunpack.c.l.b16 %v4567
    %v4831 = vunpack.c.l.b16 %v4568
    %v4832 = vunpack.c.l.b16 %v4569
    %v4833 = vunpack.c.l.b16 %v4570
    %v4834 = vunpack.c.l.b16 %v4571
    %v4835 = vunpack.c.l.b16 %v4572
    %v4836 = vunpack.c.l.b16 %v4573
    %v4837 = vunpack.c.l.b16 %v4574
    %v4838 = vunpack.c.l.b16 %v4575
    %v4839 = vunpack.c.l.b16 %v4576
    %v4840 = vunpack.c.l.b16 %v4577
    %v4841 = vunpack.c.l.b16 %v4578
    %v4842 = vunpack.c.l.b16 %v4579
    %v4843 = vunpack.c.l.b16 %v4580
    %v4844 = vunpack.c.l.b16 %v4581
    %v4845 = vunpack.c.l.b16 %v4582
    %v4846 = vunpack.c.l.b16 %v4583
    %v4847 = vunpack.c.l.b16 %v4584
    %v4848 = vunpack.c.l.b16 %v4585
    %v4849 = vunpack.c.l.b16 %v4586
    %v4850 = vunpack.c.l.b16 %v4587
    %v4851 = vunpack.c.l.b16 %v4588
    %v4852 = vunpack.c.l.b16 %v4589
    %v4853 = vunpack.c.l.b16 %v4590
    %v4854 = vunpack.c.l.b16 %v4591
    %v4855 = vunpack.c.l.b16 %v4592
    %v4856 = vunpack.c.l.b16 %v4593
    %v4857 = vunpack.c.l.b16 %v4594
    %v4858 = vunpack.c.l.b16 %v4595
    %v4859 = vunpack.c.l.b16 %v4596
    %v4860 = vunpack.c.l.b16 %v4597
    %v4861 = vunpack.c.l.b16 %v4598
    %v4862 = vunpack.c.l.b16 %v4599
    %v4863 = vunpack.c.l.b16 %v4600
    %v4864 = vunpack.c.l.b16 %v4601
    %v4865 = vunpack.c.l.b16 %v4602
    %v4866 = vunpack.c.l.b16 %v4603
    %v4867 = vunpack.c.l.b16 %v4604
    %v4868 = vunpack.c.l.b16 %v4605
    %v4869 = vunpack.c.l.b16 %v4606
    %v4870 = vunpack.c.l.b16 %v4607
    %v4871 = vunpack.c.l.b16 %v4608
    %v4872 = vunpack.c.l.b16 %v4609
    %v4873 = vunpack.c.l.b16 %v4610
    %v4874 = vunpack.c.l.b16 %v4611
    %v4875 = vunpack.c.l.b16 %v4612
    %v4876 = vunpack.c.l.b16 %v4613
    %v4877 = vunpack.c.l.b16 %v4614
    %v4878 = vunpack.c.l.b16 %v4615
    %v4879 = vunpack.c.l.b16 %v4616
    %v4880 = vunpack.c.l.b16 %v4617
    %v4881 = vunpack.c.l.b16 %v4618
    %v4882 = vunpack.c.l.b16 %v4619
    %v4883 = vunpack.c.l.b16 %v4620
    %v4884 = vunpack.c.l.b16 %v4621
    %v4885 = vunpack.c.l.b16 %v4622
    %v4886 = vunpack.c.l.b16 %v4623
    %v4887 = vunpack.c.l.b16 %v4624
    %v4888 = vunpack.c.l.b16 %v4625
    %v4889 = vunpack.c.l.b16 %v4626
    %v4890 = vunpack.c.l.b16 %v4627
    %v4891 = vunpack.c.l.b16 %v4628
    %v4892 = vunpack.c.l.b16 %v4629
    %v4893 = vunpack.c.l.b16 %v4630
    %v4894 = vunpack.c.l.b16 %v4631
    %v4895 = vunpack.c.l.b16 %v4632
    %v4896 = vunpack.c.l.b16 %v4633
    %v4897 = vunpack.c.l.b16 %v4634
    %v4898 = vunpack.c.l.b16 %v4635
    %v4899 = vpack.c.b16 %v4772, %v4771
    %v4900 = vpack.c.b16 %v4774, %v4773
    %v4901 = vpack.c.b16 %v4776, %v4775
    %v4902 = vpack.c.b16 %v4778, %v4777
    %v4903 = vpack.c.b16 %v4780, %v4779
    %v4904 = vpack.c.b16 %v4782, %v4781
    %v4905 = vpack.c.b16 %v4784, %v4783
    %v4906 = vpack.c.b16 %v4786, %v4785
    %v4907 = vpack.c.b16 %v4788, %v4787
    %v4908 = vpack.c.b16 %v4790, %v4789
    %v4909 = vpack.c.b16 %v4792, %v4791
    %v4910 = vpack.c.b16 %v4794, %v4793
    %v4911 = vpack.c.b16 %v4796, %v4795
    %v4912 = vpack.c.b16 %v4798, %v4797
    %v4913 = vpack.c.b16 %v4800, %v4799
    %v4914 = vpack.c.b16 %v4802, %v4801
    %v4915 = vpack.c.b16 %v4804, %v4803
    %v4916 = vpack.c.b16 %v4806, %v4805
    %v4917 = vpack.c.b16 %v4808, %v4807
    %v4918 = vpack.c.b16 %v4810, %v4809
    %v4919 = vpack.c.b16 %v4812, %v4811
    %v4920 = vpack.c.b16 %v4814, %v4813
    %v4921 = vpack.c.b16 %v4816, %v4815
    %v4922 = vpack.c.b16 %v4818, %v4817
    %v4923 = vpack.c.b16 %v4820, %v4819
    %v4924 = vpack.c.b16 %v4822, %v4821
    %v4925 = vpack.c.b16 %v4824, %v4823
    %v4926 = vpack.c.b16 %v4826, %v4825
    %v4927 = vpack.c.b16 %v4828, %v4827
    %v4928 = vpack.c.b16 %v4830, %v4829
    %v4929 = vpack.c.b16 %v4832, %v4831
    %v4930 = vpack.c.b16 %v4834, %v4833
    %v4931 = vpack.c.b16 %v4836, %v4835
    %v4932 = vpack.c.b16 %v4838, %v4837
    %v4933 = vpack.c.b16 %v4840, %v4839
    %v4934 = vpack.c.b16 %v4842, %v4841
    %v4935 = vpack.c.b16 %v4844, %v4843
    %v4936 = vpack.c.b16 %v4846, %v4845
    %v4937 = vpack.c.b16 %v4848, %v4847
    %v4938 = vpack.c.b16 %v4850, %v4849
    %v4939 = vpack.c.b16 %v4852, %v4851
    %v4940 = vpack.c.b16 %v4854, %v4853
    %v4941 = vpack.c.b16 %v4856, %v4855
    %v4942 = vpack.c.b16 %v4858, %v4857
    %v4943 = vpack.c.b16 %v4860, %v4859
    %v4944 = vpack.c.b16 %v4862, %v4861
    %v4945 = vpack.c.b16 %v4864, %v4863
    %v4946 = vpack.c.b16 %v4866, %v4865
    %v4947 = vpack.c.b16 %v4868, %v4867
    %v4948 = vpack.c.b16 %v4870, %v4869
    %v4949 = vpack.c.b16 %v4872, %v4871
    %v4950 = vpack.c.b16 %v4874, %v4873
    %v4951 = vpack.c.b16 %v4876, %v4875
    %v4952 = vpack.c.b16 %v4878, %v4877
    %v4953 = vpack.c.b16 %v4880, %v4879
    %v4954 = vpack.c.b16 %v4882, %v4881
    %v4955 = vpack.c.b16 %v4884, %v4883
    %v4956 = vpack.c.b16 %v4886, %v4885
    %v4957 = vpack.c.b16 %v4888, %v4887
    %v4958 = vpack.c.b16 %v4890, %v4889
    %v4959 = vpack.c.b16 %v4892, %v4891
    %v4960 = vpack.c.b16 %v4894, %v4893
    %v4961 = vpack.c.b16 %v4896, %v4895
    %v4962 = vpack.c.b16 %v4898, %v4897
    %5027 = vmatprep.subr.bf16.mxu0 0
    %5028 = vmatpush1.bf16.msra.mxu0 %v4906
    %5029 = vmatprep.subr.bf16.mxu0 0
    %5030 = vmatpush1.bf16.msra.mxu0 %v4905
    %5031 = vmatprep.subr.bf16.mxu0 0
    %5032 = vmatpush1.bf16.msra.mxu0 %v4904
    %5033 = vmatprep.subr.bf16.mxu0 0
    %5034 = vmatpush1.bf16.msra.mxu0 %v4903
    %5035 = vmatprep.subr.bf16.mxu0 0
    %5036 = vmatpush1.bf16.msra.mxu0 %v4902
    %5037 = vmatprep.subr.bf16.mxu0 0
    %5038 = vmatpush1.bf16.msra.mxu0 %v4901
    %5039 = vmatprep.subr.bf16.mxu0 0
    %5040 = vmatpush1.bf16.msra.mxu0 %v4900
    %5041 = vmatprep.subr.bf16.mxu0 0
    %5042 = vmatpush1.bf16.msra.mxu0 %v4899
    %5043 = vmatprep.subr.bf16.mxu0 0
    %5044 = vmatpush2.bf16.msra.mxu0 %v4914
    %5045 = vmatprep.subr.bf16.mxu0 0
    %5046 = vmatpush2.bf16.msra.mxu0 %v4913
    %5047 = vmatprep.subr.bf16.mxu0 0
    %5048 = vmatpush2.bf16.msra.mxu0 %v4912
    %5049 = vmatprep.subr.bf16.mxu0 0
    %5050 = vmatpush2.bf16.msra.mxu0 %v4911
    %5051 = vmatprep.subr.bf16.mxu0 0
    %5052 = vmatpush2.bf16.msra.mxu0 %v4910
    %5053 = vmatprep.subr.bf16.mxu0 0
    %5054 = vmatpush2.bf16.msra.mxu0 %v4909
    %5055 = vmatprep.subr.bf16.mxu0 0
    %5056 = vmatpush2.bf16.msra.mxu0 %v4908
    %5057 = vmatprep.subr.bf16.mxu0 0
    %5058 = vmatpush2.bf16.msra.mxu0 %v4907
    %5059 = vmatprep.mubr.bf16.mxu0 %v4501
    %5060 = vmatmul.mubr.bf16.gmra.mxu0 %v4500
    %v5061 = vpop.f32.mrf.mxu0
    %v5062 = vadd.f32 %v4641, %v5061
    %v5063 = vpop.f32.mrf.mxu0
    %v5064 = vpop.f32.mrf.mxu0
    %v5065 = vpop.f32.mrf.mxu0
    %5066 = vdwg.mxu0
    %5067 = vmatprep.subr.bf16.mxu0 0
    %5068 = vmatpush1.bf16.msra.mxu0 %v4922
    %5069 = vmatprep.subr.bf16.mxu0 0
    %5070 = vmatpush1.bf16.msra.mxu0 %v4921
    %5071 = vmatprep.subr.bf16.mxu0 0
    %5072 = vmatpush1.bf16.msra.mxu0 %v4920
    %5073 = vmatprep.subr.bf16.mxu0 0
    %5074 = vmatpush1.bf16.msra.mxu0 %v4919
    %5075 = vmatprep.subr.bf16.mxu0 0
    %5076 = vmatpush1.bf16.msra.mxu0 %v4918
    %5077 = vmatprep.subr.bf16.mxu0 0
    %5078 = vmatpush1.bf16.msra.mxu0 %v4917
    %5079 = vmatprep.subr.bf16.mxu0 0
    %5080 = vmatpush1.bf16.msra.mxu0 %v4916
    %5081 = vmatprep.subr.bf16.mxu0 0
    %5082 = vmatpush1.bf16.msra.mxu0 %v4915
    %5083 = vmatprep.subr.bf16.mxu0 0
    %5084 = vmatpush2.bf16.msra.mxu0 %v4930
    %5085 = vmatprep.subr.bf16.mxu0 0
    %5086 = vmatpush2.bf16.msra.mxu0 %v4929
    %5087 = vmatprep.subr.bf16.mxu0 0
    %5088 = vmatpush2.bf16.msra.mxu0 %v4928
    %5089 = vmatprep.subr.bf16.mxu0 0
    %5090 = vmatpush2.bf16.msra.mxu0 %v4927
    %5091 = vmatprep.subr.bf16.mxu0 0
    %5092 = vmatpush2.bf16.msra.mxu0 %v4926
    %5093 = vmatprep.subr.bf16.mxu0 0
    %5094 = vmatpush2.bf16.msra.mxu0 %v4925
    %5095 = vmatprep.subr.bf16.mxu0 0
    %5096 = vmatpush2.bf16.msra.mxu0 %v4924
    %5097 = vmatprep.subr.bf16.mxu0 0
    %5098 = vmatpush2.bf16.msra.mxu0 %v4923
    %5099 = vmatprep.mubr.bf16.mxu0 %v4503
    %5100 = vmatmul.mubr.bf16.gmra.mxu0 %v4502
    %v5101 = vpop.f32.mrf.mxu0
    %v5102 = vadd.f32 %v5062, %v5101
    %v5103 = vpop.f32.mrf.mxu0
    %v5104 = vpop.f32.mrf.mxu0
    %v5105 = vpop.f32.mrf.mxu0
    %5106 = vdwg.mxu0
    %5107 = vmatprep.subr.bf16.mxu0 0
    %5108 = vmatpush1.bf16.msra.mxu0 %v4938
    %5109 = vmatprep.subr.bf16.mxu0 0
    %5110 = vmatpush1.bf16.msra.mxu0 %v4937
    %5111 = vmatprep.subr.bf16.mxu0 0
    %5112 = vmatpush1.bf16.msra.mxu0 %v4936
    %5113 = vmatprep.subr.bf16.mxu0 0
    %5114 = vmatpush1.bf16.msra.mxu0 %v4935
    %5115 = vmatprep.subr.bf16.mxu0 0
    %5116 = vmatpush1.bf16.msra.mxu0 %v4934
    %5117 = vmatprep.subr.bf16.mxu0 0
    %5118 = vmatpush1.bf16.msra.mxu0 %v4933
    %5119 = vmatprep.subr.bf16.mxu0 0
    %5120 = vmatpush1.bf16.msra.mxu0 %v4932
    %5121 = vmatprep.subr.bf16.mxu0 0
    %5122 = vmatpush1.bf16.msra.mxu0 %v4931
    %5123 = vmatprep.subr.bf16.mxu0 0
    %5124 = vmatpush2.bf16.msra.mxu0 %v4946
    %5125 = vmatprep.subr.bf16.mxu0 0
    %5126 = vmatpush2.bf16.msra.mxu0 %v4945
    %5127 = vmatprep.subr.bf16.mxu0 0
    %5128 = vmatpush2.bf16.msra.mxu0 %v4944
    %5129 = vmatprep.subr.bf16.mxu0 0
    %5130 = vmatpush2.bf16.msra.mxu0 %v4943
    %5131 = vmatprep.subr.bf16.mxu0 0
    %5132 = vmatpush2.bf16.msra.mxu0 %v4942
    %5133 = vmatprep.subr.bf16.mxu0 0
    %5134 = vmatpush2.bf16.msra.mxu0 %v4941
    %5135 = vmatprep.subr.bf16.mxu0 0
    %5136 = vmatpush2.bf16.msra.mxu0 %v4940
    %5137 = vmatprep.subr.bf16.mxu0 0
    %5138 = vmatpush2.bf16.msra.mxu0 %v4939
    %5139 = vmatprep.mubr.bf16.mxu0 %v4505
    %5140 = vmatmul.mubr.bf16.gmra.mxu0 %v4504
    %v5141 = vpop.f32.mrf.mxu0
    %v5142 = vadd.f32 %v5102, %v5141
    %v5143 = vpop.f32.mrf.mxu0
    %v5144 = vpop.f32.mrf.mxu0
    %v5145 = vpop.f32.mrf.mxu0
    %5146 = vdwg.mxu0
    %5147 = vmatprep.subr.bf16.mxu0 0
    %5148 = vmatpush1.bf16.msra.mxu0 %v4954
    %5149 = vmatprep.subr.bf16.mxu0 0
    %5150 = vmatpush1.bf16.msra.mxu0 %v4953
    %5151 = vmatprep.subr.bf16.mxu0 0
    %5152 = vmatpush1.bf16.msra.mxu0 %v4952
    %5153 = vmatprep.subr.bf16.mxu0 0
    %5154 = vmatpush1.bf16.msra.mxu0 %v4951
    %5155 = vmatprep.subr.bf16.mxu0 0
    %5156 = vmatpush1.bf16.msra.mxu0 %v4950
    %5157 = vmatprep.subr.bf16.mxu0 0
    %5158 = vmatpush1.bf16.msra.mxu0 %v4949
    %5159 = vmatprep.subr.bf16.mxu0 0
    %5160 = vmatpush1.bf16.msra.mxu0 %v4948
    %5161 = vmatprep.subr.bf16.mxu0 0
    %5162 = vmatpush1.bf16.msra.mxu0 %v4947
    %5163 = vmatprep.subr.bf16.mxu0 0
    %5164 = vmatpush2.bf16.msra.mxu0 %v4962
    %5165 = vmatprep.subr.bf16.mxu0 0
    %5166 = vmatpush2.bf16.msra.mxu0 %v4961
    %5167 = vmatprep.subr.bf16.mxu0 0
    %5168 = vmatpush2.bf16.msra.mxu0 %v4960
    %5169 = vmatprep.subr.bf16.mxu0 0
    %5170 = vmatpush2.bf16.msra.mxu0 %v4959
    %5171 = vmatprep.subr.bf16.mxu0 0
    %5172 = vmatpush2.bf16.msra.mxu0 %v4958
    %5173 = vmatprep.subr.bf16.mxu0 0
    %5174 = vmatpush2.bf16.msra.mxu0 %v4957
    %5175 = vmatprep.subr.bf16.mxu0 0
    %5176 = vmatpush2.bf16.msra.mxu0 %v4956
    %5177 = vmatprep.subr.bf16.mxu0 0
    %5178 = vmatpush2.bf16.msra.mxu0 %v4955
    %5179 = vmatprep.mubr.bf16.mxu0 %v4507
    %5180 = vmatmul.mubr.bf16.gmra.mxu0 %v4506
    %v5181 = vpop.f32.mrf.mxu0
    %v5182 = vadd.f32 %v5142, %v5181
    %v5183 = vpop.f32.mrf.mxu0
    %v5184 = vpop.f32.mrf.mxu0
    %v5185 = vpop.f32.mrf.mxu0
    %5186 = vdwg.mxu0
    %5187 = vst [vmem:[#allocation14] sm:$0xff] %v5182
    // Predicated region
    $region58: #{tpu_custom_call.1} parent=1 // pred_check
      _
    $region59: #{tpu_custom_call.1} parent=1 // pred_check_branch
      %5189 = sbr.rel (0) target = $region61
    $region60: #{tpu_custom_call.1} parent=1 // pred_region
      %s5191 = ssub.s32 128, 128
      %5192 = vsyncadd [#allocation4], %s5191
      %s5194 = sshll.u32 [#allocation14], 4
      %s5195 = int_to_ptr.vmem [resolvable:$true] %s5194
      %5197 = dma.vmem_to_hbm [thread:$0]  %s5195, 128, %s7, [#allocation4]
    $region61: #{tpu_custom_call.1} parent=1 // pred_fallthru
      _
    // Predicated region
    $region62: #{tpu_custom_call.1} parent=1 // pred_check
      _
    $region63: #{tpu_custom_call.1} parent=1 // pred_check_branch
      %5199 = sbr.rel (0) target = $region65
    $region64: #{tpu_custom_call.1} parent=1 // pred_region
      %5200 = dma.done [#allocation4], 128
    $region65: #{tpu_custom_call.1} parent=1 // pred_fallthru
      _
    %5201 = vsyncpa [#allocation3], 1
    %5202 = vsyncpa [#allocation6], 1
    %5203 = vsyncpa [#allocation9], 1
    %5204 = vsyncpa [#allocation12], 1
    %5205 = vsyncpa [#allocation4], 1

</llo_original>
